<compile_context>
chip_gen: v7x
topology: tpu7x:2x2x1
jax: 0.10.0
libtpu: 0.0.40
codegen_flags: <defaults>
</compile_context>

<pallas_src>
import functools

import jax
import jax.numpy as jnp
from jax.experimental import pallas as pl
from jax.experimental.pallas import tpu as pltpu

EPS = 1e-5  # nn.LayerNorm default


# --------------------------------------------------------------------------
# Fused kernel: LN1 + window MHSA + proj + residual + LN2 + MLP + residual.
# One grid step = Wb windows (window order in == window order out).
# --------------------------------------------------------------------------
def _swin_block_kernel(*refs, num_heads, head_dim, has_mask):
    if has_mask:
        (xw_ref, mask_ref, wqkv_ref, bqkv_ref, bias_ref,
         wproj_ref, bproj_ref, w1_ref, b1_ref, w2_ref, b2_ref, o_ref) = refs
    else:
        (xw_ref, wqkv_ref, bqkv_ref, bias_ref,
         wproj_ref, bproj_ref, w1_ref, b1_ref, w2_ref, b2_ref, o_ref) = refs
        mask_ref = None

    Wb, N, C = xw_ref.shape
    hd = head_dim

    x = xw_ref[...].astype(jnp.float32)              # (Wb, N, C) shortcut, in VMEM
    xf = x.reshape(Wb * N, C)

    # ---- LN1 (gamma/beta folded into wqkv/bqkv) ----
    mu = jnp.mean(xf, axis=-1, keepdims=True)
    xc = xf - mu
    var = jnp.mean(xc * xc, axis=-1, keepdims=True)
    xn = xc * jax.lax.rsqrt(var + EPS)

    # ---- QKV projection (qk scale folded into q columns) ----
    qkv = jnp.dot(xn.astype(jnp.bfloat16), wqkv_ref[...],
                  preferred_element_type=jnp.float32) + bqkv_ref[...]   # (Wb*N, 3C)
    qkv = qkv.reshape(Wb, N, 3 * C)

    if has_mask:
        mask = mask_ref[...]                         # (Wb, N, N)

    # ---- per-head attention; projection accumulated with per-head slabs ----
    acc = jnp.zeros((Wb * N, C), jnp.float32)
    for h in range(num_heads):                       # static unroll (small nH)
        q = qkv[:, :, h * hd:(h + 1) * hd]           # (Wb, N, hd), already scaled
        k = qkv[:, :, C + h * hd: C + (h + 1) * hd]
        v = qkv[:, :, 2 * C + h * hd: 2 * C + (h + 1) * hd]
        s = jnp.einsum('wid,wjd->wij',
                       q.astype(jnp.bfloat16), k.astype(jnp.bfloat16),
                       preferred_element_type=jnp.float32)              # (Wb, N, N)
        s = s + bias_ref[h]
        if has_mask:
            s = s + mask
        m = jnp.max(s, axis=-1, keepdims=True)
        p = jnp.exp(s - m)
        p = p * pl.reciprocal(jnp.sum(p, axis=-1, keepdims=True), approx=True)
        pv = jnp.einsum('wij,wjd->wid',
                        p.astype(jnp.bfloat16), v.astype(jnp.bfloat16),
                        preferred_element_type=jnp.float32)             # (Wb, N, hd)
        acc = acc + jnp.dot(pv.reshape(Wb * N, hd).astype(jnp.bfloat16),
                            wproj_ref[h], preferred_element_type=jnp.float32)

    # ---- first residual (shortcut = un-normalized window-ordered input) ----
    s1 = xf + acc + bproj_ref[...]

    # ---- LN2 (gamma/beta folded into w1/b1) + MLP + second residual ----
    mu2 = jnp.mean(s1, axis=-1, keepdims=True)
    sc2 = s1 - mu2
    var2 = jnp.mean(sc2 * sc2, axis=-1, keepdims=True)
    y = sc2 * jax.lax.rsqrt(var2 + EPS)
    hdn = jnp.dot(y.astype(jnp.bfloat16), w1_ref[...],
                  preferred_element_type=jnp.float32) + b1_ref[...]
    hdn = jax.nn.gelu(hdn, approximate=True)         # tanh-approx GELU
    o = jnp.dot(hdn.astype(jnp.bfloat16), w2_ref[...],
                preferred_element_type=jnp.float32) + b2_ref[...]
    o_ref[...] = (s1 + o).reshape(Wb, N, C).astype(o_ref.dtype)


# --------------------------------------------------------------------------
# Param prep (do once at parameter-load time, not per call).
# --------------------------------------------------------------------------
def _relative_position_index(ws):
    coords = jnp.stack(jnp.meshgrid(jnp.arange(ws), jnp.arange(ws), indexing="ij"))
    cf = coords.reshape(2, -1)                                   # (2, N)
    rel = (cf[:, :, None] - cf[:, None, :]).transpose(1, 2, 0)   # (N, N, 2)
    rel = rel + jnp.array([ws - 1, ws - 1])
    rel = rel.at[:, :, 0].multiply(2 * ws - 1)
    return rel.sum(-1)                                           # (N, N)


def prepare_params(pt, window_size, num_heads):
    C = pt["ln1_g"].shape[0]
    ws = window_size
    N = ws * ws
    hd = C // num_heads
    scale = hd ** (-0.5)

    wqkv_t = jnp.transpose(pt["wqkv"]).astype(jnp.float32)       # (C, 3C)
    wqkv_eff = pt["ln1_g"][:, None] * wqkv_t                     # fold LN1 gamma
    bqkv_eff = pt["bqkv"] + pt["ln1_b"] @ wqkv_t                 # fold LN1 beta
    wqkv_eff = wqkv_eff.at[:, :C].multiply(scale)                # fold qk scale into q
    bqkv_eff = bqkv_eff.at[:C].multiply(scale)

    # proj weight pre-split into per-head (hd, C) slabs (no in-kernel concat).
    wproj_slabs = (jnp.transpose(pt["wproj"]).astype(jnp.float32)
                   .reshape(num_heads, hd, C))

    w1_t = jnp.transpose(pt["w1"]).astype(jnp.float32)           # (C, hidden)
    w1_eff = pt["ln2_g"][:, None] * w1_t                         # fold LN2 gamma
    b1_eff = pt["b1"] + pt["ln2_b"] @ w1_t                       # fold LN2 beta

    idx = _relative_position_index(ws).reshape(-1)
    rel_bias = pt["rel_table"][idx].reshape(N, N, num_heads).transpose(2, 0, 1)

    return dict(
        wqkv=wqkv_eff.astype(jnp.bfloat16),
        bqkv=bqkv_eff.reshape(1, 3 * C).astype(jnp.float32),
        rel_bias=rel_bias.astype(jnp.float32),
        wproj=wproj_slabs.astype(jnp.bfloat16),
        bproj=pt["bproj"].reshape(1, C).astype(jnp.float32),
        w1=w1_eff.astype(jnp.bfloat16),
        b1=b1_eff.reshape(1, -1).astype(jnp.float32),
        w2=jnp.transpose(pt["w2"]).astype(jnp.bfloat16),
        b2=pt["b2"].reshape(1, C).astype(jnp.float32),
    )


def _calculate_mask(H, W, window_size, shift_size):
    img = jnp.zeros((H, W), jnp.float32)
    h_slices = (slice(0, -window_size), slice(-window_size, -shift_size),
                slice(-shift_size, None))
    w_slices = (slice(0, -window_size), slice(-window_size, -shift_size),
                slice(-shift_size, None))
    cnt = 0
    for hs in h_slices:
        for wsl in w_slices:
            img = img.at[hs, wsl].set(cnt)
            cnt += 1
    ws = window_size
    mw = (img.reshape(H // ws, ws, W // ws, ws)
             .transpose(0, 2, 1, 3)
             .reshape(-1, ws * ws))                              # (nW, N)
    diff = mw[:, None, :] - mw[:, :, None]                       # (nW, N, N)
    return jnp.where(diff != 0, -100.0, 0.0).astype(jnp.float32)


def _pick_wb(total_w, nw_per_image, shifted, cap=16):
    """Windows per grid step: divisor of the (mask-compatible) window count,
    capped, and keeping >=2 grid steps where possible (v7x has 2 TCs)."""
    limit = nw_per_image if shifted else total_w
    cap = max(1, min(cap, limit, total_w))
    for w in range(cap, 0, -1):
        if limit % w == 0 and total_w % w == 0 and total_w // w >= 2:
            return w
    return 1


# --------------------------------------------------------------------------
# Forward wrapper.
# --------------------------------------------------------------------------
def swin_block_forward(x, x_size, params, *, dim, input_resolution, num_heads,
                       window_size=7, shift_size=0, max_windows_per_step=16):
    H, W = x_size
    B, L, C = x.shape
    assert L == H * W and C == dim

    if min(input_resolution) <= window_size:      # same adjustment as the module
        shift_size = 0
        window_size = min(input_resolution)
    ws = window_size
    N = ws * ws
    assert H % ws == 0 and W % ws == 0
    nWh, nWw = H // ws, W // ws
    nW = nWh * nWw
    hd = C // num_heads
    total_w = B * nW

    # ---- layout plumbing (pure token permutations) ----
    xg = x.reshape(B, H, W, C)
    if shift_size > 0:
        xg = jnp.roll(xg, shift=(-shift_size, -shift_size), axis=(1, 2))
    xw = (xg.reshape(B, nWh, ws, nWw, ws, C)
            .transpose(0, 1, 3, 2, 4, 5)
            .reshape(total_w, N, C))

    has_mask = shift_size > 0
    Wb = _pick_wb(total_w, nW, has_mask, cap=max_windows_per_step)
    num_blocks = total_w // Wb

    def _const_spec(a):
        # Constant across the grid: single-buffer it (halves its VMEM footprint).
        zeros = (0,) * a.ndim
        return pl.BlockSpec(a.shape, lambda i, z=zeros: z,
                            pipeline_mode=pl.Buffered(1))

    in_specs = [pl.BlockSpec((Wb, N, C), lambda i: (i, 0, 0))]
    args = [xw]
    if has_mask:
        mask = _calculate_mask(H, W, ws, shift_size)             # (nW, N, N)
        bpi = nW // Wb                                           # Wb | nW by construction
        in_specs.append(pl.BlockSpec((Wb, N, N),
                                     lambda i, bpi=bpi: (i % bpi, 0, 0)))
        args.append(mask)

    weight_names = ("wqkv", "bqkv", "rel_bias", "wproj", "bproj",
                    "w1", "b1", "w2", "b2")
    in_specs += [_const_spec(params[n]) for n in weight_names]
    args += [params[n] for n in weight_names]

    # NOTE: for large C/hidden configs, bump vmem via
    # pltpu.CompilerParams(vmem_limit_bytes=...); the defaults cover SwinIR sizes.
    out = pl.pallas_call(
        functools.partial(_swin_block_kernel, num_heads=num_heads,
                          head_dim=hd, has_mask=has_mask),
        out_shape=jax.ShapeDtypeStruct((total_w, N, C), x.dtype),
        grid_spec=pltpu.PrefetchScalarGridSpec(
            num_scalar_prefetch=0,
            grid=(num_blocks,),
            in_specs=in_specs,
            out_specs=pl.BlockSpec((Wb, N, C), lambda i: (i, 0, 0)),
        ),
        compiler_params=pltpu.CompilerParams(
            dimension_semantics=("parallel",)),
    )(*args)

    # window_reverse + un-shift, once, on the final block output only.
    y = (out.reshape(B, nWh, nWw, ws, ws, C)
            .transpose(0, 1, 3, 2, 4, 5)
            .reshape(B, H, W, C))
    if shift_size > 0:
        y = jnp.roll(y, shift=(shift_size, shift_size), axis=(1, 2))
    return y.reshape(B, L, C)


# --------------------------------------------------------------------------
# Pure-JAX f32 reference (mirrors the PyTorch module, eval mode).
# --------------------------------------------------------------------------
def _reference(x, x_size, pt, *, input_resolution, num_heads, window_size, shift_size):
    H, W = x_size
    B, L, C = x.shape
    if min(input_resolution) <= window_size:
        shift_size = 0
        window_size = min(input_resolution)
    ws = window_size
    N = ws * ws
    hd = C // num_heads
    scale = hd ** (-0.5)

    def ln(v, g, b):
        mu = jnp.mean(v, -1, keepdims=True)
        var = jnp.mean((v - mu) ** 2, -1, keepdims=True)
        return (v - mu) / jnp.sqrt(var + EPS) * g + b

    shortcut = x
    xn = ln(x, pt["ln1_g"], pt["ln1_b"]).reshape(B, H, W, C)
    if shift_size > 0:
        xn = jnp.roll(xn, shift=(-shift_size, -shift_size), axis=(1, 2))
    nWh, nWw = H // ws, W // ws
    xw = (xn.reshape(B, nWh, ws, nWw, ws, C).transpose(0, 1, 3, 2, 4, 5)
            .reshape(B * nWh * nWw, N, C))

    qkv = xw @ pt["wqkv"].T + pt["bqkv"]
    qkv = qkv.reshape(-1, N, 3, num_heads, hd).transpose(2, 0, 3, 1, 4)
    q, k, v = qkv[0] * scale, qkv[1], qkv[2]
    attn = q @ jnp.swapaxes(k, -2, -1)
    idx = _relative_position_index(ws).reshape(-1)
    rel_bias = pt["rel_table"][idx].reshape(N, N, num_heads).transpose(2, 0, 1)
    attn = attn + rel_bias[None]
    if shift_size > 0:
        mask = _calculate_mask(H, W, ws, shift_size)
        nW = mask.shape[0]
        attn = attn.reshape(B, nW, num_heads, N, N) + mask[None, :, None]
        attn = attn.reshape(-1, num_heads, N, N)
    attn = jax.nn.softmax(attn, axis=-1)
    o = (attn @ v).transpose(0, 2, 1, 3).reshape(-1, N, C)
    o = o @ pt["wproj"].T + pt["bproj"]
    o = (o.reshape(B, nWh, nWw, ws, ws, C).transpose(0, 1, 3, 2, 4, 5)
           .reshape(B, H, W, C))
    if shift_size > 0:
        o = jnp.roll(o, shift=(shift_size, shift_size), axis=(1, 2))
    xr = shortcut + o.reshape(B, L, C)
    y = ln(xr, pt["ln2_g"], pt["ln2_b"])
    h = jax.nn.gelu(y @ pt["w1"].T + pt["b1"], approximate=False)
    return xr + h @ pt["w2"].T + pt["b2"]


if __name__ == "__main__":
    # Small SwinTransformerBlock config: dim=32, 4 heads, 8x8 tokens, window 4,
    # mlp_ratio=4 -> hidden=128.  Both the shifted (SW-MSA, mask path) and the
    # unshifted (W-MSA, mask-free specialization) kernels are exercised.
    B = 2
    H = W = 8
    dim = 32
    num_heads = 4
    window_size = 4
    mlp_ratio = 4.0
    hidden = int(dim * mlp_ratio)
    input_resolution = (H, W)

    eff_ws = window_size if min(input_resolution) > window_size else min(input_resolution)

    key = jax.random.PRNGKey(0)
    ks = jax.random.split(key, 16)

    def _lin(k, shape, fan_in):
        return jax.random.normal(k, shape, jnp.float32) / jnp.sqrt(float(fan_in))

    pt = dict(
        ln1_g=1.0 + 0.1 * jax.random.normal(ks[0], (dim,), jnp.float32),
        ln1_b=0.1 * jax.random.normal(ks[1], (dim,), jnp.float32),
        wqkv=_lin(ks[2], (3 * dim, dim), dim),
        bqkv=0.1 * jax.random.normal(ks[3], (3 * dim,), jnp.float32),
        rel_table=0.02 * jax.random.normal(
            ks[4], ((2 * eff_ws - 1) ** 2, num_heads), jnp.float32),
        wproj=_lin(ks[5], (dim, dim), dim),
        bproj=0.1 * jax.random.normal(ks[6], (dim,), jnp.float32),
        ln2_g=1.0 + 0.1 * jax.random.normal(ks[7], (dim,), jnp.float32),
        ln2_b=0.1 * jax.random.normal(ks[8], (dim,), jnp.float32),
        w1=_lin(ks[9], (hidden, dim), dim),
        b1=0.1 * jax.random.normal(ks[10], (hidden,), jnp.float32),
        w2=_lin(ks[11], (dim, hidden), hidden),
        b2=0.1 * jax.random.normal(ks[12], (dim,), jnp.float32),
    )

    x = jax.random.normal(ks[13], (B, H * W, dim), jnp.float32)
    params = prepare_params(pt, eff_ws, num_heads)

    # Tolerances cover bf16 MXU operands (incl. the score / p@v matmuls),
    # approx reciprocal in the softmax, and tanh-GELU vs the erf reference.
    for shift_size in (2, 0):
        out = swin_block_forward(x, (H, W), params, dim=dim,
                                 input_resolution=input_resolution,
                                 num_heads=num_heads, window_size=window_size,
                                 shift_size=shift_size)
        out = jax.block_until_ready(out)
        ref = _reference(x, (H, W), pt, input_resolution=input_resolution,
                         num_heads=num_heads, window_size=window_size,
                         shift_size=shift_size)
        assert out.shape == (B, H * W, dim)
        max_err = float(jnp.max(jnp.abs(out - ref)))
        assert jnp.allclose(out, ref, atol=6e-2, rtol=5e-2), (shift_size, max_err)

    print("KERNEL_OK")
</pallas_src>

<mosaic_0001>
module attributes {stable_mosaic.version = 11 : i64} {
  func.func @_swin_block_kernel(%arg0: i32, %arg1: memref<4x16x32xf32, #tpu.memory_space<vmem>>, %arg2: memref<4x16x16xf32, #tpu.memory_space<vmem>>, %arg3: memref<32x96xbf16, #tpu.memory_space<vmem>>, %arg4: memref<1x96xf32, #tpu.memory_space<vmem>>, %arg5: memref<4x16x16xf32, #tpu.memory_space<vmem>>, %arg6: memref<4x8x32xbf16, #tpu.memory_space<vmem>>, %arg7: memref<1x32xf32, #tpu.memory_space<vmem>>, %arg8: memref<32x128xbf16, #tpu.memory_space<vmem>>, %arg9: memref<1x128xf32, #tpu.memory_space<vmem>>, %arg10: memref<128x32xbf16, #tpu.memory_space<vmem>>, %arg11: memref<1x32xf32, #tpu.memory_space<vmem>>, %arg12: memref<4x16x32xf32, #tpu.memory_space<vmem>>) attributes {dimension_semantics = [#tpu.dimension_semantics<parallel>], iteration_bounds = array<i64: 2>, scalar_prefetch = 0 : i64, scratch_operands = 0 : i64, tpu.core_type = #tpu.core_type<tc>, window_params = [{transform_indices = @transform_0, window_bounds = array<i64: 4, 16, 32>}, {transform_indices = @transform_1, window_bounds = array<i64: 4, 16, 16>}, {pipeline_mode = #tpu.pipeline_mode<synchronous>, transform_indices = @transform_2, window_bounds = array<i64: 32, 96>}, {pipeline_mode = #tpu.pipeline_mode<synchronous>, transform_indices = @transform_3, window_bounds = array<i64: 1, 96>}, {pipeline_mode = #tpu.pipeline_mode<synchronous>, transform_indices = @transform_4, window_bounds = array<i64: 4, 16, 16>}, {pipeline_mode = #tpu.pipeline_mode<synchronous>, transform_indices = @transform_5, window_bounds = array<i64: 4, 8, 32>}, {pipeline_mode = #tpu.pipeline_mode<synchronous>, transform_indices = @transform_6, window_bounds = array<i64: 1, 32>}, {pipeline_mode = #tpu.pipeline_mode<synchronous>, transform_indices = @transform_7, window_bounds = array<i64: 32, 128>}, {pipeline_mode = #tpu.pipeline_mode<synchronous>, transform_indices = @transform_8, window_bounds = array<i64: 1, 128>}, {pipeline_mode = #tpu.pipeline_mode<synchronous>, transform_indices = @transform_9, window_bounds = array<i64: 128, 32>}, {pipeline_mode = #tpu.pipeline_mode<synchronous>, transform_indices = @transform_10, window_bounds = array<i64: 1, 32>}, {transform_indices = @transform_11, window_bounds = array<i64: 4, 16, 32>}]} {
    %c0 = arith.constant 0 : index
    %c0_0 = arith.constant 0 : index
    %c0_1 = arith.constant 0 : index
    %0 = vector.load %arg1[%c0, %c0_0, %c0_1] : memref<4x16x32xf32, #tpu.memory_space<vmem>>, vector<4x16x32xf32>
    %1 = vector.shape_cast %0 : vector<4x16x32xf32> to vector<64x32xf32>
    %cst = arith.constant dense<0.000000e+00> : vector<64xf32>
    %2 = vector.multi_reduction <add>, %1, %cst [1] : vector<64x32xf32> to vector<64xf32>
    %3 = vector.shape_cast %2 : vector<64xf32> to vector<64x1xf32>
    %cst_2 = arith.constant 3.200000e+01 : f32
    %4 = vector.broadcast %cst_2 : f32 to vector<64x1xf32>
    %5 = arith.divf %3, %4 : vector<64x1xf32>
    %6 = vector.broadcast %5 : vector<64x1xf32> to vector<64x32xf32>
    %7 = arith.subf %1, %6 : vector<64x32xf32>
    %8 = arith.mulf %7, %7 : vector<64x32xf32>
    %cst_3 = arith.constant dense<0.000000e+00> : vector<64xf32>
    %9 = vector.multi_reduction <add>, %8, %cst_3 [1] : vector<64x32xf32> to vector<64xf32>
    %10 = vector.shape_cast %9 : vector<64xf32> to vector<64x1xf32>
    %cst_4 = arith.constant 3.200000e+01 : f32
    %11 = vector.broadcast %cst_4 : f32 to vector<64x1xf32>
    %12 = arith.divf %10, %11 : vector<64x1xf32>
    %cst_5 = arith.constant 9.99999974E-6 : f32
    %13 = vector.broadcast %cst_5 : f32 to vector<64x1xf32>
    %14 = arith.addf %12, %13 : vector<64x1xf32>
    %15 = math.rsqrt %14 : vector<64x1xf32>
    %16 = vector.broadcast %15 : vector<64x1xf32> to vector<64x32xf32>
    %17 = arith.mulf %7, %16 : vector<64x32xf32>
    %18 = arith.truncf %17 : vector<64x32xf32> to vector<64x32xbf16>
    %c0_6 = arith.constant 0 : index
    %c0_7 = arith.constant 0 : index
    %19 = vector.load %arg3[%c0_6, %c0_7] : memref<32x96xbf16, #tpu.memory_space<vmem>>, vector<32x96xbf16>
    %cst_8 = arith.constant dense<0.000000e+00> : vector<64x96xf32>
    %20 = tpu.matmul %18, %19, %cst_8 {dimension_numbers = #tpu.dot_dimension_numbers<[1], [0], [0], [1], [0, 0, 1, 1], [], []>} : vector<64x32xbf16>, vector<32x96xbf16>, vector<64x96xf32> -> vector<64x96xf32>
    %c0_9 = arith.constant 0 : index
    %c0_10 = arith.constant 0 : index
    %21 = vector.load %arg4[%c0_9, %c0_10] : memref<1x96xf32, #tpu.memory_space<vmem>>, vector<1x96xf32>
    %22 = vector.broadcast %21 : vector<1x96xf32> to vector<64x96xf32>
    %23 = arith.addf %20, %22 : vector<64x96xf32>
    %24 = vector.shape_cast %23 : vector<64x96xf32> to vector<4x16x96xf32>
    %c0_11 = arith.constant 0 : index
    %c0_12 = arith.constant 0 : index
    %c0_13 = arith.constant 0 : index
    %25 = vector.load %arg2[%c0_11, %c0_12, %c0_13] : memref<4x16x16xf32, #tpu.memory_space<vmem>>, vector<4x16x16xf32>
    %cst_14 = arith.constant 0.000000e+00 : f32
    %26 = vector.broadcast %cst_14 : f32 to vector<64x32xf32>
    %27 = vector.extract_strided_slice %24 {offsets = [0, 0, 0], sizes = [4, 16, 8], strides = [1, 1, 1]} : vector<4x16x96xf32> to vector<4x16x8xf32>
    %28 = vector.extract_strided_slice %24 {offsets = [0, 0, 32], sizes = [4, 16, 8], strides = [1, 1, 1]} : vector<4x16x96xf32> to vector<4x16x8xf32>
    %29 = vector.extract_strided_slice %24 {offsets = [0, 0, 64], sizes = [4, 16, 8], strides = [1, 1, 1]} : vector<4x16x96xf32> to vector<4x16x8xf32>
    %30 = arith.truncf %27 : vector<4x16x8xf32> to vector<4x16x8xbf16>
    %31 = arith.truncf %28 : vector<4x16x8xf32> to vector<4x16x8xbf16>
    "tpu.trace_start"() <{level = 10 : i32, message = "wid,wjd->wij"}> : () -> ()
    %cst_15 = arith.constant dense<0.000000e+00> : vector<4x16x16xf32>
    %32 = tpu.matmul %30, %31, %cst_15 {dimension_numbers = #tpu.dot_dimension_numbers<[2], [2], [1], [1], [0, 0, 0, 1, 1, 1], [0], [0]>} : vector<4x16x8xbf16>, vector<4x16x8xbf16>, vector<4x16x16xf32> -> vector<4x16x16xf32>
    "tpu.trace_stop"() : () -> ()
    %c0_16 = arith.constant 0 : index
    %c0_17 = arith.constant 0 : index
    %c0_18 = arith.constant 0 : index
    %33 = vector.load %arg5[%c0_16, %c0_17, %c0_18] : memref<4x16x16xf32, #tpu.memory_space<vmem>>, vector<1x16x16xf32>
    %34 = vector.shape_cast %33 : vector<1x16x16xf32> to vector<16x16xf32>
    %35 = vector.shape_cast %34 : vector<16x16xf32> to vector<1x16x16xf32>
    %36 = vector.broadcast %35 : vector<1x16x16xf32> to vector<4x16x16xf32>
    %37 = arith.addf %32, %36 : vector<4x16x16xf32>
    %38 = arith.addf %37, %25 : vector<4x16x16xf32>
    %cst_19 = arith.constant dense<0xFF800000> : vector<4x16xf32>
    %39 = vector.multi_reduction <maximumf>, %38, %cst_19 [2] : vector<4x16x16xf32> to vector<4x16xf32>
    %40 = vector.shape_cast %39 : vector<4x16xf32> to vector<4x16x1xf32>
    %41 = vector.broadcast %40 : vector<4x16x1xf32> to vector<4x16x16xf32>
    %42 = arith.subf %38, %41 : vector<4x16x16xf32>
    %43 = math.exp %42 : vector<4x16x16xf32>
    %cst_20 = arith.constant dense<0.000000e+00> : vector<4x16xf32>
    %44 = vector.multi_reduction <add>, %43, %cst_20 [2] : vector<4x16x16xf32> to vector<4x16xf32>
    %45 = vector.shape_cast %44 : vector<4x16xf32> to vector<4x16x1xf32>
    %46 = tpu.reciprocal %45 {approx = true} : vector<4x16x1xf32> -> vector<4x16x1xf32>
    %47 = vector.broadcast %46 : vector<4x16x1xf32> to vector<4x16x16xf32>
    %48 = arith.mulf %43, %47 : vector<4x16x16xf32>
    %49 = arith.truncf %48 : vector<4x16x16xf32> to vector<4x16x16xbf16>
    %50 = arith.truncf %29 : vector<4x16x8xf32> to vector<4x16x8xbf16>
    "tpu.trace_start"() <{level = 10 : i32, message = "wij,wjd->wid"}> : () -> ()
    %cst_21 = arith.constant dense<0.000000e+00> : vector<4x16x8xf32>
    %51 = tpu.matmul %49, %50, %cst_21 {dimension_numbers = #tpu.dot_dimension_numbers<[2], [1], [1], [2], [0, 0, 0, 1, 1, 2], [0], [0]>} : vector<4x16x16xbf16>, vector<4x16x8xbf16>, vector<4x16x8xf32> -> vector<4x16x8xf32>
    "tpu.trace_stop"() : () -> ()
    %52 = vector.shape_cast %51 : vector<4x16x8xf32> to vector<64x8xf32>
    %53 = arith.truncf %52 : vector<64x8xf32> to vector<64x8xbf16>
    %c0_22 = arith.constant 0 : index
    %c0_23 = arith.constant 0 : index
    %c0_24 = arith.constant 0 : index
    %54 = vector.load %arg6[%c0_22, %c0_23, %c0_24] : memref<4x8x32xbf16, #tpu.memory_space<vmem>>, vector<1x8x32xbf16>
    %55 = vector.shape_cast %54 : vector<1x8x32xbf16> to vector<8x32xbf16>
    %cst_25 = arith.constant dense<0.000000e+00> : vector<64x32xf32>
    %56 = tpu.matmul %53, %55, %cst_25 {dimension_numbers = #tpu.dot_dimension_numbers<[1], [0], [0], [1], [0, 0, 1, 1], [], []>} : vector<64x8xbf16>, vector<8x32xbf16>, vector<64x32xf32> -> vector<64x32xf32>
    %57 = arith.addf %26, %56 : vector<64x32xf32>
    %58 = vector.extract_strided_slice %24 {offsets = [0, 0, 8], sizes = [4, 16, 8], strides = [1, 1, 1]} : vector<4x16x96xf32> to vector<4x16x8xf32>
    %59 = vector.extract_strided_slice %24 {offsets = [0, 0, 40], sizes = [4, 16, 8], strides = [1, 1, 1]} : vector<4x16x96xf32> to vector<4x16x8xf32>
    %60 = vector.extract_strided_slice %24 {offsets = [0, 0, 72], sizes = [4, 16, 8], strides = [1, 1, 1]} : vector<4x16x96xf32> to vector<4x16x8xf32>
    %61 = arith.truncf %58 : vector<4x16x8xf32> to vector<4x16x8xbf16>
    %62 = arith.truncf %59 : vector<4x16x8xf32> to vector<4x16x8xbf16>
    "tpu.trace_start"() <{level = 10 : i32, message = "wid,wjd->wij"}> : () -> ()
    %cst_26 = arith.constant dense<0.000000e+00> : vector<4x16x16xf32>
    %63 = tpu.matmul %61, %62, %cst_26 {dimension_numbers = #tpu.dot_dimension_numbers<[2], [2], [1], [1], [0, 0, 0, 1, 1, 1], [0], [0]>} : vector<4x16x8xbf16>, vector<4x16x8xbf16>, vector<4x16x16xf32> -> vector<4x16x16xf32>
    "tpu.trace_stop"() : () -> ()
    %c1 = arith.constant 1 : index
    %c0_27 = arith.constant 0 : index
    %c0_28 = arith.constant 0 : index
    %64 = vector.load %arg5[%c1, %c0_27, %c0_28] : memref<4x16x16xf32, #tpu.memory_space<vmem>>, vector<1x16x16xf32>
    %65 = vector.shape_cast %64 : vector<1x16x16xf32> to vector<16x16xf32>
    %66 = vector.shape_cast %65 : vector<16x16xf32> to vector<1x16x16xf32>
    %67 = vector.broadcast %66 : vector<1x16x16xf32> to vector<4x16x16xf32>
    %68 = arith.addf %63, %67 : vector<4x16x16xf32>
    %69 = arith.addf %68, %25 : vector<4x16x16xf32>
    %cst_29 = arith.constant dense<0xFF800000> : vector<4x16xf32>
    %70 = vector.multi_reduction <maximumf>, %69, %cst_29 [2] : vector<4x16x16xf32> to vector<4x16xf32>
    %71 = vector.shape_cast %70 : vector<4x16xf32> to vector<4x16x1xf32>
    %72 = vector.broadcast %71 : vector<4x16x1xf32> to vector<4x16x16xf32>
    %73 = arith.subf %69, %72 : vector<4x16x16xf32>
    %74 = math.exp %73 : vector<4x16x16xf32>
    %cst_30 = arith.constant dense<0.000000e+00> : vector<4x16xf32>
    %75 = vector.multi_reduction <add>, %74, %cst_30 [2] : vector<4x16x16xf32> to vector<4x16xf32>
    %76 = vector.shape_cast %75 : vector<4x16xf32> to vector<4x16x1xf32>
    %77 = tpu.reciprocal %76 {approx = true} : vector<4x16x1xf32> -> vector<4x16x1xf32>
    %78 = vector.broadcast %77 : vector<4x16x1xf32> to vector<4x16x16xf32>
    %79 = arith.mulf %74, %78 : vector<4x16x16xf32>
    %80 = arith.truncf %79 : vector<4x16x16xf32> to vector<4x16x16xbf16>
    %81 = arith.truncf %60 : vector<4x16x8xf32> to vector<4x16x8xbf16>
    "tpu.trace_start"() <{level = 10 : i32, message = "wij,wjd->wid"}> : () -> ()
    %cst_31 = arith.constant dense<0.000000e+00> : vector<4x16x8xf32>
    %82 = tpu.matmul %80, %81, %cst_31 {dimension_numbers = #tpu.dot_dimension_numbers<[2], [1], [1], [2], [0, 0, 0, 1, 1, 2], [0], [0]>} : vector<4x16x16xbf16>, vector<4x16x8xbf16>, vector<4x16x8xf32> -> vector<4x16x8xf32>
    "tpu.trace_stop"() : () -> ()
    %83 = vector.shape_cast %82 : vector<4x16x8xf32> to vector<64x8xf32>
    %84 = arith.truncf %83 : vector<64x8xf32> to vector<64x8xbf16>
    %c1_32 = arith.constant 1 : index
    %c0_33 = arith.constant 0 : index
    %c0_34 = arith.constant 0 : index
    %85 = vector.load %arg6[%c1_32, %c0_33, %c0_34] : memref<4x8x32xbf16, #tpu.memory_space<vmem>>, vector<1x8x32xbf16>
    %86 = vector.shape_cast %85 : vector<1x8x32xbf16> to vector<8x32xbf16>
    %cst_35 = arith.constant dense<0.000000e+00> : vector<64x32xf32>
    %87 = tpu.matmul %84, %86, %cst_35 {dimension_numbers = #tpu.dot_dimension_numbers<[1], [0], [0], [1], [0, 0, 1, 1], [], []>} : vector<64x8xbf16>, vector<8x32xbf16>, vector<64x32xf32> -> vector<64x32xf32>
    %88 = arith.addf %57, %87 : vector<64x32xf32>
    %89 = vector.extract_strided_slice %24 {offsets = [0, 0, 16], sizes = [4, 16, 8], strides = [1, 1, 1]} : vector<4x16x96xf32> to vector<4x16x8xf32>
    %90 = vector.extract_strided_slice %24 {offsets = [0, 0, 48], sizes = [4, 16, 8], strides = [1, 1, 1]} : vector<4x16x96xf32> to vector<4x16x8xf32>
    %91 = vector.extract_strided_slice %24 {offsets = [0, 0, 80], sizes = [4, 16, 8], strides = [1, 1, 1]} : vector<4x16x96xf32> to vector<4x16x8xf32>
    %92 = arith.truncf %89 : vector<4x16x8xf32> to vector<4x16x8xbf16>
    %93 = arith.truncf %90 : vector<4x16x8xf32> to vector<4x16x8xbf16>
    "tpu.trace_start"() <{level = 10 : i32, message = "wid,wjd->wij"}> : () -> ()
    %cst_36 = arith.constant dense<0.000000e+00> : vector<4x16x16xf32>
    %94 = tpu.matmul %92, %93, %cst_36 {dimension_numbers = #tpu.dot_dimension_numbers<[2], [2], [1], [1], [0, 0, 0, 1, 1, 1], [0], [0]>} : vector<4x16x8xbf16>, vector<4x16x8xbf16>, vector<4x16x16xf32> -> vector<4x16x16xf32>
    "tpu.trace_stop"() : () -> ()
    %c2 = arith.constant 2 : index
    %c0_37 = arith.constant 0 : index
    %c0_38 = arith.constant 0 : index
    %95 = vector.load %arg5[%c2, %c0_37, %c0_38] : memref<4x16x16xf32, #tpu.memory_space<vmem>>, vector<1x16x16xf32>
    %96 = vector.shape_cast %95 : vector<1x16x16xf32> to vector<16x16xf32>
    %97 = vector.shape_cast %96 : vector<16x16xf32> to vector<1x16x16xf32>
    %98 = vector.broadcast %97 : vector<1x16x16xf32> to vector<4x16x16xf32>
    %99 = arith.addf %94, %98 : vector<4x16x16xf32>
    %100 = arith.addf %99, %25 : vector<4x16x16xf32>
    %cst_39 = arith.constant dense<0xFF800000> : vector<4x16xf32>
    %101 = vector.multi_reduction <maximumf>, %100, %cst_39 [2] : vector<4x16x16xf32> to vector<4x16xf32>
    %102 = vector.shape_cast %101 : vector<4x16xf32> to vector<4x16x1xf32>
    %103 = vector.broadcast %102 : vector<4x16x1xf32> to vector<4x16x16xf32>
    %104 = arith.subf %100, %103 : vector<4x16x16xf32>
    %105 = math.exp %104 : vector<4x16x16xf32>
    %cst_40 = arith.constant dense<0.000000e+00> : vector<4x16xf32>
    %106 = vector.multi_reduction <add>, %105, %cst_40 [2] : vector<4x16x16xf32> to vector<4x16xf32>
    %107 = vector.shape_cast %106 : vector<4x16xf32> to vector<4x16x1xf32>
    %108 = tpu.reciprocal %107 {approx = true} : vector<4x16x1xf32> -> vector<4x16x1xf32>
    %109 = vector.broadcast %108 : vector<4x16x1xf32> to vector<4x16x16xf32>
    %110 = arith.mulf %105, %109 : vector<4x16x16xf32>
    %111 = arith.truncf %110 : vector<4x16x16xf32> to vector<4x16x16xbf16>
    %112 = arith.truncf %91 : vector<4x16x8xf32> to vector<4x16x8xbf16>
    "tpu.trace_start"() <{level = 10 : i32, message = "wij,wjd->wid"}> : () -> ()
    %cst_41 = arith.constant dense<0.000000e+00> : vector<4x16x8xf32>
    %113 = tpu.matmul %111, %112, %cst_41 {dimension_numbers = #tpu.dot_dimension_numbers<[2], [1], [1], [2], [0, 0, 0, 1, 1, 2], [0], [0]>} : vector<4x16x16xbf16>, vector<4x16x8xbf16>, vector<4x16x8xf32> -> vector<4x16x8xf32>
    "tpu.trace_stop"() : () -> ()
    %114 = vector.shape_cast %113 : vector<4x16x8xf32> to vector<64x8xf32>
    %115 = arith.truncf %114 : vector<64x8xf32> to vector<64x8xbf16>
    %c2_42 = arith.constant 2 : index
    %c0_43 = arith.constant 0 : index
    %c0_44 = arith.constant 0 : index
    %116 = vector.load %arg6[%c2_42, %c0_43, %c0_44] : memref<4x8x32xbf16, #tpu.memory_space<vmem>>, vector<1x8x32xbf16>
    %117 = vector.shape_cast %116 : vector<1x8x32xbf16> to vector<8x32xbf16>
    %cst_45 = arith.constant dense<0.000000e+00> : vector<64x32xf32>
    %118 = tpu.matmul %115, %117, %cst_45 {dimension_numbers = #tpu.dot_dimension_numbers<[1], [0], [0], [1], [0, 0, 1, 1], [], []>} : vector<64x8xbf16>, vector<8x32xbf16>, vector<64x32xf32> -> vector<64x32xf32>
    %119 = arith.addf %88, %118 : vector<64x32xf32>
    %120 = vector.extract_strided_slice %24 {offsets = [0, 0, 24], sizes = [4, 16, 8], strides = [1, 1, 1]} : vector<4x16x96xf32> to vector<4x16x8xf32>
    %121 = vector.extract_strided_slice %24 {offsets = [0, 0, 56], sizes = [4, 16, 8], strides = [1, 1, 1]} : vector<4x16x96xf32> to vector<4x16x8xf32>
    %122 = vector.extract_strided_slice %24 {offsets = [0, 0, 88], sizes = [4, 16, 8], strides = [1, 1, 1]} : vector<4x16x96xf32> to vector<4x16x8xf32>
    %123 = arith.truncf %120 : vector<4x16x8xf32> to vector<4x16x8xbf16>
    %124 = arith.truncf %121 : vector<4x16x8xf32> to vector<4x16x8xbf16>
    "tpu.trace_start"() <{level = 10 : i32, message = "wid,wjd->wij"}> : () -> ()
    %cst_46 = arith.constant dense<0.000000e+00> : vector<4x16x16xf32>
    %125 = tpu.matmul %123, %124, %cst_46 {dimension_numbers = #tpu.dot_dimension_numbers<[2], [2], [1], [1], [0, 0, 0, 1, 1, 1], [0], [0]>} : vector<4x16x8xbf16>, vector<4x16x8xbf16>, vector<4x16x16xf32> -> vector<4x16x16xf32>
    "tpu.trace_stop"() : () -> ()
    %c3 = arith.constant 3 : index
    %c0_47 = arith.constant 0 : index
    %c0_48 = arith.constant 0 : index
    %126 = vector.load %arg5[%c3, %c0_47, %c0_48] : memref<4x16x16xf32, #tpu.memory_space<vmem>>, vector<1x16x16xf32>
    %127 = vector.shape_cast %126 : vector<1x16x16xf32> to vector<16x16xf32>
    %128 = vector.shape_cast %127 : vector<16x16xf32> to vector<1x16x16xf32>
    %129 = vector.broadcast %128 : vector<1x16x16xf32> to vector<4x16x16xf32>
    %130 = arith.addf %125, %129 : vector<4x16x16xf32>
    %131 = arith.addf %130, %25 : vector<4x16x16xf32>
    %cst_49 = arith.constant dense<0xFF800000> : vector<4x16xf32>
    %132 = vector.multi_reduction <maximumf>, %131, %cst_49 [2] : vector<4x16x16xf32> to vector<4x16xf32>
    %133 = vector.shape_cast %132 : vector<4x16xf32> to vector<4x16x1xf32>
    %134 = vector.broadcast %133 : vector<4x16x1xf32> to vector<4x16x16xf32>
    %135 = arith.subf %131, %134 : vector<4x16x16xf32>
    %136 = math.exp %135 : vector<4x16x16xf32>
    %cst_50 = arith.constant dense<0.000000e+00> : vector<4x16xf32>
    %137 = vector.multi_reduction <add>, %136, %cst_50 [2] : vector<4x16x16xf32> to vector<4x16xf32>
    %138 = vector.shape_cast %137 : vector<4x16xf32> to vector<4x16x1xf32>
    %139 = tpu.reciprocal %138 {approx = true} : vector<4x16x1xf32> -> vector<4x16x1xf32>
    %140 = vector.broadcast %139 : vector<4x16x1xf32> to vector<4x16x16xf32>
    %141 = arith.mulf %136, %140 : vector<4x16x16xf32>
    %142 = arith.truncf %141 : vector<4x16x16xf32> to vector<4x16x16xbf16>
    %143 = arith.truncf %122 : vector<4x16x8xf32> to vector<4x16x8xbf16>
    "tpu.trace_start"() <{level = 10 : i32, message = "wij,wjd->wid"}> : () -> ()
    %cst_51 = arith.constant dense<0.000000e+00> : vector<4x16x8xf32>
    %144 = tpu.matmul %142, %143, %cst_51 {dimension_numbers = #tpu.dot_dimension_numbers<[2], [1], [1], [2], [0, 0, 0, 1, 1, 2], [0], [0]>} : vector<4x16x16xbf16>, vector<4x16x8xbf16>, vector<4x16x8xf32> -> vector<4x16x8xf32>
    "tpu.trace_stop"() : () -> ()
    %145 = vector.shape_cast %144 : vector<4x16x8xf32> to vector<64x8xf32>
    %146 = arith.truncf %145 : vector<64x8xf32> to vector<64x8xbf16>
    %c3_52 = arith.constant 3 : index
    %c0_53 = arith.constant 0 : index
    %c0_54 = arith.constant 0 : index
    %147 = vector.load %arg6[%c3_52, %c0_53, %c0_54] : memref<4x8x32xbf16, #tpu.memory_space<vmem>>, vector<1x8x32xbf16>
    %148 = vector.shape_cast %147 : vector<1x8x32xbf16> to vector<8x32xbf16>
    %cst_55 = arith.constant dense<0.000000e+00> : vector<64x32xf32>
    %149 = tpu.matmul %146, %148, %cst_55 {dimension_numbers = #tpu.dot_dimension_numbers<[1], [0], [0], [1], [0, 0, 1, 1], [], []>} : vector<64x8xbf16>, vector<8x32xbf16>, vector<64x32xf32> -> vector<64x32xf32>
    %150 = arith.addf %119, %149 : vector<64x32xf32>
    %151 = arith.addf %1, %150 : vector<64x32xf32>
    %c0_56 = arith.constant 0 : index
    %c0_57 = arith.constant 0 : index
    %152 = vector.load %arg7[%c0_56, %c0_57] : memref<1x32xf32, #tpu.memory_space<vmem>>, vector<1x32xf32>
    %153 = vector.broadcast %152 : vector<1x32xf32> to vector<64x32xf32>
    %154 = arith.addf %151, %153 : vector<64x32xf32>
    %cst_58 = arith.constant dense<0.000000e+00> : vector<64xf32>
    %155 = vector.multi_reduction <add>, %154, %cst_58 [1] : vector<64x32xf32> to vector<64xf32>
    %156 = vector.shape_cast %155 : vector<64xf32> to vector<64x1xf32>
    %cst_59 = arith.constant 3.200000e+01 : f32
    %157 = vector.broadcast %cst_59 : f32 to vector<64x1xf32>
    %158 = arith.divf %156, %157 : vector<64x1xf32>
    %159 = vector.broadcast %158 : vector<64x1xf32> to vector<64x32xf32>
    %160 = arith.subf %154, %159 : vector<64x32xf32>
    %161 = arith.mulf %160, %160 : vector<64x32xf32>
    %cst_60 = arith.constant dense<0.000000e+00> : vector<64xf32>
    %162 = vector.multi_reduction <add>, %161, %cst_60 [1] : vector<64x32xf32> to vector<64xf32>
    %163 = vector.shape_cast %162 : vector<64xf32> to vector<64x1xf32>
    %cst_61 = arith.constant 3.200000e+01 : f32
    %164 = vector.broadcast %cst_61 : f32 to vector<64x1xf32>
    %165 = arith.divf %163, %164 : vector<64x1xf32>
    %cst_62 = arith.constant 9.99999974E-6 : f32
    %166 = vector.broadcast %cst_62 : f32 to vector<64x1xf32>
    %167 = arith.addf %165, %166 : vector<64x1xf32>
    %168 = math.rsqrt %167 : vector<64x1xf32>
    %169 = vector.broadcast %168 : vector<64x1xf32> to vector<64x32xf32>
    %170 = arith.mulf %160, %169 : vector<64x32xf32>
    %171 = arith.truncf %170 : vector<64x32xf32> to vector<64x32xbf16>
    %c0_63 = arith.constant 0 : index
    %c0_64 = arith.constant 0 : index
    %172 = vector.load %arg8[%c0_63, %c0_64] : memref<32x128xbf16, #tpu.memory_space<vmem>>, vector<32x128xbf16>
    %cst_65 = arith.constant dense<0.000000e+00> : vector<64x128xf32>
    %173 = tpu.matmul %171, %172, %cst_65 {dimension_numbers = #tpu.dot_dimension_numbers<[1], [0], [0], [1], [0, 0, 1, 1], [], []>} : vector<64x32xbf16>, vector<32x128xbf16>, vector<64x128xf32> -> vector<64x128xf32>
    %c0_66 = arith.constant 0 : index
    %c0_67 = arith.constant 0 : index
    %174 = vector.load %arg9[%c0_66, %c0_67] : memref<1x128xf32, #tpu.memory_space<vmem>>, vector<1x128xf32>
    %175 = vector.broadcast %174 : vector<1x128xf32> to vector<64x128xf32>
    %176 = arith.addf %173, %175 : vector<64x128xf32>
    %177 = arith.mulf %176, %176 : vector<64x128xf32>
    %178 = arith.mulf %176, %177 : vector<64x128xf32>
    %cst_68 = arith.constant 4.471500e-02 : f32
    %179 = vector.broadcast %cst_68 : f32 to vector<64x128xf32>
    %180 = arith.mulf %179, %178 : vector<64x128xf32>
    %181 = arith.addf %176, %180 : vector<64x128xf32>
    %cst_69 = arith.constant 0.797884583 : f32
    %182 = vector.broadcast %cst_69 : f32 to vector<64x128xf32>
    %183 = arith.mulf %182, %181 : vector<64x128xf32>
    %184 = math.tanh %183 : vector<64x128xf32>
    %cst_70 = arith.constant 1.000000e+00 : f32
    %185 = vector.broadcast %cst_70 : f32 to vector<64x128xf32>
    %186 = arith.addf %185, %184 : vector<64x128xf32>
    %cst_71 = arith.constant 5.000000e-01 : f32
    %187 = vector.broadcast %cst_71 : f32 to vector<64x128xf32>
    %188 = arith.mulf %187, %186 : vector<64x128xf32>
    %189 = arith.mulf %176, %188 : vector<64x128xf32>
    %190 = arith.truncf %189 : vector<64x128xf32> to vector<64x128xbf16>
    %c0_72 = arith.constant 0 : index
    %c0_73 = arith.constant 0 : index
    %191 = vector.load %arg10[%c0_72, %c0_73] : memref<128x32xbf16, #tpu.memory_space<vmem>>, vector<128x32xbf16>
    %cst_74 = arith.constant dense<0.000000e+00> : vector<64x32xf32>
    %192 = tpu.matmul %190, %191, %cst_74 {dimension_numbers = #tpu.dot_dimension_numbers<[1], [0], [0], [1], [0, 0, 1, 1], [], []>} : vector<64x128xbf16>, vector<128x32xbf16>, vector<64x32xf32> -> vector<64x32xf32>
    %c0_75 = arith.constant 0 : index
    %c0_76 = arith.constant 0 : index
    %193 = vector.load %arg11[%c0_75, %c0_76] : memref<1x32xf32, #tpu.memory_space<vmem>>, vector<1x32xf32>
    %194 = vector.broadcast %193 : vector<1x32xf32> to vector<64x32xf32>
    %195 = arith.addf %192, %194 : vector<64x32xf32>
    %196 = arith.addf %154, %195 : vector<64x32xf32>
    %197 = vector.shape_cast %196 : vector<64x32xf32> to vector<4x16x32xf32>
    %c0_77 = arith.constant 0 : index
    %c0_78 = arith.constant 0 : index
    %c0_79 = arith.constant 0 : index
    %198 = vector.load %arg12[%c0_77, %c0_78, %c0_79] : memref<4x16x32xf32, #tpu.memory_space<vmem>>, vector<4x16x32xf32>
    tpu.vector_store %arg12[%c0_77, %c0_78, %c0_79], %197 {strides = array<i32>} : memref<4x16x32xf32, #tpu.memory_space<vmem>>, vector<4x16x32xf32>,
    return
  }
  func.func @transform_0(%arg0: i32) -> (i32, i32, i32) {
    %c0_i32 = arith.constant 0 : i32
    %c0_i32_0 = arith.constant 0 : i32
    %c0_i32_1 = arith.constant 0 : i32
    return %arg0, %c0_i32, %c0_i32_0 : i32, i32, i32
  }
  func.func @transform_1(%arg0: i32) -> (i32, i32, i32) {
    %c1_i32 = arith.constant 1 : i32
    %c0_i32 = arith.constant 0 : i32
    %0 = arith.cmpi eq, %c1_i32, %c0_i32 : i32
    %c1_i32_0 = arith.constant 1 : i32
    %1 = arith.select %0, %c1_i32_0, %c1_i32 : i32
    %2 = arith.remsi %arg0, %1 : i32
    %c0_i32_1 = arith.constant 0 : i32
    %3 = arith.cmpi ne, %2, %c0_i32_1 : i32
    %c0_i32_2 = arith.constant 0 : i32
    %4 = arith.cmpi slt, %2, %c0_i32_2 : i32
    %c0_i32_3 = arith.constant 0 : i32
    %5 = arith.cmpi slt, %1, %c0_i32_3 : i32
    %6 = arith.xori %4, %5 : i1
    %7 = arith.andi %6, %3 : i1
    %8 = arith.addi %2, %1 : i32
    %9 = arith.select %7, %8, %2 : i32
    %c0_i32_4 = arith.constant 0 : i32
    %c0_i32_5 = arith.constant 0 : i32
    %c0_i32_6 = arith.constant 0 : i32
    return %9, %c0_i32_4, %c0_i32_5 : i32, i32, i32
  }
  func.func @transform_2(%arg0: i32) -> (i32, i32) {
    %c0_i32 = arith.constant 0 : i32
    %c0_i32_0 = arith.constant 0 : i32
    %c0_i32_1 = arith.constant 0 : i32
    return %c0_i32, %c0_i32_0 : i32, i32
  }
  func.func @transform_3(%arg0: i32) -> (i32, i32) {
    %c0_i32 = arith.constant 0 : i32
    %c0_i32_0 = arith.constant 0 : i32
    %c0_i32_1 = arith.constant 0 : i32
    return %c0_i32, %c0_i32_0 : i32, i32
  }
  func.func @transform_4(%arg0: i32) -> (i32, i32, i32) {
    %c0_i32 = arith.constant 0 : i32
    %c0_i32_0 = arith.constant 0 : i32
    %c0_i32_1 = arith.constant 0 : i32
    %c0_i32_2 = arith.constant 0 : i32
    return %c0_i32, %c0_i32_0, %c0_i32_1 : i32, i32, i32
  }
  func.func @transform_5(%arg0: i32) -> (i32, i32, i32) {
    %c0_i32 = arith.constant 0 : i32
    %c0_i32_0 = arith.constant 0 : i32
    %c0_i32_1 = arith.constant 0 : i32
    %c0_i32_2 = arith.constant 0 : i32
    return %c0_i32, %c0_i32_0, %c0_i32_1 : i32, i32, i32
  }
  func.func @transform_6(%arg0: i32) -> (i32, i32) {
    %c0_i32 = arith.constant 0 : i32
    %c0_i32_0 = arith.constant 0 : i32
    %c0_i32_1 = arith.constant 0 : i32
    return %c0_i32, %c0_i32_0 : i32, i32
  }
  func.func @transform_7(%arg0: i32) -> (i32, i32) {
    %c0_i32 = arith.constant 0 : i32
    %c0_i32_0 = arith.constant 0 : i32
    %c0_i32_1 = arith.constant 0 : i32
    return %c0_i32, %c0_i32_0 : i32, i32
  }
  func.func @transform_8(%arg0: i32) -> (i32, i32) {
    %c0_i32 = arith.constant 0 : i32
    %c0_i32_0 = arith.constant 0 : i32
    %c0_i32_1 = arith.constant 0 : i32
    return %c0_i32, %c0_i32_0 : i32, i32
  }
  func.func @transform_9(%arg0: i32) -> (i32, i32) {
    %c0_i32 = arith.constant 0 : i32
    %c0_i32_0 = arith.constant 0 : i32
    %c0_i32_1 = arith.constant 0 : i32
    return %c0_i32, %c0_i32_0 : i32, i32
  }
  func.func @transform_10(%arg0: i32) -> (i32, i32) {
    %c0_i32 = arith.constant 0 : i32
    %c0_i32_0 = arith.constant 0 : i32
    %c0_i32_1 = arith.constant 0 : i32
    return %c0_i32, %c0_i32_0 : i32, i32
  }
  func.func @transform_11(%arg0: i32) -> (i32, i32, i32) {
    %c0_i32 = arith.constant 0 : i32
    %c0_i32_0 = arith.constant 0 : i32
    %c0_i32_1 = arith.constant 0 : i32
    return %arg0, %c0_i32, %c0_i32_0 : i32, i32, i32
  }
}

</mosaic_0001>

<llo_original>
// kernel: tpu_custom_call.1
$region0: #{tpu_custom_call.1}
  #allocation0 [shape = 'u32[]', space=smem, size = 0x4, offset = 0x4, fixed_abs, tag = 'smem constant byte address 0x4 - core index']
  #allocation1 [shape = 'u32[144,128]{1,0:T(1,128)}', space=vmem, size = 0x12000, scoped, tag = 'internal scratch']
  %s0 = inlined_call_operand.hbm [shape: f32[8,16,32], index: 0, kind: input, shape index: {}]
  %s1 = inlined_call_operand.vmem [shape: f32[4,16,16], index: 1, kind: input, shape index: {}]
  %s2 = inlined_call_operand.vmem [shape: bf16[32,96], index: 2, kind: input, shape index: {}]
  %s3 = inlined_call_operand.vmem [shape: f32[1,96], index: 3, kind: input, shape index: {}]
  %s4 = inlined_call_operand.hbm [shape: f32[4,16,16], index: 4, kind: input, shape index: {}]
  %s5 = inlined_call_operand.hbm [shape: bf16[4,8,32], index: 5, kind: input, shape index: {}]
  %s6 = inlined_call_operand.vmem [shape: f32[1,32], index: 6, kind: input, shape index: {}]
  %s7 = inlined_call_operand.hbm [shape: bf16[32,128], index: 7, kind: input, shape index: {}]
  %s8 = inlined_call_operand.vmem [shape: f32[1,128], index: 8, kind: input, shape index: {}]
  %s9 = inlined_call_operand.vmem [shape: bf16[128,32], index: 9, kind: input, shape index: {}]
  %s10 = inlined_call_operand.vmem [shape: f32[1,32], index: 10, kind: input, shape index: {}]
  %s11 = inlined_call_operand.hbm [shape: f32[8,16,32], index: 11, kind: output, shape index: {}]
  %s12 = sld [smem:[#allocation0]]
  $region93: #{tpu_custom_call.1} parent=0
    _
  %s14 = ssub.s32 1, %s12
  %s15 = scalar_select 0, %s14, %s12
  $region1: #{tpu_custom_call.1} parent=0
    #allocation2 [shape = 'u8[65536]{0}', space=vmem, size = 0x10000, scoped, tag = 'input window, operand 0']
    #allocation3 [shape = 's32[2]{0}', space=sflag, size = 0x8, scoped, tag = 'scoped memory for tpu_custom_call.1']
    #allocation4 [shape = 's32[2]{0}', space=sflag, size = 0x8, scoped, tag = 'scoped memory for tpu_custom_call.1']
    #allocation5 [shape = 'u8[32768]{0}', space=vmem, size = 0x8000, scoped, tag = 'input window, operand 4, single buffered']
    #allocation6 [shape = 's32[1]{0}', space=sflag, size = 0x4, scoped, tag = 'scoped memory for tpu_custom_call.1']
    #allocation7 [shape = 'u8[8192]{0}', space=vmem, size = 0x2000, scoped, tag = 'input window, operand 5, single buffered']
    #allocation8 [shape = 'u8[8192]{0}', space=vmem, size = 0x2000, scoped, tag = 'input window, operand 7, single buffered']
    #allocation9 [shape = 's32[1]{0}', space=sflag, size = 0x4, scoped, tag = 'scoped memory for tpu_custom_call.1']
    #allocation10 [shape = 'u8[65536]{0}', space=vmem, size = 0x10000, scoped, tag = 'output window, operand 0']
    %16 = vsyncpa [#allocation3], 0
    %s17 = scalar_lea.sflag [#allocation3], 1
    %18 = vsyncpa %s17, 0
    %19 = vsyncpa [#allocation6], 0
    %20 = vsyncpa [#allocation9], 0
    %21 = vsyncpa [#allocation4], 0
    %s22 = scalar_lea.sflag [#allocation4], 1
    %23 = vsyncpa %s22, 0
    loop: start=0, step=1, limit=4
    $region2: #{tpu_custom_call.1} parent=1 // loop_pre_header
      _
    $region3: #{tpu_custom_call.1} parent=1 // loop_header
      %s25 = sphi 0, %s29
      %p26 = scmp.ge.s32.totalorder %s25, 4
      %s35 = sphi 0, %s37
      %s38 = sphi 0, %s35
      %s39 = sphi 0, %s38
      %s55 = sphi 0, %s39
      %s59 = sphi 0, %s59
      %s61 = sphi 0, %s59
      %s62 = sphi 0, %s61
      %s76 = sphi 0, %s62
      %s80 = sphi 0, %s80
      %s82 = sphi 0, %s80
      %s83 = sphi 0, %s82
      %s97 = sphi 0, %s83
      %s101 = sphi 0, %s101
      %s103 = sphi 0, %s101
      %s104 = sphi 0, %s103
      %s118 = sphi 0, %s104
      %s122 = sphi 0, %s122
      %s124 = sphi 0, %s122
      %s125 = sphi 0, %s124
      %s139 = sphi 0, %s125
      %s143 = sphi 0, %s143
      %s145 = sphi 0, %s143
      %s146 = sphi 0, %s145
      %s160 = sphi 0, %s146
      %s164 = sphi 0, %s164
      %s166 = sphi 0, %s164
      %s167 = sphi 0, %s166
      %s181 = sphi 0, %s167
      %s185 = sphi 0, %s185
      %s187 = sphi 0, %s185
      %s188 = sphi 0, %s187
      %s202 = sphi 0, %s188
      %s206 = sphi 0, %s206
      %s208 = sphi 0, %s206
      %s209 = sphi 0, %s208
      %s223 = sphi 0, %s209
      %s227 = sphi 0, %s227
      %s229 = sphi 0, %s227
      %s230 = sphi 0, %s229
      %s244 = sphi 0, %s230
      %s248 = sphi 0, %s248
      %s250 = sphi 0, %s248
      %s251 = sphi 0, %s250
      %s265 = sphi 0, %s251
      %s271 = sphi 0, %s273
      %s274 = sphi 0, %s271
      %s275 = sphi 0, %s274
      %s291 = sphi 0, %s275
    $region4: #{tpu_custom_call.1} parent=1 // loop_header_branch
      %28 = sbr.rel (%p26) target = $region8
    $region5: #{tpu_custom_call.1} parent=1 // loop_body
      %s30 = ssub.s32 %s25, 1
      %s31 = ssub.s32 %s25, 2
      %s32 = sadd.s32 %s25, 1
      %s33 = ssub.s32 %s25, %s32
      %p34 = scmp.eq.s32.totalorder %s33, 0
      %s36 = sadd.s32 %s35, 1
      %s37 = scalar_select %p34, %s35, %s36
      %p40 = pneg %p34
      %p41 = scmp.eq.s32.totalorder %s25, 1
      %p42 = por %p40, %p41
      %p43 = scmp.ne.s32.totalorder %s35, %s38
      %p44 = scmp.eq.s32.totalorder %s25, 0
      %p45 = por %p43, %p44
      %p46 = scmp.ne.s32.totalorder %s35, %s38
      %p47 = scmp.eq.s32.totalorder %s30, 1
      %p48 = por %p46, %p47
      %p49 = scmp.ne.s32.totalorder %s38, %s39
      %p50 = scmp.eq.s32.totalorder %s30, 0
      %p51 = por %p49, %p50
      %p52 = scmp.ne.s32.totalorder %s38, %s39
      %p53 = scmp.eq.s32.totalorder %s31, 1
      %p54 = por %p52, %p53
      %p56 = scmp.ne.s32.totalorder %s39, %s55
      %p57 = scmp.eq.s32.totalorder %s31, 0
      %p58 = por %p56, %p57
      %s60 = sadd.s32 %s59, 1
      %p63 = scmp.eq.s32.totalorder %s25, 1
      %p64 = scmp.ne.s32.totalorder %s59, %s61
      %p65 = scmp.eq.s32.totalorder %s25, 0
      %p66 = por %p64, %p65
      %p67 = scmp.ne.s32.totalorder %s59, %s61
      %p68 = scmp.eq.s32.totalorder %s30, 1
      %p69 = por %p67, %p68
      %p70 = scmp.ne.s32.totalorder %s61, %s62
      %p71 = scmp.eq.s32.totalorder %s30, 0
      %p72 = por %p70, %p71
      %p73 = scmp.ne.s32.totalorder %s61, %s62
      %p74 = scmp.eq.s32.totalorder %s31, 1
      %p75 = por %p73, %p74
      %p77 = scmp.ne.s32.totalorder %s62, %s76
      %p78 = scmp.eq.s32.totalorder %s31, 0
      %p79 = por %p77, %p78
      %s81 = sadd.s32 %s80, 1
      %p84 = scmp.eq.s32.totalorder %s25, 1
      %p85 = scmp.ne.s32.totalorder %s80, %s82
      %p86 = scmp.eq.s32.totalorder %s25, 0
      %p87 = por %p85, %p86
      %p88 = scmp.ne.s32.totalorder %s80, %s82
      %p89 = scmp.eq.s32.totalorder %s30, 1
      %p90 = por %p88, %p89
      %p91 = scmp.ne.s32.totalorder %s82, %s83
      %p92 = scmp.eq.s32.totalorder %s30, 0
      %p93 = por %p91, %p92
      %p94 = scmp.ne.s32.totalorder %s82, %s83
      %p95 = scmp.eq.s32.totalorder %s31, 1
      %p96 = por %p94, %p95
      %p98 = scmp.ne.s32.totalorder %s83, %s97
      %p99 = scmp.eq.s32.totalorder %s31, 0
      %p100 = por %p98, %p99
      %s102 = sadd.s32 %s101, 1
      %p105 = scmp.eq.s32.totalorder %s25, 1
      %p106 = scmp.ne.s32.totalorder %s101, %s103
      %p107 = scmp.eq.s32.totalorder %s25, 0
      %p108 = por %p106, %p107
      %p109 = scmp.ne.s32.totalorder %s101, %s103
      %p110 = scmp.eq.s32.totalorder %s30, 1
      %p111 = por %p109, %p110
      %p112 = scmp.ne.s32.totalorder %s103, %s104
      %p113 = scmp.eq.s32.totalorder %s30, 0
      %p114 = por %p112, %p113
      %p115 = scmp.ne.s32.totalorder %s103, %s104
      %p116 = scmp.eq.s32.totalorder %s31, 1
      %p117 = por %p115, %p116
      %p119 = scmp.ne.s32.totalorder %s104, %s118
      %p120 = scmp.eq.s32.totalorder %s31, 0
      %p121 = por %p119, %p120
      %s123 = sadd.s32 %s122, 1
      %p126 = scmp.eq.s32.totalorder %s25, 1
      %p127 = scmp.ne.s32.totalorder %s122, %s124
      %p128 = scmp.eq.s32.totalorder %s25, 0
      %p129 = por %p127, %p128
      %p130 = scmp.ne.s32.totalorder %s122, %s124
      %p131 = scmp.eq.s32.totalorder %s30, 1
      %p132 = por %p130, %p131
      %p133 = scmp.ne.s32.totalorder %s124, %s125
      %p134 = scmp.eq.s32.totalorder %s30, 0
      %p135 = por %p133, %p134
      %p136 = scmp.ne.s32.totalorder %s124, %s125
      %p137 = scmp.eq.s32.totalorder %s31, 1
      %p138 = por %p136, %p137
      %p140 = scmp.ne.s32.totalorder %s125, %s139
      %p141 = scmp.eq.s32.totalorder %s31, 0
      %p142 = por %p140, %p141
      %s144 = sadd.s32 %s143, 1
      %p147 = scmp.eq.s32.totalorder %s25, 1
      %p148 = scmp.ne.s32.totalorder %s143, %s145
      %p149 = scmp.eq.s32.totalorder %s25, 0
      %p150 = por %p148, %p149
      %p151 = scmp.ne.s32.totalorder %s143, %s145
      %p152 = scmp.eq.s32.totalorder %s30, 1
      %p153 = por %p151, %p152
      %p154 = scmp.ne.s32.totalorder %s145, %s146
      %p155 = scmp.eq.s32.totalorder %s30, 0
      %p156 = por %p154, %p155
      %p157 = scmp.ne.s32.totalorder %s145, %s146
      %p158 = scmp.eq.s32.totalorder %s31, 1
      %p159 = por %p157, %p158
      %p161 = scmp.ne.s32.totalorder %s146, %s160
      %p162 = scmp.eq.s32.totalorder %s31, 0
      %p163 = por %p161, %p162
      %s165 = sadd.s32 %s164, 1
      %p168 = scmp.eq.s32.totalorder %s25, 1
      %p169 = scmp.ne.s32.totalorder %s164, %s166
      %p170 = scmp.eq.s32.totalorder %s25, 0
      %p171 = por %p169, %p170
      %p172 = scmp.ne.s32.totalorder %s164, %s166
      %p173 = scmp.eq.s32.totalorder %s30, 1
      %p174 = por %p172, %p173
      %p175 = scmp.ne.s32.totalorder %s166, %s167
      %p176 = scmp.eq.s32.totalorder %s30, 0
      %p177 = por %p175, %p176
      %p178 = scmp.ne.s32.totalorder %s166, %s167
      %p179 = scmp.eq.s32.totalorder %s31, 1
      %p180 = por %p178, %p179
      %p182 = scmp.ne.s32.totalorder %s167, %s181
      %p183 = scmp.eq.s32.totalorder %s31, 0
      %p184 = por %p182, %p183
      %s186 = sadd.s32 %s185, 1
      %p189 = scmp.eq.s32.totalorder %s25, 1
      %p190 = scmp.ne.s32.totalorder %s185, %s187
      %p191 = scmp.eq.s32.totalorder %s25, 0
      %p192 = por %p190, %p191
      %p193 = scmp.ne.s32.totalorder %s185, %s187
      %p194 = scmp.eq.s32.totalorder %s30, 1
      %p195 = por %p193, %p194
      %p196 = scmp.ne.s32.totalorder %s187, %s188
      %p197 = scmp.eq.s32.totalorder %s30, 0
      %p198 = por %p196, %p197
      %p199 = scmp.ne.s32.totalorder %s187, %s188
      %p200 = scmp.eq.s32.totalorder %s31, 1
      %p201 = por %p199, %p200
      %p203 = scmp.ne.s32.totalorder %s188, %s202
      %p204 = scmp.eq.s32.totalorder %s31, 0
      %p205 = por %p203, %p204
      %s207 = sadd.s32 %s206, 1
      %p210 = scmp.eq.s32.totalorder %s25, 1
      %p211 = scmp.ne.s32.totalorder %s206, %s208
      %p212 = scmp.eq.s32.totalorder %s25, 0
      %p213 = por %p211, %p212
      %p214 = scmp.ne.s32.totalorder %s206, %s208
      %p215 = scmp.eq.s32.totalorder %s30, 1
      %p216 = por %p214, %p215
      %p217 = scmp.ne.s32.totalorder %s208, %s209
      %p218 = scmp.eq.s32.totalorder %s30, 0
      %p219 = por %p217, %p218
      %p220 = scmp.ne.s32.totalorder %s208, %s209
      %p221 = scmp.eq.s32.totalorder %s31, 1
      %p222 = por %p220, %p221
      %p224 = scmp.ne.s32.totalorder %s209, %s223
      %p225 = scmp.eq.s32.totalorder %s31, 0
      %p226 = por %p224, %p225
      %s228 = sadd.s32 %s227, 1
      %p231 = scmp.eq.s32.totalorder %s25, 1
      %p232 = scmp.ne.s32.totalorder %s227, %s229
      %p233 = scmp.eq.s32.totalorder %s25, 0
      %p234 = por %p232, %p233
      %p235 = scmp.ne.s32.totalorder %s227, %s229
      %p236 = scmp.eq.s32.totalorder %s30, 1
      %p237 = por %p235, %p236
      %p238 = scmp.ne.s32.totalorder %s229, %s230
      %p239 = scmp.eq.s32.totalorder %s30, 0
      %p240 = por %p238, %p239
      %p241 = scmp.ne.s32.totalorder %s229, %s230
      %p242 = scmp.eq.s32.totalorder %s31, 1
      %p243 = por %p241, %p242
      %p245 = scmp.ne.s32.totalorder %s230, %s244
      %p246 = scmp.eq.s32.totalorder %s31, 0
      %p247 = por %p245, %p246
      %s249 = sadd.s32 %s248, 1
      %p252 = scmp.eq.s32.totalorder %s25, 1
      %p253 = scmp.ne.s32.totalorder %s248, %s250
      %p254 = scmp.eq.s32.totalorder %s25, 0
      %p255 = por %p253, %p254
      %p256 = scmp.ne.s32.totalorder %s248, %s250
      %p257 = scmp.eq.s32.totalorder %s30, 1
      %p258 = por %p256, %p257
      %p259 = scmp.ne.s32.totalorder %s250, %s251
      %p260 = scmp.eq.s32.totalorder %s30, 0
      %p261 = por %p259, %p260
      %p262 = scmp.ne.s32.totalorder %s250, %s251
      %p263 = scmp.eq.s32.totalorder %s31, 1
      %p264 = por %p262, %p263
      %p266 = scmp.ne.s32.totalorder %s251, %s265
      %p267 = scmp.eq.s32.totalorder %s31, 0
      %p268 = por %p266, %p267
      %s269 = ssub.s32 %s25, %s32
      %p270 = scmp.eq.s32.totalorder %s269, 0
      %s272 = sadd.s32 %s271, 1
      %s273 = scalar_select %p270, %s271, %s272
      %p276 = pneg %p270
      %p277 = scmp.eq.s32.totalorder %s25, 1
      %p278 = por %p276, %p277
      %p279 = scmp.ne.s32.totalorder %s271, %s274
      %p280 = scmp.eq.s32.totalorder %s25, 0
      %p281 = por %p279, %p280
      %p282 = scmp.ne.s32.totalorder %s271, %s274
      %p283 = scmp.eq.s32.totalorder %s30, 1
      %p284 = por %p282, %p283
      %p285 = scmp.ne.s32.totalorder %s274, %s275
      %p286 = scmp.eq.s32.totalorder %s30, 0
      %p287 = por %p285, %p286
      %p288 = scmp.ne.s32.totalorder %s274, %s275
      %p289 = scmp.eq.s32.totalorder %s31, 1
      %p290 = por %p288, %p289
      %p292 = scmp.ne.s32.totalorder %s275, %s291
      %p293 = scmp.eq.s32.totalorder %s31, 0
      %p294 = por %p292, %p293
      %p295 = scmp.le.s32.totalorder 1, %s25
      %p296 = scmp.lt.s32.totalorder %s25, 3
      %p297 = pnand %p295, %p296
      %p298 = pneg %p297
      // Predicated region
      $region9: #{tpu_custom_call.1} parent=5 // pred_check
        _
      $region10: #{tpu_custom_call.1} parent=5 // pred_check_branch
        %300 = sbr.rel (%p297) target = $region12
      $region11: #{tpu_custom_call.1} parent=5 // pred_region
        %s301 = ssub.s32 %s25, 1
        // Predicated region
        $region13: #{tpu_custom_call.1} parent=11 // pred_check
          %p302 = pneg %p72
        $region14: #{tpu_custom_call.1} parent=11 // pred_check_branch
          %304 = sbr.rel (%p302) target = $region16
        $region15: #{tpu_custom_call.1} parent=11 // pred_region
          _
        $region16: #{tpu_custom_call.1} parent=11 // pred_fallthru
          _
        // Predicated region
        $region17: #{tpu_custom_call.1} parent=11 // pred_check
          %p305 = pneg %p93
        $region18: #{tpu_custom_call.1} parent=11 // pred_check_branch
          %307 = sbr.rel (%p305) target = $region20
        $region19: #{tpu_custom_call.1} parent=11 // pred_region
          _
        $region20: #{tpu_custom_call.1} parent=11 // pred_fallthru
          _
        // Predicated region
        $region21: #{tpu_custom_call.1} parent=11 // pred_check
          %p308 = pneg %p114
        $region22: #{tpu_custom_call.1} parent=11 // pred_check_branch
          %310 = sbr.rel (%p308) target = $region24
        $region23: #{tpu_custom_call.1} parent=11 // pred_region
          _
        $region24: #{tpu_custom_call.1} parent=11 // pred_fallthru
          _
        // Predicated region
        $region25: #{tpu_custom_call.1} parent=11 // pred_check
          %p311 = pneg %p135
        $region26: #{tpu_custom_call.1} parent=11 // pred_check_branch
          %313 = sbr.rel (%p311) target = $region28
        $region27: #{tpu_custom_call.1} parent=11 // pred_region
          %s315 = ssub.s32 1024, 1024
          %316 = vsyncadd [#allocation6], %s315
          %s317 = sshll.u32 [#allocation5], 4
          %s318 = int_to_ptr.vmem [resolvable:$true] %s317
          %323 = dma.hbm_to_vmem [thread:$0]  %s4, 1024, %s318, [#allocation6], 128, 128, 8
        $region28: #{tpu_custom_call.1} parent=11 // pred_fallthru
          _
        // Predicated region
        $region29: #{tpu_custom_call.1} parent=11 // pred_check
          %p324 = pneg %p156
        $region30: #{tpu_custom_call.1} parent=11 // pred_check_branch
          %326 = sbr.rel (%p324) target = $region32
        $region31: #{tpu_custom_call.1} parent=11 // pred_region
          %s328 = ssub.s32 256, 256
          %329 = vsyncadd [#allocation6], %s328
          %s330 = sshll.u32 [#allocation7], 4
          %s331 = int_to_ptr.vmem [resolvable:$true] %s330
          %336 = dma.hbm_to_vmem [thread:$0]  %s5, 256, %s331, [#allocation6], 64, 64, 4
        $region32: #{tpu_custom_call.1} parent=11 // pred_fallthru
          _
        // Predicated region
        $region33: #{tpu_custom_call.1} parent=11 // pred_check
          %p337 = pneg %p177
        $region34: #{tpu_custom_call.1} parent=11 // pred_check_branch
          %339 = sbr.rel (%p337) target = $region36
        $region35: #{tpu_custom_call.1} parent=11 // pred_region
          _
        $region36: #{tpu_custom_call.1} parent=11 // pred_fallthru
          _
        // Predicated region
        $region37: #{tpu_custom_call.1} parent=11 // pred_check
          %p340 = pneg %p198
        $region38: #{tpu_custom_call.1} parent=11 // pred_check_branch
          %342 = sbr.rel (%p340) target = $region40
        $region39: #{tpu_custom_call.1} parent=11 // pred_region
          %s344 = ssub.s32 256, 256
          %345 = vsyncadd [#allocation9], %s344
          %s346 = sshll.u32 [#allocation8], 4
          %s347 = int_to_ptr.vmem [resolvable:$true] %s346
          %352 = dma.hbm_to_vmem [thread:$0]  %s7, 256, %s347, [#allocation9], 64, 64, 4
        $region40: #{tpu_custom_call.1} parent=11 // pred_fallthru
          _
        // Predicated region
        $region41: #{tpu_custom_call.1} parent=11 // pred_check
          %p353 = pneg %p219
        $region42: #{tpu_custom_call.1} parent=11 // pred_check_branch
          %355 = sbr.rel (%p353) target = $region44
        $region43: #{tpu_custom_call.1} parent=11 // pred_region
          _
        $region44: #{tpu_custom_call.1} parent=11 // pred_fallthru
          _
        // Predicated region
        $region45: #{tpu_custom_call.1} parent=11 // pred_check
          %p356 = pneg %p240
        $region46: #{tpu_custom_call.1} parent=11 // pred_check_branch
          %358 = sbr.rel (%p356) target = $region48
        $region47: #{tpu_custom_call.1} parent=11 // pred_region
          _
        $region48: #{tpu_custom_call.1} parent=11 // pred_fallthru
          _
        // Predicated region
        $region49: #{tpu_custom_call.1} parent=11 // pred_check
          %p359 = pneg %p261
        $region50: #{tpu_custom_call.1} parent=11 // pred_check_branch
          %361 = sbr.rel (%p359) target = $region52
        $region51: #{tpu_custom_call.1} parent=11 // pred_region
          _
        $region52: #{tpu_custom_call.1} parent=11 // pred_fallthru
          _
      $region12: #{tpu_custom_call.1} parent=5 // pred_fallthru
        _
      %p362 = scmp.lt.s32.totalorder %s25, 2
      // Predicated region
      $region53: #{tpu_custom_call.1} parent=5 // pred_check
        %p363 = pneg %p362
      $region54: #{tpu_custom_call.1} parent=5 // pred_check_branch
        %365 = sbr.rel (%p363) target = $region56
      $region55: #{tpu_custom_call.1} parent=5 // pred_region
        // Predicated region
        $region57: #{tpu_custom_call.1} parent=55 // pred_check
          %p366 = pneg %p45
        $region58: #{tpu_custom_call.1} parent=55 // pred_check_branch
          %368 = sbr.rel (%p366) target = $region60
        $region59: #{tpu_custom_call.1} parent=55 // pred_region
          %s369 = sand.u32 %s35, 1
          %s370 = scalar_lea.sflag [#allocation3], %s369
          %s371 = sand.u32 %s35, 1
          %s372 = smul.addr %s371, 64
          %s373 = scalar_lea.vmem [#allocation2], %s372
          %s374 = smul.u32 4, %s25
          %s376 = ssub.s32 1024, 1024
          %377 = vsyncadd %s370, %s376
          %s378 = smul.addr %s374, 2
          %s379 = smul.addr %s378, 128
          %s380 = scalar_lea.hbm %s0, %s379
          %s381 = sshll.u32 %s373, 4
          %s382 = int_to_ptr.vmem [resolvable:$true] %s381
          %387 = dma.hbm_to_vmem [thread:$0]  %s380, 1024, %s382, %s370, 128, 128, 8
        $region60: #{tpu_custom_call.1} parent=55 // pred_fallthru
          _
      $region56: #{tpu_custom_call.1} parent=5 // pred_fallthru
        _
      %p388 = scmp.le.s32.totalorder 1, %s25
      %p389 = scmp.lt.s32.totalorder %s25, 3
      %p390 = pnand %p388, %p389
      %p391 = pneg %p390
      // Predicated region
      $region61: #{tpu_custom_call.1} parent=5 // pred_check
        _
      $region62: #{tpu_custom_call.1} parent=5 // pred_check_branch
        %393 = sbr.rel (%p390) target = $region64
      $region63: #{tpu_custom_call.1} parent=5 // pred_region
        %s394 = ssub.s32 %s25, 1
        %s395 = sand.u32 %s38, 1
        %s396 = scalar_lea.sflag [#allocation3], %s395
        %s397 = sand.u32 %s38, 1
        %s398 = smul.addr %s397, 64
        %s399 = scalar_lea.vmem [#allocation2], %s398
        // Predicated region
        $region65: #{tpu_custom_call.1} parent=63 // pred_check
          %p400 = pneg %p51
        $region66: #{tpu_custom_call.1} parent=63 // pred_check_branch
          %402 = sbr.rel (%p400) target = $region68
        $region67: #{tpu_custom_call.1} parent=63 // pred_region
          %403 = dma.done %s396, 1024
        $region68: #{tpu_custom_call.1} parent=63 // pred_fallthru
          _
        // Predicated region
        $region69: #{tpu_custom_call.1} parent=63 // pred_check
          %p404 = pneg %p135
        $region70: #{tpu_custom_call.1} parent=63 // pred_check_branch
          %406 = sbr.rel (%p404) target = $region72
        $region71: #{tpu_custom_call.1} parent=63 // pred_region
          %407 = dma.done [#allocation6], 1024
        $region72: #{tpu_custom_call.1} parent=63 // pred_fallthru
          _
        // Predicated region
        $region73: #{tpu_custom_call.1} parent=63 // pred_check
          %p408 = pneg %p156
        $region74: #{tpu_custom_call.1} parent=63 // pred_check_branch
          %410 = sbr.rel (%p408) target = $region76
        $region75: #{tpu_custom_call.1} parent=63 // pred_region
          %411 = dma.done [#allocation6], 256
        $region76: #{tpu_custom_call.1} parent=63 // pred_fallthru
          _
        // Predicated region
        $region77: #{tpu_custom_call.1} parent=63 // pred_check
          %p412 = pneg %p198
        $region78: #{tpu_custom_call.1} parent=63 // pred_check_branch
          %414 = sbr.rel (%p412) target = $region80
        $region79: #{tpu_custom_call.1} parent=63 // pred_region
          %415 = dma.done [#allocation9], 256
        $region80: #{tpu_custom_call.1} parent=63 // pred_fallthru
          _
        %s416 = sand.u32 %s38, 1
        %s417 = scalar_lea.sflag [#allocation3], %s416
        %s418 = sand.u32 %s38, 1
        %s419 = smul.addr %s418, 64
        %s420 = scalar_lea.vmem [#allocation2], %s419
        %p421 = pneg %p51
        %p422 = pneg %p48
        %p423 = pneg %p72
        %p424 = pneg %p69
        %p425 = pneg %p93
        %p426 = pneg %p90
        %p427 = pneg %p114
        %p428 = pneg %p111
        %p429 = pneg %p135
        %p430 = pneg %p132
        %p431 = pneg %p156
        %p432 = pneg %p153
        %p433 = pneg %p177
        %p434 = pneg %p174
        %p435 = pneg %p198
        %p436 = pneg %p195
        %p437 = pneg %p219
        %p438 = pneg %p216
        %p439 = pneg %p240
        %p440 = pneg %p237
        %p441 = pneg %p261
        %p442 = pneg %p258
        %p443 = pneg %p287
        %p444 = pneg %p284
        %s445 = sand.u32 %s274, 1
        %s446 = scalar_lea.sflag [#allocation4], %s445
        %s447 = sand.u32 %s274, 1
        %s448 = smul.addr %s447, 64
        %s449 = scalar_lea.vmem [#allocation10], %s448
        %s450 = smul.u32 4, %s30
        %s451 = smul.u32 4, %s30
        %v453 = vld [vmem:[%s399] sm:$0xff]
        %v454 = vld [vmem:[%s399 + $0x8] sm:$0xff]
        %v455 = vld [vmem:[%s399 + $0x10] sm:$0xff]
        %v456 = vld [vmem:[%s399 + $0x18] sm:$0xff]
        %v457 = vld [vmem:[%s399 + $0x20] sm:$0xff]
        %v458 = vld [vmem:[%s399 + $0x28] sm:$0xff]
        %v459 = vld [vmem:[%s399 + $0x30] sm:$0xff]
        %v460 = vld [vmem:[%s399 + $0x38] sm:$0xff]
        %vm461 = vcmask 261120
        %v462 = vsel %vm461, %v453, 0.0
        %463 = vadd.xlane.f32.xlu0 %v462
        %v464 = vpop.xlane.xlu0 %463
        %v465 = vsel %vm461, %v454, 0.0
        %466 = vadd.xlane.f32.xlu0 %v465
        %v467 = vpop.xlane.xlu0 %466
        %v468 = vsel %vm461, %v455, 0.0
        %469 = vadd.xlane.f32.xlu0 %v468
        %v470 = vpop.xlane.xlu0 %469
        %v471 = vsel %vm461, %v456, 0.0
        %472 = vadd.xlane.f32.xlu0 %v471
        %v473 = vpop.xlane.xlu0 %472
        %v474 = vsel %vm461, %v457, 0.0
        %475 = vadd.xlane.f32.xlu0 %v474
        %v476 = vpop.xlane.xlu0 %475
        %v477 = vsel %vm461, %v458, 0.0
        %478 = vadd.xlane.f32.xlu0 %v477
        %v479 = vpop.xlane.xlu0 %478
        %v480 = vsel %vm461, %v459, 0.0
        %481 = vadd.xlane.f32.xlu0 %v480
        %v482 = vpop.xlane.xlu0 %481
        %v483 = vsel %vm461, %v460, 0.0
        %484 = vadd.xlane.f32.xlu0 %v483
        %v485 = vpop.xlane.xlu0 %484
        %v486 = vrcp.pop 32.0
        %v487 = vmul.f32 %v464, %v486
        %v488 = vmul.f32 %v467, %v486
        %v489 = vmul.f32 %v470, %v486
        %v490 = vmul.f32 %v473, %v486
        %v491 = vmul.f32 %v476, %v486
        %v492 = vmul.f32 %v479, %v486
        %v493 = vmul.f32 %v482, %v486
        %v494 = vmul.f32 %v485, %v486
        %v495 = vsub.f32 %v453, %v487
        %v496 = vsub.f32 %v454, %v488
        %v497 = vsub.f32 %v455, %v489
        %v498 = vsub.f32 %v456, %v490
        %v499 = vsub.f32 %v457, %v491
        %v500 = vsub.f32 %v458, %v492
        %v501 = vsub.f32 %v459, %v493
        %v502 = vsub.f32 %v460, %v494
        %v503 = vmul.f32 %v495, %v495
        %v504 = vmul.f32 %v496, %v496
        %v505 = vmul.f32 %v497, %v497
        %v506 = vmul.f32 %v498, %v498
        %v507 = vmul.f32 %v499, %v499
        %v508 = vmul.f32 %v500, %v500
        %v509 = vmul.f32 %v501, %v501
        %v510 = vmul.f32 %v502, %v502
        %v511 = vsel %vm461, %v503, 0.0
        %512 = vadd.xlane.f32.xlu0 %v511
        %v513 = vpop.xlane.xlu0 %512
        %v514 = vsel %vm461, %v504, 0.0
        %515 = vadd.xlane.f32.xlu0 %v514
        %v516 = vpop.xlane.xlu0 %515
        %v517 = vsel %vm461, %v505, 0.0
        %518 = vadd.xlane.f32.xlu0 %v517
        %v519 = vpop.xlane.xlu0 %518
        %v520 = vsel %vm461, %v506, 0.0
        %521 = vadd.xlane.f32.xlu0 %v520
        %v522 = vpop.xlane.xlu0 %521
        %v523 = vsel %vm461, %v507, 0.0
        %524 = vadd.xlane.f32.xlu0 %v523
        %v525 = vpop.xlane.xlu0 %524
        %v526 = vsel %vm461, %v508, 0.0
        %527 = vadd.xlane.f32.xlu0 %v526
        %v528 = vpop.xlane.xlu0 %527
        %v529 = vsel %vm461, %v509, 0.0
        %530 = vadd.xlane.f32.xlu0 %v529
        %v531 = vpop.xlane.xlu0 %530
        %v532 = vsel %vm461, %v510, 0.0
        %533 = vadd.xlane.f32.xlu0 %v532
        %v534 = vpop.xlane.xlu0 %533
        %v535 = vmul.f32 %v513, %v486
        %v536 = vmul.f32 %v516, %v486
        %v537 = vmul.f32 %v519, %v486
        %v538 = vmul.f32 %v522, %v486
        %v539 = vmul.f32 %v525, %v486
        %v540 = vmul.f32 %v528, %v486
        %v541 = vmul.f32 %v531, %v486
        %v542 = vmul.f32 %v534, %v486
        %v543 = vadd.f32 %v535, 1e-05
        %v544 = vadd.f32 %v536, 1e-05
        %v545 = vadd.f32 %v537, 1e-05
        %v546 = vadd.f32 %v538, 1e-05
        %v547 = vadd.f32 %v539, 1e-05
        %v548 = vadd.f32 %v540, 1e-05
        %v549 = vadd.f32 %v541, 1e-05
        %v550 = vadd.f32 %v542, 1e-05
        %v551 = vrsqrt.pop %v543
        %v552 = vrsqrt.pop %v544
        %v553 = vrsqrt.pop %v545
        %v554 = vrsqrt.pop %v546
        %v555 = vrsqrt.pop %v547
        %v556 = vrsqrt.pop %v548
        %v557 = vrsqrt.pop %v549
        %v558 = vrsqrt.pop %v550
        %v559 = vmul.f32 %v495, %v551
        %v560 = vmul.f32 %v496, %v552
        %v561 = vmul.f32 %v497, %v553
        %v562 = vmul.f32 %v498, %v554
        %v563 = vmul.f32 %v499, %v555
        %v564 = vmul.f32 %v500, %v556
        %v565 = vmul.f32 %v501, %v557
        %v566 = vmul.f32 %v502, %v558
        %v567 = vpack.c.bf16 %v560, %v559
        %v568 = vpack.c.bf16 %v562, %v561
        %v569 = vpack.c.bf16 %v564, %v563
        %v570 = vpack.c.bf16 %v566, %v565
        %v571 = vld [vmem:[%s2] sm:$0xf]
        %v572 = vld [vmem:[%s2 + $0x4] sm:$0xf]
        %v573 = vld [vmem:[%s2 + $0x8] sm:$0xf]
        %v574 = vld [vmem:[%s2 + $0xc] sm:$0xf]
        %v575 = vld [vmem:[%s3] sm:$0x1]
        %v577 = vlaneseq
        %v578 = vshrl.u32 %v577, 7
        %v579 = vsub.s32 0, %v578
        %v580 = vrot.slane %v575, %v579
        %v586 = vunpack.c.l.b16 %v571
        %v587 = vunpack.c.l.b16 %v572
        %v588 = vunpack.c.l.b16 %v573
        %v589 = vunpack.c.l.b16 %v574
        %v590 = vpack.c.b16 %v587, %v586
        %v591 = vpack.c.b16 %v589, %v588
        %v595 = vsel %vm461, %v567, 0
        %v598 = vsel %vm461, %v568, 0
        %v601 = vsel %vm461, %v569, 0
        %v604 = vsel %vm461, %v570, 0
        %606 = vmatprep.subr.bf16.mxu0 0
        %607 = vmatpush1.bf16.msra.mxu0 %v590
        %608 = vmatprep.subr.bf16.mxu0 0
        %609 = vmatpush1.bf16.msra.mxu0 %v591
        %610 = vmatprep.subr.bf16.mxu0 0
        %611 = vmatpush1.bf16.msra.mxu0 0
        %612 = vmatprep.subr.bf16.mxu0 0
        %613 = vmatpush1.bf16.msra.mxu0 0
        %614 = vmatprep.subr.bf16.mxu0 0
        %615 = vmatpush1.bf16.msra.mxu0 0
        %616 = vmatprep.subr.bf16.mxu0 0
        %617 = vmatpush1.bf16.msra.mxu0 0
        %618 = vmatprep.subr.bf16.mxu0 0
        %619 = vmatpush1.bf16.msra.mxu0 0
        %620 = vmatprep.subr.bf16.mxu0 0
        %621 = vmatpush1.bf16.msra.mxu0 0
        %622 = vmatprep.subr.bf16.mxu0 0
        %623 = vmatpush1.bf16.msra.mxu0 0
        %624 = vmatprep.subr.bf16.mxu0 0
        %625 = vmatpush1.bf16.msra.mxu0 0
        %626 = vmatprep.subr.bf16.mxu0 0
        %627 = vmatpush1.bf16.msra.mxu0 0
        %628 = vmatprep.subr.bf16.mxu0 0
        %629 = vmatpush1.bf16.msra.mxu0 0
        %630 = vmatprep.subr.bf16.mxu0 0
        %631 = vmatpush1.bf16.msra.mxu0 0
        %632 = vmatprep.subr.bf16.mxu0 0
        %633 = vmatpush1.bf16.msra.mxu0 0
        %634 = vmatprep.subr.bf16.mxu0 0
        %635 = vmatpush1.bf16.msra.mxu0 0
        %636 = vmatprep.subr.bf16.mxu0 0
        %637 = vmatpush1.bf16.msra.mxu0 0
        %638 = vmatprep.mubr.bf16.mxu0 0
        %639 = vmatmul.mubr.bf16.gmra.mrb[0].mxu0 %v595
        %v640 = vpop.f32.mrb[0].mxu0
        %v641 = vadd.f32 %v580, %v640
        %v642 = vpop.f32.mrb[0].mxu0
        %v643 = vpop.f32.mrb[0].mxu0
        %v644 = vadd.f32 %v580, %v643
        %v645 = vpop.f32.mrb[0].mxu0
        %646 = vmatprep.mubr.bf16.mxu0 0
        %647 = vmatmul.mubr.bf16.gmra.mrb[0].mxu0 %v598
        %v648 = vpop.f32.mrb[0].mxu0
        %v649 = vadd.f32 %v580, %v648
        %v650 = vpop.f32.mrb[0].mxu0
        %v651 = vpop.f32.mrb[0].mxu0
        %v652 = vadd.f32 %v580, %v651
        %v653 = vpop.f32.mrb[0].mxu0
        %654 = vmatprep.mubr.bf16.mxu0 0
        %655 = vmatmul.mubr.bf16.gmra.mrb[0].mxu0 %v601
        %v656 = vpop.f32.mrb[0].mxu0
        %v657 = vadd.f32 %v580, %v656
        %v658 = vpop.f32.mrb[0].mxu0
        %v659 = vpop.f32.mrb[0].mxu0
        %v660 = vadd.f32 %v580, %v659
        %v661 = vpop.f32.mrb[0].mxu0
        %662 = vmatprep.mubr.bf16.mxu0 0
        %663 = vmatmul.mubr.bf16.gmra.mrb[0].mxu0 %v604
        %v664 = vpop.f32.mrb[0].mxu0
        %v665 = vadd.f32 %v580, %v664
        %v666 = vpop.f32.mrb[0].mxu0
        %v667 = vpop.f32.mrb[0].mxu0
        %v668 = vadd.f32 %v580, %v667
        %v669 = vpop.f32.mrb[0].mxu0
        %670 = vdwg.mxu0
        %v671 = vld [vmem:[%s1] sm:$0xff]
        %v672 = vld [vmem:[%s1 + $0x8] sm:$0xff]
        %v673 = vld [vmem:[%s1 + $0x10] sm:$0xff]
        %v674 = vld [vmem:[%s1 + $0x18] sm:$0xff]
        %v675 = vld [vmem:[%s1 + $0x20] sm:$0xff]
        %v676 = vld [vmem:[%s1 + $0x28] sm:$0xff]
        %v677 = vld [vmem:[%s1 + $0x30] sm:$0xff]
        %v678 = vld [vmem:[%s1 + $0x38] sm:$0xff]
        %v679 = vpack.c.bf16 %v644, %v641
        %v680 = vpack.c.bf16 %v652, %v649
        %v681 = vpack.c.bf16 %v660, %v657
        %v682 = vpack.c.bf16 %v668, %v665
        %v683 = vld [vmem:[#allocation5] sm:$0xff]
        %v684 = vld [vmem:[#allocation5 + $0x8] sm:$0xff]
        %686 = vrot.lane.b32.xlu0 %v679, 96
        %v687 = vpop.permute.xlu0 %686
        %vm688 = vcmask 64512
        %v690 = vsel %vm688, %v679, 0
        %v693 = vsel %vm688, %v687, 0
        %695 = vmatprep.subr.bf16.mxu0 0
        %696 = vmatpush1.bf16.xpose.msra.mxu0 %v693
        %697 = vmatprep.subr.bf16.mxu0 0
        %698 = vmatpush1.bf16.xpose.msra.mxu0 0
        %699 = vmatprep.subr.bf16.mxu0 0
        %700 = vmatpush1.bf16.xpose.msra.mxu0 0
        %701 = vmatprep.subr.bf16.mxu0 0
        %702 = vmatpush1.bf16.xpose.msra.mxu0 0
        %703 = vmatprep.subr.bf16.mxu0 0
        %704 = vmatpush1.bf16.xpose.msra.mxu0 0
        %705 = vmatprep.subr.bf16.mxu0 0
        %706 = vmatpush1.bf16.xpose.msra.mxu0 0
        %707 = vmatprep.subr.bf16.mxu0 0
        %708 = vmatpush1.bf16.xpose.msra.mxu0 0
        %709 = vmatprep.subr.bf16.mxu0 0
        %710 = vmatpush1.bf16.xpose.msra.mxu0 0
        %711 = vmatprep.subr.bf16.mxu0 0
        %712 = vmatpush1.bf16.xpose.msra.mxu0 0
        %713 = vmatprep.subr.bf16.mxu0 0
        %714 = vmatpush1.bf16.xpose.msra.mxu0 0
        %715 = vmatprep.subr.bf16.mxu0 0
        %716 = vmatpush1.bf16.xpose.msra.mxu0 0
        %717 = vmatprep.subr.bf16.mxu0 0
        %718 = vmatpush1.bf16.xpose.msra.mxu0 0
        %719 = vmatprep.subr.bf16.mxu0 0
        %720 = vmatpush1.bf16.xpose.msra.mxu0 0
        %721 = vmatprep.subr.bf16.mxu0 0
        %722 = vmatpush1.bf16.xpose.msra.mxu0 0
        %723 = vmatprep.subr.bf16.mxu0 0
        %724 = vmatpush1.bf16.xpose.msra.mxu0 0
        %725 = vmatprep.subr.bf16.mxu0 0
        %726 = vmatpush1.bf16.xpose.msra.mxu0 0
        %727 = vmatprep.mubr.bf16.mxu0 0
        %728 = vmatmul.mubr.bf16.gmra.mrb[0].mxu0 %v690
        %v729 = vpop.f32.mrb[0].mxu0
        %v730 = vadd.f32 %v683, %v729
        %v731 = vpop.f32.mrb[0].mxu0
        %v732 = vpop.f32.mrb[0].mxu0
        %v733 = vadd.f32 %v684, %v732
        %v734 = vpop.f32.mrb[0].mxu0
        %735 = vdwg.mxu0
        %737 = vrot.lane.b32.xlu0 %v680, 96
        %v738 = vpop.permute.xlu0 %737
        %v740 = vsel %vm688, %v680, 0
        %v743 = vsel %vm688, %v738, 0
        %745 = vmatprep.subr.bf16.mxu0 0
        %746 = vmatpush1.bf16.xpose.msra.mxu0 %v743
        %747 = vmatprep.subr.bf16.mxu0 0
        %748 = vmatpush1.bf16.xpose.msra.mxu0 0
        %749 = vmatprep.subr.bf16.mxu0 0
        %750 = vmatpush1.bf16.xpose.msra.mxu0 0
        %751 = vmatprep.subr.bf16.mxu0 0
        %752 = vmatpush1.bf16.xpose.msra.mxu0 0
        %753 = vmatprep.subr.bf16.mxu0 0
        %754 = vmatpush1.bf16.xpose.msra.mxu0 0
        %755 = vmatprep.subr.bf16.mxu0 0
        %756 = vmatpush1.bf16.xpose.msra.mxu0 0
        %757 = vmatprep.subr.bf16.mxu0 0
        %758 = vmatpush1.bf16.xpose.msra.mxu0 0
        %759 = vmatprep.subr.bf16.mxu0 0
        %760 = vmatpush1.bf16.xpose.msra.mxu0 0
        %761 = vmatprep.subr.bf16.mxu0 0
        %762 = vmatpush1.bf16.xpose.msra.mxu0 0
        %763 = vmatprep.subr.bf16.mxu0 0
        %764 = vmatpush1.bf16.xpose.msra.mxu0 0
        %765 = vmatprep.subr.bf16.mxu0 0
        %766 = vmatpush1.bf16.xpose.msra.mxu0 0
        %767 = vmatprep.subr.bf16.mxu0 0
        %768 = vmatpush1.bf16.xpose.msra.mxu0 0
        %769 = vmatprep.subr.bf16.mxu0 0
        %770 = vmatpush1.bf16.xpose.msra.mxu0 0
        %771 = vmatprep.subr.bf16.mxu0 0
        %772 = vmatpush1.bf16.xpose.msra.mxu0 0
        %773 = vmatprep.subr.bf16.mxu0 0
        %774 = vmatpush1.bf16.xpose.msra.mxu0 0
        %775 = vmatprep.subr.bf16.mxu0 0
        %776 = vmatpush1.bf16.xpose.msra.mxu0 0
        %777 = vmatprep.mubr.bf16.mxu0 0
        %778 = vmatmul.mubr.bf16.gmra.mrb[0].mxu0 %v740
        %v779 = vpop.f32.mrb[0].mxu0
        %v780 = vadd.f32 %v683, %v779
        %v781 = vpop.f32.mrb[0].mxu0
        %v782 = vpop.f32.mrb[0].mxu0
        %v783 = vadd.f32 %v684, %v782
        %v784 = vpop.f32.mrb[0].mxu0
        %785 = vdwg.mxu0
        %787 = vrot.lane.b32.xlu0 %v681, 96
        %v788 = vpop.permute.xlu0 %787
        %v790 = vsel %vm688, %v681, 0
        %v793 = vsel %vm688, %v788, 0
        %795 = vmatprep.subr.bf16.mxu0 0
        %796 = vmatpush1.bf16.xpose.msra.mxu0 %v793
        %797 = vmatprep.subr.bf16.mxu0 0
        %798 = vmatpush1.bf16.xpose.msra.mxu0 0
        %799 = vmatprep.subr.bf16.mxu0 0
        %800 = vmatpush1.bf16.xpose.msra.mxu0 0
        %801 = vmatprep.subr.bf16.mxu0 0
        %802 = vmatpush1.bf16.xpose.msra.mxu0 0
        %803 = vmatprep.subr.bf16.mxu0 0
        %804 = vmatpush1.bf16.xpose.msra.mxu0 0
        %805 = vmatprep.subr.bf16.mxu0 0
        %806 = vmatpush1.bf16.xpose.msra.mxu0 0
        %807 = vmatprep.subr.bf16.mxu0 0
        %808 = vmatpush1.bf16.xpose.msra.mxu0 0
        %809 = vmatprep.subr.bf16.mxu0 0
        %810 = vmatpush1.bf16.xpose.msra.mxu0 0
        %811 = vmatprep.subr.bf16.mxu0 0
        %812 = vmatpush1.bf16.xpose.msra.mxu0 0
        %813 = vmatprep.subr.bf16.mxu0 0
        %814 = vmatpush1.bf16.xpose.msra.mxu0 0
        %815 = vmatprep.subr.bf16.mxu0 0
        %816 = vmatpush1.bf16.xpose.msra.mxu0 0
        %817 = vmatprep.subr.bf16.mxu0 0
        %818 = vmatpush1.bf16.xpose.msra.mxu0 0
        %819 = vmatprep.subr.bf16.mxu0 0
        %820 = vmatpush1.bf16.xpose.msra.mxu0 0
        %821 = vmatprep.subr.bf16.mxu0 0
        %822 = vmatpush1.bf16.xpose.msra.mxu0 0
        %823 = vmatprep.subr.bf16.mxu0 0
        %824 = vmatpush1.bf16.xpose.msra.mxu0 0
        %825 = vmatprep.subr.bf16.mxu0 0
        %826 = vmatpush1.bf16.xpose.msra.mxu0 0
        %827 = vmatprep.mubr.bf16.mxu0 0
        %828 = vmatmul.mubr.bf16.gmra.mrb[0].mxu0 %v790
        %v829 = vpop.f32.mrb[0].mxu0
        %v830 = vadd.f32 %v683, %v829
        %v831 = vpop.f32.mrb[0].mxu0
        %v832 = vpop.f32.mrb[0].mxu0
        %v833 = vadd.f32 %v684, %v832
        %v834 = vpop.f32.mrb[0].mxu0
        %835 = vdwg.mxu0
        %837 = vrot.lane.b32.xlu0 %v682, 96
        %v838 = vpop.permute.xlu0 %837
        %v840 = vsel %vm688, %v682, 0
        %v843 = vsel %vm688, %v838, 0
        %845 = vmatprep.subr.bf16.mxu0 0
        %846 = vmatpush1.bf16.xpose.msra.mxu0 %v843
        %847 = vmatprep.subr.bf16.mxu0 0
        %848 = vmatpush1.bf16.xpose.msra.mxu0 0
        %849 = vmatprep.subr.bf16.mxu0 0
        %850 = vmatpush1.bf16.xpose.msra.mxu0 0
        %851 = vmatprep.subr.bf16.mxu0 0
        %852 = vmatpush1.bf16.xpose.msra.mxu0 0
        %853 = vmatprep.subr.bf16.mxu0 0
        %854 = vmatpush1.bf16.xpose.msra.mxu0 0
        %855 = vmatprep.subr.bf16.mxu0 0
        %856 = vmatpush1.bf16.xpose.msra.mxu0 0
        %857 = vmatprep.subr.bf16.mxu0 0
        %858 = vmatpush1.bf16.xpose.msra.mxu0 0
        %859 = vmatprep.subr.bf16.mxu0 0
        %860 = vmatpush1.bf16.xpose.msra.mxu0 0
        %861 = vmatprep.subr.bf16.mxu0 0
        %862 = vmatpush1.bf16.xpose.msra.mxu0 0
        %863 = vmatprep.subr.bf16.mxu0 0
        %864 = vmatpush1.bf16.xpose.msra.mxu0 0
        %865 = vmatprep.subr.bf16.mxu0 0
        %866 = vmatpush1.bf16.xpose.msra.mxu0 0
        %867 = vmatprep.subr.bf16.mxu0 0
        %868 = vmatpush1.bf16.xpose.msra.mxu0 0
        %869 = vmatprep.subr.bf16.mxu0 0
        %870 = vmatpush1.bf16.xpose.msra.mxu0 0
        %871 = vmatprep.subr.bf16.mxu0 0
        %872 = vmatpush1.bf16.xpose.msra.mxu0 0
        %873 = vmatprep.subr.bf16.mxu0 0
        %874 = vmatpush1.bf16.xpose.msra.mxu0 0
        %875 = vmatprep.subr.bf16.mxu0 0
        %876 = vmatpush1.bf16.xpose.msra.mxu0 0
        %877 = vmatprep.mubr.bf16.mxu0 0
        %878 = vmatmul.mubr.bf16.gmra.mrb[0].mxu0 %v840
        %v879 = vpop.f32.mrb[0].mxu0
        %v880 = vadd.f32 %v683, %v879
        %v881 = vpop.f32.mrb[0].mxu0
        %v882 = vpop.f32.mrb[0].mxu0
        %v883 = vadd.f32 %v684, %v882
        %v884 = vpop.f32.mrb[0].mxu0
        %885 = vdwg.mxu0
        %v886 = vadd.f32 %v730, %v671
        %v887 = vadd.f32 %v733, %v672
        %v888 = vadd.f32 %v780, %v673
        %v889 = vadd.f32 %v783, %v674
        %v890 = vadd.f32 %v830, %v675
        %v891 = vadd.f32 %v833, %v676
        %v892 = vadd.f32 %v880, %v677
        %v893 = vadd.f32 %v883, %v678
        %vm894 = vcmask 130048
        %v895 = vsel %vm894, %v886, -inf
        %896 = vmax.xlane.f32.xlu0 %v895
        %v897 = vpop.xlane.xlu0 %896
        %v898 = vsel %vm894, %v887, -inf
        %899 = vmax.xlane.f32.xlu0 %v898
        %v900 = vpop.xlane.xlu0 %899
        %v901 = vsel %vm894, %v888, -inf
        %902 = vmax.xlane.f32.xlu0 %v901
        %v903 = vpop.xlane.xlu0 %902
        %v904 = vsel %vm894, %v889, -inf
        %905 = vmax.xlane.f32.xlu0 %v904
        %v906 = vpop.xlane.xlu0 %905
        %v907 = vsel %vm894, %v890, -inf
        %908 = vmax.xlane.f32.xlu0 %v907
        %v909 = vpop.xlane.xlu0 %908
        %v910 = vsel %vm894, %v891, -inf
        %911 = vmax.xlane.f32.xlu0 %v910
        %v912 = vpop.xlane.xlu0 %911
        %v913 = vsel %vm894, %v892, -inf
        %914 = vmax.xlane.f32.xlu0 %v913
        %v915 = vpop.xlane.xlu0 %914
        %v916 = vsel %vm894, %v893, -inf
        %917 = vmax.xlane.f32.xlu0 %v916
        %v918 = vpop.xlane.xlu0 %917
        %v919 = vsub.f32 %v886, %v897
        %v920 = vsub.f32 %v887, %v900
        %v921 = vsub.f32 %v888, %v903
        %v922 = vsub.f32 %v889, %v906
        %v923 = vsub.f32 %v890, %v909
        %v924 = vsub.f32 %v891, %v912
        %v925 = vsub.f32 %v892, %v915
        %v926 = vsub.f32 %v893, %v918
        %v927 = vmul.f32 %v919, 1.442695
        %v928 = vpow.pop %v927
        %v929 = vmul.f32 %v920, 1.442695
        %v930 = vpow.pop %v929
        %v931 = vmul.f32 %v921, 1.442695
        %v932 = vpow.pop %v931
        %v933 = vmul.f32 %v922, 1.442695
        %v934 = vpow.pop %v933
        %v935 = vmul.f32 %v923, 1.442695
        %v936 = vpow.pop %v935
        %v937 = vmul.f32 %v924, 1.442695
        %v938 = vpow.pop %v937
        %v939 = vmul.f32 %v925, 1.442695
        %v940 = vpow.pop %v939
        %v941 = vmul.f32 %v926, 1.442695
        %v942 = vpow.pop %v941
        %v943 = vsel %vm894, %v928, 0.0
        %944 = vadd.xlane.f32.xlu0 %v943
        %v945 = vpop.xlane.xlu0 %944
        %v946 = vsel %vm894, %v930, 0.0
        %947 = vadd.xlane.f32.xlu0 %v946
        %v948 = vpop.xlane.xlu0 %947
        %v949 = vsel %vm894, %v932, 0.0
        %950 = vadd.xlane.f32.xlu0 %v949
        %v951 = vpop.xlane.xlu0 %950
        %v952 = vsel %vm894, %v934, 0.0
        %953 = vadd.xlane.f32.xlu0 %v952
        %v954 = vpop.xlane.xlu0 %953
        %v955 = vsel %vm894, %v936, 0.0
        %956 = vadd.xlane.f32.xlu0 %v955
        %v957 = vpop.xlane.xlu0 %956
        %v958 = vsel %vm894, %v938, 0.0
        %959 = vadd.xlane.f32.xlu0 %v958
        %v960 = vpop.xlane.xlu0 %959
        %v961 = vsel %vm894, %v940, 0.0
        %962 = vadd.xlane.f32.xlu0 %v961
        %v963 = vpop.xlane.xlu0 %962
        %v964 = vsel %vm894, %v942, 0.0
        %965 = vadd.xlane.f32.xlu0 %v964
        %v966 = vpop.xlane.xlu0 %965
        %v967 = vrcp.pop %v945
        %v968 = vrcp.pop %v948
        %v969 = vrcp.pop %v951
        %v970 = vrcp.pop %v954
        %v971 = vrcp.pop %v957
        %v972 = vrcp.pop %v960
        %v973 = vrcp.pop %v963
        %v974 = vrcp.pop %v966
        %v975 = vmul.f32 %v928, %v967
        %v976 = vmul.f32 %v930, %v968
        %v977 = vmul.f32 %v932, %v969
        %v978 = vmul.f32 %v934, %v970
        %v979 = vmul.f32 %v936, %v971
        %v980 = vmul.f32 %v938, %v972
        %v981 = vmul.f32 %v940, %v973
        %v982 = vmul.f32 %v942, %v974
        %v983 = vpack.c.bf16 %v976, %v975
        %v984 = vpack.c.bf16 %v978, %v977
        %v985 = vpack.c.bf16 %v980, %v979
        %v986 = vpack.c.bf16 %v982, %v981
        %987 = vrot.lane.b32.xlu0 %v679, 64
        %v988 = vpop.permute.xlu0 %987
        %v991 = vsel %vm894, %v983, 0
        %993 = vmatprep.subr.bf16.mxu0 0
        %994 = vmatpush1.bf16.msra.mxu0 %v988
        %995 = vmatprep.subr.bf16.mxu0 0
        %996 = vmatpush1.bf16.msra.mxu0 0
        %997 = vmatprep.subr.bf16.mxu0 0
        %998 = vmatpush1.bf16.msra.mxu0 0
        %999 = vmatprep.subr.bf16.mxu0 0
        %1000 = vmatpush1.bf16.msra.mxu0 0
        %1001 = vmatprep.subr.bf16.mxu0 0
        %1002 = vmatpush1.bf16.msra.mxu0 0
        %1003 = vmatprep.subr.bf16.mxu0 0
        %1004 = vmatpush1.bf16.msra.mxu0 0
        %1005 = vmatprep.subr.bf16.mxu0 0
        %1006 = vmatpush1.bf16.msra.mxu0 0
        %1007 = vmatprep.subr.bf16.mxu0 0
        %1008 = vmatpush1.bf16.msra.mxu0 0
        %1009 = vmatprep.subr.bf16.mxu0 0
        %1010 = vmatpush1.bf16.msra.mxu0 0
        %1011 = vmatprep.subr.bf16.mxu0 0
        %1012 = vmatpush1.bf16.msra.mxu0 0
        %1013 = vmatprep.subr.bf16.mxu0 0
        %1014 = vmatpush1.bf16.msra.mxu0 0
        %1015 = vmatprep.subr.bf16.mxu0 0
        %1016 = vmatpush1.bf16.msra.mxu0 0
        %1017 = vmatprep.subr.bf16.mxu0 0
        %1018 = vmatpush1.bf16.msra.mxu0 0
        %1019 = vmatprep.subr.bf16.mxu0 0
        %1020 = vmatpush1.bf16.msra.mxu0 0
        %1021 = vmatprep.subr.bf16.mxu0 0
        %1022 = vmatpush1.bf16.msra.mxu0 0
        %1023 = vmatprep.subr.bf16.mxu0 0
        %1024 = vmatpush1.bf16.msra.mxu0 0
        %1025 = vmatprep.mubr.bf16.mxu0 0
        %1026 = vmatmul.mubr.bf16.gmra.mrb[0].mxu0 %v991
        %v1027 = vpop.f32.mrb[0].mxu0
        %v1028 = vadd.f32 0.0, %v1027
        %v1029 = vpop.f32.mrb[0].mxu0
        %v1030 = vpop.f32.mrb[0].mxu0
        %v1031 = vadd.f32 0.0, %v1030
        %v1032 = vpop.f32.mrb[0].mxu0
        %1033 = vdwg.mxu0
        %1034 = vrot.lane.b32.xlu0 %v680, 64
        %v1035 = vpop.permute.xlu0 %1034
        %v1038 = vsel %vm894, %v984, 0
        %1040 = vmatprep.subr.bf16.mxu0 0
        %1041 = vmatpush1.bf16.msra.mxu0 %v1035
        %1042 = vmatprep.subr.bf16.mxu0 0
        %1043 = vmatpush1.bf16.msra.mxu0 0
        %1044 = vmatprep.subr.bf16.mxu0 0
        %1045 = vmatpush1.bf16.msra.mxu0 0
        %1046 = vmatprep.subr.bf16.mxu0 0
        %1047 = vmatpush1.bf16.msra.mxu0 0
        %1048 = vmatprep.subr.bf16.mxu0 0
        %1049 = vmatpush1.bf16.msra.mxu0 0
        %1050 = vmatprep.subr.bf16.mxu0 0
        %1051 = vmatpush1.bf16.msra.mxu0 0
        %1052 = vmatprep.subr.bf16.mxu0 0
        %1053 = vmatpush1.bf16.msra.mxu0 0
        %1054 = vmatprep.subr.bf16.mxu0 0
        %1055 = vmatpush1.bf16.msra.mxu0 0
        %1056 = vmatprep.subr.bf16.mxu0 0
        %1057 = vmatpush1.bf16.msra.mxu0 0
        %1058 = vmatprep.subr.bf16.mxu0 0
        %1059 = vmatpush1.bf16.msra.mxu0 0
        %1060 = vmatprep.subr.bf16.mxu0 0
        %1061 = vmatpush1.bf16.msra.mxu0 0
        %1062 = vmatprep.subr.bf16.mxu0 0
        %1063 = vmatpush1.bf16.msra.mxu0 0
        %1064 = vmatprep.subr.bf16.mxu0 0
        %1065 = vmatpush1.bf16.msra.mxu0 0
        %1066 = vmatprep.subr.bf16.mxu0 0
        %1067 = vmatpush1.bf16.msra.mxu0 0
        %1068 = vmatprep.subr.bf16.mxu0 0
        %1069 = vmatpush1.bf16.msra.mxu0 0
        %1070 = vmatprep.subr.bf16.mxu0 0
        %1071 = vmatpush1.bf16.msra.mxu0 0
        %1072 = vmatprep.mubr.bf16.mxu0 0
        %1073 = vmatmul.mubr.bf16.gmra.mrb[0].mxu0 %v1038
        %v1074 = vpop.f32.mrb[0].mxu0
        %v1075 = vadd.f32 0.0, %v1074
        %v1076 = vpop.f32.mrb[0].mxu0
        %v1077 = vpop.f32.mrb[0].mxu0
        %v1078 = vadd.f32 0.0, %v1077
        %v1079 = vpop.f32.mrb[0].mxu0
        %1080 = vdwg.mxu0
        %1081 = vrot.lane.b32.xlu0 %v681, 64
        %v1082 = vpop.permute.xlu0 %1081
        %v1085 = vsel %vm894, %v985, 0
        %1087 = vmatprep.subr.bf16.mxu0 0
        %1088 = vmatpush1.bf16.msra.mxu0 %v1082
        %1089 = vmatprep.subr.bf16.mxu0 0
        %1090 = vmatpush1.bf16.msra.mxu0 0
        %1091 = vmatprep.subr.bf16.mxu0 0
        %1092 = vmatpush1.bf16.msra.mxu0 0
        %1093 = vmatprep.subr.bf16.mxu0 0
        %1094 = vmatpush1.bf16.msra.mxu0 0
        %1095 = vmatprep.subr.bf16.mxu0 0
        %1096 = vmatpush1.bf16.msra.mxu0 0
        %1097 = vmatprep.subr.bf16.mxu0 0
        %1098 = vmatpush1.bf16.msra.mxu0 0
        %1099 = vmatprep.subr.bf16.mxu0 0
        %1100 = vmatpush1.bf16.msra.mxu0 0
        %1101 = vmatprep.subr.bf16.mxu0 0
        %1102 = vmatpush1.bf16.msra.mxu0 0
        %1103 = vmatprep.subr.bf16.mxu0 0
        %1104 = vmatpush1.bf16.msra.mxu0 0
        %1105 = vmatprep.subr.bf16.mxu0 0
        %1106 = vmatpush1.bf16.msra.mxu0 0
        %1107 = vmatprep.subr.bf16.mxu0 0
        %1108 = vmatpush1.bf16.msra.mxu0 0
        %1109 = vmatprep.subr.bf16.mxu0 0
        %1110 = vmatpush1.bf16.msra.mxu0 0
        %1111 = vmatprep.subr.bf16.mxu0 0
        %1112 = vmatpush1.bf16.msra.mxu0 0
        %1113 = vmatprep.subr.bf16.mxu0 0
        %1114 = vmatpush1.bf16.msra.mxu0 0
        %1115 = vmatprep.subr.bf16.mxu0 0
        %1116 = vmatpush1.bf16.msra.mxu0 0
        %1117 = vmatprep.subr.bf16.mxu0 0
        %1118 = vmatpush1.bf16.msra.mxu0 0
        %1119 = vmatprep.mubr.bf16.mxu0 0
        %1120 = vmatmul.mubr.bf16.gmra.mrb[0].mxu0 %v1085
        %v1121 = vpop.f32.mrb[0].mxu0
        %v1122 = vadd.f32 0.0, %v1121
        %v1123 = vpop.f32.mrb[0].mxu0
        %v1124 = vpop.f32.mrb[0].mxu0
        %v1125 = vadd.f32 0.0, %v1124
        %v1126 = vpop.f32.mrb[0].mxu0
        %1127 = vdwg.mxu0
        %1128 = vrot.lane.b32.xlu0 %v682, 64
        %v1129 = vpop.permute.xlu0 %1128
        %v1132 = vsel %vm894, %v986, 0
        %1134 = vmatprep.subr.bf16.mxu0 0
        %1135 = vmatpush1.bf16.msra.mxu0 %v1129
        %1136 = vmatprep.subr.bf16.mxu0 0
        %1137 = vmatpush1.bf16.msra.mxu0 0
        %1138 = vmatprep.subr.bf16.mxu0 0
        %1139 = vmatpush1.bf16.msra.mxu0 0
        %1140 = vmatprep.subr.bf16.mxu0 0
        %1141 = vmatpush1.bf16.msra.mxu0 0
        %1142 = vmatprep.subr.bf16.mxu0 0
        %1143 = vmatpush1.bf16.msra.mxu0 0
        %1144 = vmatprep.subr.bf16.mxu0 0
        %1145 = vmatpush1.bf16.msra.mxu0 0
        %1146 = vmatprep.subr.bf16.mxu0 0
        %1147 = vmatpush1.bf16.msra.mxu0 0
        %1148 = vmatprep.subr.bf16.mxu0 0
        %1149 = vmatpush1.bf16.msra.mxu0 0
        %1150 = vmatprep.subr.bf16.mxu0 0
        %1151 = vmatpush1.bf16.msra.mxu0 0
        %1152 = vmatprep.subr.bf16.mxu0 0
        %1153 = vmatpush1.bf16.msra.mxu0 0
        %1154 = vmatprep.subr.bf16.mxu0 0
        %1155 = vmatpush1.bf16.msra.mxu0 0
        %1156 = vmatprep.subr.bf16.mxu0 0
        %1157 = vmatpush1.bf16.msra.mxu0 0
        %1158 = vmatprep.subr.bf16.mxu0 0
        %1159 = vmatpush1.bf16.msra.mxu0 0
        %1160 = vmatprep.subr.bf16.mxu0 0
        %1161 = vmatpush1.bf16.msra.mxu0 0
        %1162 = vmatprep.subr.bf16.mxu0 0
        %1163 = vmatpush1.bf16.msra.mxu0 0
        %1164 = vmatprep.subr.bf16.mxu0 0
        %1165 = vmatpush1.bf16.msra.mxu0 0
        %1166 = vmatprep.mubr.bf16.mxu0 0
        %1167 = vmatmul.mubr.bf16.gmra.mrb[0].mxu0 %v1132
        %v1168 = vpop.f32.mrb[0].mxu0
        %v1169 = vadd.f32 0.0, %v1168
        %v1170 = vpop.f32.mrb[0].mxu0
        %v1171 = vpop.f32.mrb[0].mxu0
        %v1172 = vadd.f32 0.0, %v1171
        %v1173 = vpop.f32.mrb[0].mxu0
        %1174 = vdwg.mxu0
        %v1175 = vpack.c.bf16 %v1031, %v1028
        %v1176 = vpack.c.bf16 %v1078, %v1075
        %v1177 = vpack.c.bf16 %v1125, %v1122
        %v1178 = vpack.c.bf16 %v1172, %v1169
        %v1179 = vld [vmem:[#allocation7] sm:$0xf]
        %s1180 = scalar_lea.vmem [#allocation5], 16
        %v1181 = vld [vmem:[%s1180] sm:$0xff]
        %v1182 = vld [vmem:[%s1180 + $0x8] sm:$0xff]
        %1183 = vrot.lane.b32.xlu0 %v679, 120
        %v1184 = vpop.permute.xlu0 %1183
        %1185 = vrot.lane.b32.xlu0 %v679, 88
        %v1186 = vpop.permute.xlu0 %1185
        %v1188 = vsel %vm688, %v1184, 0
        %v1191 = vsel %vm688, %v1186, 0
        %1193 = vmatprep.subr.bf16.mxu0 0
        %1194 = vmatpush1.bf16.xpose.msra.mxu0 %v1191
        %1195 = vmatprep.subr.bf16.mxu0 0
        %1196 = vmatpush1.bf16.xpose.msra.mxu0 0
        %1197 = vmatprep.subr.bf16.mxu0 0
        %1198 = vmatpush1.bf16.xpose.msra.mxu0 0
        %1199 = vmatprep.subr.bf16.mxu0 0
        %1200 = vmatpush1.bf16.xpose.msra.mxu0 0
        %1201 = vmatprep.subr.bf16.mxu0 0
        %1202 = vmatpush1.bf16.xpose.msra.mxu0 0
        %1203 = vmatprep.subr.bf16.mxu0 0
        %1204 = vmatpush1.bf16.xpose.msra.mxu0 0
        %1205 = vmatprep.subr.bf16.mxu0 0
        %1206 = vmatpush1.bf16.xpose.msra.mxu0 0
        %1207 = vmatprep.subr.bf16.mxu0 0
        %1208 = vmatpush1.bf16.xpose.msra.mxu0 0
        %1209 = vmatprep.subr.bf16.mxu0 0
        %1210 = vmatpush1.bf16.xpose.msra.mxu0 0
        %1211 = vmatprep.subr.bf16.mxu0 0
        %1212 = vmatpush1.bf16.xpose.msra.mxu0 0
        %1213 = vmatprep.subr.bf16.mxu0 0
        %1214 = vmatpush1.bf16.xpose.msra.mxu0 0
        %1215 = vmatprep.subr.bf16.mxu0 0
        %1216 = vmatpush1.bf16.xpose.msra.mxu0 0
        %1217 = vmatprep.subr.bf16.mxu0 0
        %1218 = vmatpush1.bf16.xpose.msra.mxu0 0
        %1219 = vmatprep.subr.bf16.mxu0 0
        %1220 = vmatpush1.bf16.xpose.msra.mxu0 0
        %1221 = vmatprep.subr.bf16.mxu0 0
        %1222 = vmatpush1.bf16.xpose.msra.mxu0 0
        %1223 = vmatprep.subr.bf16.mxu0 0
        %1224 = vmatpush1.bf16.xpose.msra.mxu0 0
        %1225 = vmatprep.mubr.bf16.mxu0 0
        %1226 = vmatmul.mubr.bf16.gmra.mrb[0].mxu0 %v1188
        %v1227 = vpop.f32.mrb[0].mxu0
        %v1228 = vadd.f32 %v1181, %v1227
        %v1229 = vpop.f32.mrb[0].mxu0
        %v1230 = vpop.f32.mrb[0].mxu0
        %v1231 = vadd.f32 %v1182, %v1230
        %v1232 = vpop.f32.mrb[0].mxu0
        %1233 = vdwg.mxu0
        %1234 = vrot.lane.b32.xlu0 %v680, 120
        %v1235 = vpop.permute.xlu0 %1234
        %1236 = vrot.lane.b32.xlu0 %v680, 88
        %v1237 = vpop.permute.xlu0 %1236
        %v1239 = vsel %vm688, %v1235, 0
        %v1242 = vsel %vm688, %v1237, 0
        %1244 = vmatprep.subr.bf16.mxu0 0
        %1245 = vmatpush1.bf16.xpose.msra.mxu0 %v1242
        %1246 = vmatprep.subr.bf16.mxu0 0
        %1247 = vmatpush1.bf16.xpose.msra.mxu0 0
        %1248 = vmatprep.subr.bf16.mxu0 0
        %1249 = vmatpush1.bf16.xpose.msra.mxu0 0
        %1250 = vmatprep.subr.bf16.mxu0 0
        %1251 = vmatpush1.bf16.xpose.msra.mxu0 0
        %1252 = vmatprep.subr.bf16.mxu0 0
        %1253 = vmatpush1.bf16.xpose.msra.mxu0 0
        %1254 = vmatprep.subr.bf16.mxu0 0
        %1255 = vmatpush1.bf16.xpose.msra.mxu0 0
        %1256 = vmatprep.subr.bf16.mxu0 0
        %1257 = vmatpush1.bf16.xpose.msra.mxu0 0
        %1258 = vmatprep.subr.bf16.mxu0 0
        %1259 = vmatpush1.bf16.xpose.msra.mxu0 0
        %1260 = vmatprep.subr.bf16.mxu0 0
        %1261 = vmatpush1.bf16.xpose.msra.mxu0 0
        %1262 = vmatprep.subr.bf16.mxu0 0
        %1263 = vmatpush1.bf16.xpose.msra.mxu0 0
        %1264 = vmatprep.subr.bf16.mxu0 0
        %1265 = vmatpush1.bf16.xpose.msra.mxu0 0
        %1266 = vmatprep.subr.bf16.mxu0 0
        %1267 = vmatpush1.bf16.xpose.msra.mxu0 0
        %1268 = vmatprep.subr.bf16.mxu0 0
        %1269 = vmatpush1.bf16.xpose.msra.mxu0 0
        %1270 = vmatprep.subr.bf16.mxu0 0
        %1271 = vmatpush1.bf16.xpose.msra.mxu0 0
        %1272 = vmatprep.subr.bf16.mxu0 0
        %1273 = vmatpush1.bf16.xpose.msra.mxu0 0
        %1274 = vmatprep.subr.bf16.mxu0 0
        %1275 = vmatpush1.bf16.xpose.msra.mxu0 0
        %1276 = vmatprep.mubr.bf16.mxu0 0
        %1277 = vmatmul.mubr.bf16.gmra.mrb[0].mxu0 %v1239
        %v1278 = vpop.f32.mrb[0].mxu0
        %v1279 = vadd.f32 %v1181, %v1278
        %v1280 = vpop.f32.mrb[0].mxu0
        %v1281 = vpop.f32.mrb[0].mxu0
        %v1282 = vadd.f32 %v1182, %v1281
        %v1283 = vpop.f32.mrb[0].mxu0
        %1284 = vdwg.mxu0
        %1285 = vrot.lane.b32.xlu0 %v681, 120
        %v1286 = vpop.permute.xlu0 %1285
        %1287 = vrot.lane.b32.xlu0 %v681, 88
        %v1288 = vpop.permute.xlu0 %1287
        %v1290 = vsel %vm688, %v1286, 0
        %v1293 = vsel %vm688, %v1288, 0
        %1295 = vmatprep.subr.bf16.mxu0 0
        %1296 = vmatpush1.bf16.xpose.msra.mxu0 %v1293
        %1297 = vmatprep.subr.bf16.mxu0 0
        %1298 = vmatpush1.bf16.xpose.msra.mxu0 0
        %1299 = vmatprep.subr.bf16.mxu0 0
        %1300 = vmatpush1.bf16.xpose.msra.mxu0 0
        %1301 = vmatprep.subr.bf16.mxu0 0
        %1302 = vmatpush1.bf16.xpose.msra.mxu0 0
        %1303 = vmatprep.subr.bf16.mxu0 0
        %1304 = vmatpush1.bf16.xpose.msra.mxu0 0
        %1305 = vmatprep.subr.bf16.mxu0 0
        %1306 = vmatpush1.bf16.xpose.msra.mxu0 0
        %1307 = vmatprep.subr.bf16.mxu0 0
        %1308 = vmatpush1.bf16.xpose.msra.mxu0 0
        %1309 = vmatprep.subr.bf16.mxu0 0
        %1310 = vmatpush1.bf16.xpose.msra.mxu0 0
        %1311 = vmatprep.subr.bf16.mxu0 0
        %1312 = vmatpush1.bf16.xpose.msra.mxu0 0
        %1313 = vmatprep.subr.bf16.mxu0 0
        %1314 = vmatpush1.bf16.xpose.msra.mxu0 0
        %1315 = vmatprep.subr.bf16.mxu0 0
        %1316 = vmatpush1.bf16.xpose.msra.mxu0 0
        %1317 = vmatprep.subr.bf16.mxu0 0
        %1318 = vmatpush1.bf16.xpose.msra.mxu0 0
        %1319 = vmatprep.subr.bf16.mxu0 0
        %1320 = vmatpush1.bf16.xpose.msra.mxu0 0
        %1321 = vmatprep.subr.bf16.mxu0 0
        %1322 = vmatpush1.bf16.xpose.msra.mxu0 0
        %1323 = vmatprep.subr.bf16.mxu0 0
        %1324 = vmatpush1.bf16.xpose.msra.mxu0 0
        %1325 = vmatprep.subr.bf16.mxu0 0
        %1326 = vmatpush1.bf16.xpose.msra.mxu0 0
        %1327 = vmatprep.mubr.bf16.mxu0 0
        %1328 = vmatmul.mubr.bf16.gmra.mrb[0].mxu0 %v1290
        %v1329 = vpop.f32.mrb[0].mxu0
        %v1330 = vadd.f32 %v1181, %v1329
        %v1331 = vpop.f32.mrb[0].mxu0
        %v1332 = vpop.f32.mrb[0].mxu0
        %v1333 = vadd.f32 %v1182, %v1332
        %v1334 = vpop.f32.mrb[0].mxu0
        %1335 = vdwg.mxu0
        %1336 = vrot.lane.b32.xlu0 %v682, 120
        %v1337 = vpop.permute.xlu0 %1336
        %1338 = vrot.lane.b32.xlu0 %v682, 88
        %v1339 = vpop.permute.xlu0 %1338
        %v1341 = vsel %vm688, %v1337, 0
        %v1344 = vsel %vm688, %v1339, 0
        %1346 = vmatprep.subr.bf16.mxu0 0
        %1347 = vmatpush1.bf16.xpose.msra.mxu0 %v1344
        %1348 = vmatprep.subr.bf16.mxu0 0
        %1349 = vmatpush1.bf16.xpose.msra.mxu0 0
        %1350 = vmatprep.subr.bf16.mxu0 0
        %1351 = vmatpush1.bf16.xpose.msra.mxu0 0
        %1352 = vmatprep.subr.bf16.mxu0 0
        %1353 = vmatpush1.bf16.xpose.msra.mxu0 0
        %1354 = vmatprep.subr.bf16.mxu0 0
        %1355 = vmatpush1.bf16.xpose.msra.mxu0 0
        %1356 = vmatprep.subr.bf16.mxu0 0
        %1357 = vmatpush1.bf16.xpose.msra.mxu0 0
        %1358 = vmatprep.subr.bf16.mxu0 0
        %1359 = vmatpush1.bf16.xpose.msra.mxu0 0
        %1360 = vmatprep.subr.bf16.mxu0 0
        %1361 = vmatpush1.bf16.xpose.msra.mxu0 0
        %1362 = vmatprep.subr.bf16.mxu0 0
        %1363 = vmatpush1.bf16.xpose.msra.mxu0 0
        %1364 = vmatprep.subr.bf16.mxu0 0
        %1365 = vmatpush1.bf16.xpose.msra.mxu0 0
        %1366 = vmatprep.subr.bf16.mxu0 0
        %1367 = vmatpush1.bf16.xpose.msra.mxu0 0
        %1368 = vmatprep.subr.bf16.mxu0 0
        %1369 = vmatpush1.bf16.xpose.msra.mxu0 0
        %1370 = vmatprep.subr.bf16.mxu0 0
        %1371 = vmatpush1.bf16.xpose.msra.mxu0 0
        %1372 = vmatprep.subr.bf16.mxu0 0
        %1373 = vmatpush1.bf16.xpose.msra.mxu0 0
        %1374 = vmatprep.subr.bf16.mxu0 0
        %1375 = vmatpush1.bf16.xpose.msra.mxu0 0
        %1376 = vmatprep.subr.bf16.mxu0 0
        %1377 = vmatpush1.bf16.xpose.msra.mxu0 0
        %1378 = vmatprep.mubr.bf16.mxu0 0
        %1379 = vmatmul.mubr.bf16.gmra.mrb[0].mxu0 %v1341
        %v1380 = vpop.f32.mrb[0].mxu0
        %v1381 = vadd.f32 %v1181, %v1380
        %v1382 = vpop.f32.mrb[0].mxu0
        %v1383 = vpop.f32.mrb[0].mxu0
        %v1384 = vadd.f32 %v1182, %v1383
        %v1385 = vpop.f32.mrb[0].mxu0
        %1386 = vdwg.mxu0
        %v1387 = vadd.f32 %v1228, %v671
        %v1388 = vadd.f32 %v1231, %v672
        %v1389 = vadd.f32 %v1279, %v673
        %v1390 = vadd.f32 %v1282, %v674
        %v1391 = vadd.f32 %v1330, %v675
        %v1392 = vadd.f32 %v1333, %v676
        %v1393 = vadd.f32 %v1381, %v677
        %v1394 = vadd.f32 %v1384, %v678
        %v1395 = vsel %vm894, %v1387, -inf
        %1396 = vmax.xlane.f32.xlu0 %v1395
        %v1397 = vpop.xlane.xlu0 %1396
        %v1398 = vsel %vm894, %v1388, -inf
        %1399 = vmax.xlane.f32.xlu0 %v1398
        %v1400 = vpop.xlane.xlu0 %1399
        %v1401 = vsel %vm894, %v1389, -inf
        %1402 = vmax.xlane.f32.xlu0 %v1401
        %v1403 = vpop.xlane.xlu0 %1402
        %v1404 = vsel %vm894, %v1390, -inf
        %1405 = vmax.xlane.f32.xlu0 %v1404
        %v1406 = vpop.xlane.xlu0 %1405
        %v1407 = vsel %vm894, %v1391, -inf
        %1408 = vmax.xlane.f32.xlu0 %v1407
        %v1409 = vpop.xlane.xlu0 %1408
        %v1410 = vsel %vm894, %v1392, -inf
        %1411 = vmax.xlane.f32.xlu0 %v1410
        %v1412 = vpop.xlane.xlu0 %1411
        %v1413 = vsel %vm894, %v1393, -inf
        %1414 = vmax.xlane.f32.xlu0 %v1413
        %v1415 = vpop.xlane.xlu0 %1414
        %v1416 = vsel %vm894, %v1394, -inf
        %1417 = vmax.xlane.f32.xlu0 %v1416
        %v1418 = vpop.xlane.xlu0 %1417
        %v1419 = vsub.f32 %v1387, %v1397
        %v1420 = vsub.f32 %v1388, %v1400
        %v1421 = vsub.f32 %v1389, %v1403
        %v1422 = vsub.f32 %v1390, %v1406
        %v1423 = vsub.f32 %v1391, %v1409
        %v1424 = vsub.f32 %v1392, %v1412
        %v1425 = vsub.f32 %v1393, %v1415
        %v1426 = vsub.f32 %v1394, %v1418
        %v1427 = vmul.f32 %v1419, 1.442695
        %v1428 = vpow.pop %v1427
        %v1429 = vmul.f32 %v1420, 1.442695
        %v1430 = vpow.pop %v1429
        %v1431 = vmul.f32 %v1421, 1.442695
        %v1432 = vpow.pop %v1431
        %v1433 = vmul.f32 %v1422, 1.442695
        %v1434 = vpow.pop %v1433
        %v1435 = vmul.f32 %v1423, 1.442695
        %v1436 = vpow.pop %v1435
        %v1437 = vmul.f32 %v1424, 1.442695
        %v1438 = vpow.pop %v1437
        %v1439 = vmul.f32 %v1425, 1.442695
        %v1440 = vpow.pop %v1439
        %v1441 = vmul.f32 %v1426, 1.442695
        %v1442 = vpow.pop %v1441
        %v1443 = vsel %vm894, %v1428, 0.0
        %1444 = vadd.xlane.f32.xlu0 %v1443
        %v1445 = vpop.xlane.xlu0 %1444
        %v1446 = vsel %vm894, %v1430, 0.0
        %1447 = vadd.xlane.f32.xlu0 %v1446
        %v1448 = vpop.xlane.xlu0 %1447
        %v1449 = vsel %vm894, %v1432, 0.0
        %1450 = vadd.xlane.f32.xlu0 %v1449
        %v1451 = vpop.xlane.xlu0 %1450
        %v1452 = vsel %vm894, %v1434, 0.0
        %1453 = vadd.xlane.f32.xlu0 %v1452
        %v1454 = vpop.xlane.xlu0 %1453
        %v1455 = vsel %vm894, %v1436, 0.0
        %1456 = vadd.xlane.f32.xlu0 %v1455
        %v1457 = vpop.xlane.xlu0 %1456
        %v1458 = vsel %vm894, %v1438, 0.0
        %1459 = vadd.xlane.f32.xlu0 %v1458
        %v1460 = vpop.xlane.xlu0 %1459
        %v1461 = vsel %vm894, %v1440, 0.0
        %1462 = vadd.xlane.f32.xlu0 %v1461
        %v1463 = vpop.xlane.xlu0 %1462
        %v1464 = vsel %vm894, %v1442, 0.0
        %1465 = vadd.xlane.f32.xlu0 %v1464
        %v1466 = vpop.xlane.xlu0 %1465
        %v1467 = vrcp.pop %v1445
        %v1468 = vrcp.pop %v1448
        %v1469 = vrcp.pop %v1451
        %v1470 = vrcp.pop %v1454
        %v1471 = vrcp.pop %v1457
        %v1472 = vrcp.pop %v1460
        %v1473 = vrcp.pop %v1463
        %v1474 = vrcp.pop %v1466
        %v1475 = vmul.f32 %v1428, %v1467
        %v1476 = vmul.f32 %v1430, %v1468
        %v1477 = vmul.f32 %v1432, %v1469
        %v1478 = vmul.f32 %v1434, %v1470
        %v1479 = vmul.f32 %v1436, %v1471
        %v1480 = vmul.f32 %v1438, %v1472
        %v1481 = vmul.f32 %v1440, %v1473
        %v1482 = vmul.f32 %v1442, %v1474
        %v1483 = vpack.c.bf16 %v1476, %v1475
        %v1484 = vpack.c.bf16 %v1478, %v1477
        %v1485 = vpack.c.bf16 %v1480, %v1479
        %v1486 = vpack.c.bf16 %v1482, %v1481
        %1487 = vrot.lane.b32.xlu0 %v679, 56
        %v1488 = vpop.permute.xlu0 %1487
        %v1491 = vsel %vm894, %v1483, 0
        %1493 = vmatprep.subr.bf16.mxu0 0
        %1494 = vmatpush1.bf16.msra.mxu0 %v1488
        %1495 = vmatprep.subr.bf16.mxu0 0
        %1496 = vmatpush1.bf16.msra.mxu0 0
        %1497 = vmatprep.subr.bf16.mxu0 0
        %1498 = vmatpush1.bf16.msra.mxu0 0
        %1499 = vmatprep.subr.bf16.mxu0 0
        %1500 = vmatpush1.bf16.msra.mxu0 0
        %1501 = vmatprep.subr.bf16.mxu0 0
        %1502 = vmatpush1.bf16.msra.mxu0 0
        %1503 = vmatprep.subr.bf16.mxu0 0
        %1504 = vmatpush1.bf16.msra.mxu0 0
        %1505 = vmatprep.subr.bf16.mxu0 0
        %1506 = vmatpush1.bf16.msra.mxu0 0
        %1507 = vmatprep.subr.bf16.mxu0 0
        %1508 = vmatpush1.bf16.msra.mxu0 0
        %1509 = vmatprep.subr.bf16.mxu0 0
        %1510 = vmatpush1.bf16.msra.mxu0 0
        %1511 = vmatprep.subr.bf16.mxu0 0
        %1512 = vmatpush1.bf16.msra.mxu0 0
        %1513 = vmatprep.subr.bf16.mxu0 0
        %1514 = vmatpush1.bf16.msra.mxu0 0
        %1515 = vmatprep.subr.bf16.mxu0 0
        %1516 = vmatpush1.bf16.msra.mxu0 0
        %1517 = vmatprep.subr.bf16.mxu0 0
        %1518 = vmatpush1.bf16.msra.mxu0 0
        %1519 = vmatprep.subr.bf16.mxu0 0
        %1520 = vmatpush1.bf16.msra.mxu0 0
        %1521 = vmatprep.subr.bf16.mxu0 0
        %1522 = vmatpush1.bf16.msra.mxu0 0
        %1523 = vmatprep.subr.bf16.mxu0 0
        %1524 = vmatpush1.bf16.msra.mxu0 0
        %1525 = vmatprep.mubr.bf16.mxu0 0
        %1526 = vmatmul.mubr.bf16.gmra.mrb[0].mxu0 %v1491
        %v1527 = vpop.f32.mrb[0].mxu0
        %v1528 = vadd.f32 0.0, %v1527
        %v1529 = vpop.f32.mrb[0].mxu0
        %v1530 = vpop.f32.mrb[0].mxu0
        %v1531 = vadd.f32 0.0, %v1530
        %v1532 = vpop.f32.mrb[0].mxu0
        %1533 = vdwg.mxu0
        %1534 = vrot.lane.b32.xlu0 %v680, 56
        %v1535 = vpop.permute.xlu0 %1534
        %v1538 = vsel %vm894, %v1484, 0
        %1540 = vmatprep.subr.bf16.mxu0 0
        %1541 = vmatpush1.bf16.msra.mxu0 %v1535
        %1542 = vmatprep.subr.bf16.mxu0 0
        %1543 = vmatpush1.bf16.msra.mxu0 0
        %1544 = vmatprep.subr.bf16.mxu0 0
        %1545 = vmatpush1.bf16.msra.mxu0 0
        %1546 = vmatprep.subr.bf16.mxu0 0
        %1547 = vmatpush1.bf16.msra.mxu0 0
        %1548 = vmatprep.subr.bf16.mxu0 0
        %1549 = vmatpush1.bf16.msra.mxu0 0
        %1550 = vmatprep.subr.bf16.mxu0 0
        %1551 = vmatpush1.bf16.msra.mxu0 0
        %1552 = vmatprep.subr.bf16.mxu0 0
        %1553 = vmatpush1.bf16.msra.mxu0 0
        %1554 = vmatprep.subr.bf16.mxu0 0
        %1555 = vmatpush1.bf16.msra.mxu0 0
        %1556 = vmatprep.subr.bf16.mxu0 0
        %1557 = vmatpush1.bf16.msra.mxu0 0
        %1558 = vmatprep.subr.bf16.mxu0 0
        %1559 = vmatpush1.bf16.msra.mxu0 0
        %1560 = vmatprep.subr.bf16.mxu0 0
        %1561 = vmatpush1.bf16.msra.mxu0 0
        %1562 = vmatprep.subr.bf16.mxu0 0
        %1563 = vmatpush1.bf16.msra.mxu0 0
        %1564 = vmatprep.subr.bf16.mxu0 0
        %1565 = vmatpush1.bf16.msra.mxu0 0
        %1566 = vmatprep.subr.bf16.mxu0 0
        %1567 = vmatpush1.bf16.msra.mxu0 0
        %1568 = vmatprep.subr.bf16.mxu0 0
        %1569 = vmatpush1.bf16.msra.mxu0 0
        %1570 = vmatprep.subr.bf16.mxu0 0
        %1571 = vmatpush1.bf16.msra.mxu0 0
        %1572 = vmatprep.mubr.bf16.mxu0 0
        %1573 = vmatmul.mubr.bf16.gmra.mrb[0].mxu0 %v1538
        %v1574 = vpop.f32.mrb[0].mxu0
        %v1575 = vadd.f32 0.0, %v1574
        %v1576 = vpop.f32.mrb[0].mxu0
        %v1577 = vpop.f32.mrb[0].mxu0
        %v1578 = vadd.f32 0.0, %v1577
        %v1579 = vpop.f32.mrb[0].mxu0
        %1580 = vdwg.mxu0
        %1581 = vrot.lane.b32.xlu0 %v681, 56
        %v1582 = vpop.permute.xlu0 %1581
        %v1585 = vsel %vm894, %v1485, 0
        %1587 = vmatprep.subr.bf16.mxu0 0
        %1588 = vmatpush1.bf16.msra.mxu0 %v1582
        %1589 = vmatprep.subr.bf16.mxu0 0
        %1590 = vmatpush1.bf16.msra.mxu0 0
        %1591 = vmatprep.subr.bf16.mxu0 0
        %1592 = vmatpush1.bf16.msra.mxu0 0
        %1593 = vmatprep.subr.bf16.mxu0 0
        %1594 = vmatpush1.bf16.msra.mxu0 0
        %1595 = vmatprep.subr.bf16.mxu0 0
        %1596 = vmatpush1.bf16.msra.mxu0 0
        %1597 = vmatprep.subr.bf16.mxu0 0
        %1598 = vmatpush1.bf16.msra.mxu0 0
        %1599 = vmatprep.subr.bf16.mxu0 0
        %1600 = vmatpush1.bf16.msra.mxu0 0
        %1601 = vmatprep.subr.bf16.mxu0 0
        %1602 = vmatpush1.bf16.msra.mxu0 0
        %1603 = vmatprep.subr.bf16.mxu0 0
        %1604 = vmatpush1.bf16.msra.mxu0 0
        %1605 = vmatprep.subr.bf16.mxu0 0
        %1606 = vmatpush1.bf16.msra.mxu0 0
        %1607 = vmatprep.subr.bf16.mxu0 0
        %1608 = vmatpush1.bf16.msra.mxu0 0
        %1609 = vmatprep.subr.bf16.mxu0 0
        %1610 = vmatpush1.bf16.msra.mxu0 0
        %1611 = vmatprep.subr.bf16.mxu0 0
        %1612 = vmatpush1.bf16.msra.mxu0 0
        %1613 = vmatprep.subr.bf16.mxu0 0
        %1614 = vmatpush1.bf16.msra.mxu0 0
        %1615 = vmatprep.subr.bf16.mxu0 0
        %1616 = vmatpush1.bf16.msra.mxu0 0
        %1617 = vmatprep.subr.bf16.mxu0 0
        %1618 = vmatpush1.bf16.msra.mxu0 0
        %1619 = vmatprep.mubr.bf16.mxu0 0
        %1620 = vmatmul.mubr.bf16.gmra.mrb[0].mxu0 %v1585
        %v1621 = vpop.f32.mrb[0].mxu0
        %v1622 = vadd.f32 0.0, %v1621
        %v1623 = vpop.f32.mrb[0].mxu0
        %v1624 = vpop.f32.mrb[0].mxu0
        %v1625 = vadd.f32 0.0, %v1624
        %v1626 = vpop.f32.mrb[0].mxu0
        %1627 = vdwg.mxu0
        %1628 = vrot.lane.b32.xlu0 %v682, 56
        %v1629 = vpop.permute.xlu0 %1628
        %v1632 = vsel %vm894, %v1486, 0
        %1634 = vmatprep.subr.bf16.mxu0 0
        %1635 = vmatpush1.bf16.msra.mxu0 %v1629
        %1636 = vmatprep.subr.bf16.mxu0 0
        %1637 = vmatpush1.bf16.msra.mxu0 0
        %1638 = vmatprep.subr.bf16.mxu0 0
        %1639 = vmatpush1.bf16.msra.mxu0 0
        %1640 = vmatprep.subr.bf16.mxu0 0
        %1641 = vmatpush1.bf16.msra.mxu0 0
        %1642 = vmatprep.subr.bf16.mxu0 0
        %1643 = vmatpush1.bf16.msra.mxu0 0
        %1644 = vmatprep.subr.bf16.mxu0 0
        %1645 = vmatpush1.bf16.msra.mxu0 0
        %1646 = vmatprep.subr.bf16.mxu0 0
        %1647 = vmatpush1.bf16.msra.mxu0 0
        %1648 = vmatprep.subr.bf16.mxu0 0
        %1649 = vmatpush1.bf16.msra.mxu0 0
        %1650 = vmatprep.subr.bf16.mxu0 0
        %1651 = vmatpush1.bf16.msra.mxu0 0
        %1652 = vmatprep.subr.bf16.mxu0 0
        %1653 = vmatpush1.bf16.msra.mxu0 0
        %1654 = vmatprep.subr.bf16.mxu0 0
        %1655 = vmatpush1.bf16.msra.mxu0 0
        %1656 = vmatprep.subr.bf16.mxu0 0
        %1657 = vmatpush1.bf16.msra.mxu0 0
        %1658 = vmatprep.subr.bf16.mxu0 0
        %1659 = vmatpush1.bf16.msra.mxu0 0
        %1660 = vmatprep.subr.bf16.mxu0 0
        %1661 = vmatpush1.bf16.msra.mxu0 0
        %1662 = vmatprep.subr.bf16.mxu0 0
        %1663 = vmatpush1.bf16.msra.mxu0 0
        %1664 = vmatprep.subr.bf16.mxu0 0
        %1665 = vmatpush1.bf16.msra.mxu0 0
        %1666 = vmatprep.mubr.bf16.mxu0 0
        %1667 = vmatmul.mubr.bf16.gmra.mrb[0].mxu0 %v1632
        %v1668 = vpop.f32.mrb[0].mxu0
        %v1669 = vadd.f32 0.0, %v1668
        %v1670 = vpop.f32.mrb[0].mxu0
        %v1671 = vpop.f32.mrb[0].mxu0
        %v1672 = vadd.f32 0.0, %v1671
        %v1673 = vpop.f32.mrb[0].mxu0
        %1674 = vdwg.mxu0
        %v1675 = vpack.c.bf16 %v1531, %v1528
        %v1676 = vpack.c.bf16 %v1578, %v1575
        %v1677 = vpack.c.bf16 %v1625, %v1622
        %v1678 = vpack.c.bf16 %v1672, %v1669
        %s1679 = scalar_lea.vmem [#allocation7], 4
        %v1680 = vld [vmem:[%s1679] sm:$0xf]
        %v1682 = vsel %vm688, %v1675, 0
        %v1685 = vsel %vm688, %v1676, 0
        %v1688 = vsel %vm688, %v1677, 0
        %v1691 = vsel %vm688, %v1678, 0
        %vm1693 = vcmask 1043456
        %v1695 = vsel %vm1693, %v1680, 0
        %1697 = vmatprep.subr.bf16.mxu0 0
        %1698 = vmatpush1.bf16.msra.mxu0 %v1695
        %1699 = vmatprep.subr.bf16.mxu0 0
        %1700 = vmatpush1.bf16.msra.mxu0 0
        %1701 = vmatprep.subr.bf16.mxu0 0
        %1702 = vmatpush1.bf16.msra.mxu0 0
        %1703 = vmatprep.subr.bf16.mxu0 0
        %1704 = vmatpush1.bf16.msra.mxu0 0
        %1705 = vmatprep.subr.bf16.mxu0 0
        %1706 = vmatpush1.bf16.msra.mxu0 0
        %1707 = vmatprep.subr.bf16.mxu0 0
        %1708 = vmatpush1.bf16.msra.mxu0 0
        %1709 = vmatprep.subr.bf16.mxu0 0
        %1710 = vmatpush1.bf16.msra.mxu0 0
        %1711 = vmatprep.subr.bf16.mxu0 0
        %1712 = vmatpush1.bf16.msra.mxu0 0
        %1713 = vmatprep.subr.bf16.mxu0 0
        %1714 = vmatpush1.bf16.msra.mxu0 0
        %1715 = vmatprep.subr.bf16.mxu0 0
        %1716 = vmatpush1.bf16.msra.mxu0 0
        %1717 = vmatprep.subr.bf16.mxu0 0
        %1718 = vmatpush1.bf16.msra.mxu0 0
        %1719 = vmatprep.subr.bf16.mxu0 0
        %1720 = vmatpush1.bf16.msra.mxu0 0
        %1721 = vmatprep.subr.bf16.mxu0 0
        %1722 = vmatpush1.bf16.msra.mxu0 0
        %1723 = vmatprep.subr.bf16.mxu0 0
        %1724 = vmatpush1.bf16.msra.mxu0 0
        %1725 = vmatprep.subr.bf16.mxu0 0
        %1726 = vmatpush1.bf16.msra.mxu0 0
        %1727 = vmatprep.subr.bf16.mxu0 0
        %1728 = vmatpush1.bf16.msra.mxu0 0
        %1729 = vmatprep.mubr.bf16.mxu0 0
        %1730 = vmatmul.mubr.bf16.gmra.mrb[0].mxu0 %v1682
        %v1731 = vpop.f32.mrb[0].mxu0
        %v1732 = vadd.f32 0.0, %v1731
        %v1733 = vpop.f32.mrb[0].mxu0
        %v1734 = vpop.f32.mrb[0].mxu0
        %v1735 = vadd.f32 0.0, %v1734
        %v1736 = vpop.f32.mrb[0].mxu0
        %1737 = vmatprep.mubr.bf16.mxu0 0
        %1738 = vmatmul.mubr.bf16.gmra.mrb[0].mxu0 %v1685
        %v1739 = vpop.f32.mrb[0].mxu0
        %v1740 = vadd.f32 0.0, %v1739
        %v1741 = vpop.f32.mrb[0].mxu0
        %v1742 = vpop.f32.mrb[0].mxu0
        %v1743 = vadd.f32 0.0, %v1742
        %v1744 = vpop.f32.mrb[0].mxu0
        %1745 = vmatprep.mubr.bf16.mxu0 0
        %1746 = vmatmul.mubr.bf16.gmra.mrb[0].mxu0 %v1688
        %v1747 = vpop.f32.mrb[0].mxu0
        %v1748 = vadd.f32 0.0, %v1747
        %v1749 = vpop.f32.mrb[0].mxu0
        %v1750 = vpop.f32.mrb[0].mxu0
        %v1751 = vadd.f32 0.0, %v1750
        %v1752 = vpop.f32.mrb[0].mxu0
        %1753 = vmatprep.mubr.bf16.mxu0 0
        %1754 = vmatmul.mubr.bf16.gmra.mrb[0].mxu0 %v1691
        %v1755 = vpop.f32.mrb[0].mxu0
        %v1756 = vadd.f32 0.0, %v1755
        %v1757 = vpop.f32.mrb[0].mxu0
        %v1758 = vpop.f32.mrb[0].mxu0
        %v1759 = vadd.f32 0.0, %v1758
        %v1760 = vpop.f32.mrb[0].mxu0
        %1761 = vdwg.mxu0
        %v1763 = vsel %vm688, %v1175, 0
        %v1766 = vsel %vm688, %v1176, 0
        %v1769 = vsel %vm688, %v1177, 0
        %v1772 = vsel %vm688, %v1178, 0
        %v1775 = vsel %vm1693, %v1179, 0
        %1777 = vmatprep.subr.bf16.mxu0 0
        %1778 = vmatpush1.bf16.msra.mxu0 %v1775
        %1779 = vmatprep.subr.bf16.mxu0 0
        %1780 = vmatpush1.bf16.msra.mxu0 0
        %1781 = vmatprep.subr.bf16.mxu0 0
        %1782 = vmatpush1.bf16.msra.mxu0 0
        %1783 = vmatprep.subr.bf16.mxu0 0
        %1784 = vmatpush1.bf16.msra.mxu0 0
        %1785 = vmatprep.subr.bf16.mxu0 0
        %1786 = vmatpush1.bf16.msra.mxu0 0
        %1787 = vmatprep.subr.bf16.mxu0 0
        %1788 = vmatpush1.bf16.msra.mxu0 0
        %1789 = vmatprep.subr.bf16.mxu0 0
        %1790 = vmatpush1.bf16.msra.mxu0 0
        %1791 = vmatprep.subr.bf16.mxu0 0
        %1792 = vmatpush1.bf16.msra.mxu0 0
        %1793 = vmatprep.subr.bf16.mxu0 0
        %1794 = vmatpush1.bf16.msra.mxu0 0
        %1795 = vmatprep.subr.bf16.mxu0 0
        %1796 = vmatpush1.bf16.msra.mxu0 0
        %1797 = vmatprep.subr.bf16.mxu0 0
        %1798 = vmatpush1.bf16.msra.mxu0 0
        %1799 = vmatprep.subr.bf16.mxu0 0
        %1800 = vmatpush1.bf16.msra.mxu0 0
        %1801 = vmatprep.subr.bf16.mxu0 0
        %1802 = vmatpush1.bf16.msra.mxu0 0
        %1803 = vmatprep.subr.bf16.mxu0 0
        %1804 = vmatpush1.bf16.msra.mxu0 0
        %1805 = vmatprep.subr.bf16.mxu0 0
        %1806 = vmatpush1.bf16.msra.mxu0 0
        %1807 = vmatprep.subr.bf16.mxu0 0
        %1808 = vmatpush1.bf16.msra.mxu0 0
        %1809 = vmatprep.mubr.bf16.mxu0 0
        %1810 = vmatmul.mubr.bf16.gmra.mrb[0].mxu0 %v1763
        %v1811 = vpop.f32.mrb[0].mxu0
        %v1812 = vadd.f32 %v1732, %v1811
        %v1813 = vpop.f32.mrb[0].mxu0
        %v1814 = vpop.f32.mrb[0].mxu0
        %v1815 = vadd.f32 %v1735, %v1814
        %v1816 = vpop.f32.mrb[0].mxu0
        %1817 = vmatprep.mubr.bf16.mxu0 0
        %1818 = vmatmul.mubr.bf16.gmra.mrb[0].mxu0 %v1766
        %v1819 = vpop.f32.mrb[0].mxu0
        %v1820 = vadd.f32 %v1740, %v1819
        %v1821 = vpop.f32.mrb[0].mxu0
        %v1822 = vpop.f32.mrb[0].mxu0
        %v1823 = vadd.f32 %v1743, %v1822
        %v1824 = vpop.f32.mrb[0].mxu0
        %1825 = vmatprep.mubr.bf16.mxu0 0
        %1826 = vmatmul.mubr.bf16.gmra.mrb[0].mxu0 %v1769
        %v1827 = vpop.f32.mrb[0].mxu0
        %v1828 = vadd.f32 %v1748, %v1827
        %v1829 = vpop.f32.mrb[0].mxu0
        %v1830 = vpop.f32.mrb[0].mxu0
        %v1831 = vadd.f32 %v1751, %v1830
        %v1832 = vpop.f32.mrb[0].mxu0
        %1833 = vmatprep.mubr.bf16.mxu0 0
        %1834 = vmatmul.mubr.bf16.gmra.mrb[0].mxu0 %v1772
        %v1835 = vpop.f32.mrb[0].mxu0
        %v1836 = vadd.f32 %v1756, %v1835
        %v1837 = vpop.f32.mrb[0].mxu0
        %v1838 = vpop.f32.mrb[0].mxu0
        %v1839 = vadd.f32 %v1759, %v1838
        %v1840 = vpop.f32.mrb[0].mxu0
        %1841 = vdwg.mxu0
        %s1842 = scalar_lea.vmem [#allocation5], 32
        %v1843 = vld [vmem:[%s1842] sm:$0xff]
        %v1844 = vld [vmem:[%s1842 + $0x8] sm:$0xff]
        %1845 = vrot.lane.b32.xlu0 %v679, 112
        %v1846 = vpop.permute.xlu0 %1845
        %1847 = vrot.lane.b32.xlu0 %v679, 80
        %v1848 = vpop.permute.xlu0 %1847
        %v1850 = vsel %vm688, %v1846, 0
        %v1853 = vsel %vm688, %v1848, 0
        %1855 = vmatprep.subr.bf16.mxu0 0
        %1856 = vmatpush1.bf16.xpose.msra.mxu0 %v1853
        %1857 = vmatprep.subr.bf16.mxu0 0
        %1858 = vmatpush1.bf16.xpose.msra.mxu0 0
        %1859 = vmatprep.subr.bf16.mxu0 0
        %1860 = vmatpush1.bf16.xpose.msra.mxu0 0
        %1861 = vmatprep.subr.bf16.mxu0 0
        %1862 = vmatpush1.bf16.xpose.msra.mxu0 0
        %1863 = vmatprep.subr.bf16.mxu0 0
        %1864 = vmatpush1.bf16.xpose.msra.mxu0 0
        %1865 = vmatprep.subr.bf16.mxu0 0
        %1866 = vmatpush1.bf16.xpose.msra.mxu0 0
        %1867 = vmatprep.subr.bf16.mxu0 0
        %1868 = vmatpush1.bf16.xpose.msra.mxu0 0
        %1869 = vmatprep.subr.bf16.mxu0 0
        %1870 = vmatpush1.bf16.xpose.msra.mxu0 0
        %1871 = vmatprep.subr.bf16.mxu0 0
        %1872 = vmatpush1.bf16.xpose.msra.mxu0 0
        %1873 = vmatprep.subr.bf16.mxu0 0
        %1874 = vmatpush1.bf16.xpose.msra.mxu0 0
        %1875 = vmatprep.subr.bf16.mxu0 0
        %1876 = vmatpush1.bf16.xpose.msra.mxu0 0
        %1877 = vmatprep.subr.bf16.mxu0 0
        %1878 = vmatpush1.bf16.xpose.msra.mxu0 0
        %1879 = vmatprep.subr.bf16.mxu0 0
        %1880 = vmatpush1.bf16.xpose.msra.mxu0 0
        %1881 = vmatprep.subr.bf16.mxu0 0
        %1882 = vmatpush1.bf16.xpose.msra.mxu0 0
        %1883 = vmatprep.subr.bf16.mxu0 0
        %1884 = vmatpush1.bf16.xpose.msra.mxu0 0
        %1885 = vmatprep.subr.bf16.mxu0 0
        %1886 = vmatpush1.bf16.xpose.msra.mxu0 0
        %1887 = vmatprep.mubr.bf16.mxu0 0
        %1888 = vmatmul.mubr.bf16.gmra.mrb[0].mxu0 %v1850
        %v1889 = vpop.f32.mrb[0].mxu0
        %v1890 = vadd.f32 %v1843, %v1889
        %v1891 = vpop.f32.mrb[0].mxu0
        %v1892 = vpop.f32.mrb[0].mxu0
        %v1893 = vadd.f32 %v1844, %v1892
        %v1894 = vpop.f32.mrb[0].mxu0
        %1895 = vdwg.mxu0
        %1896 = vrot.lane.b32.xlu0 %v680, 112
        %v1897 = vpop.permute.xlu0 %1896
        %1898 = vrot.lane.b32.xlu0 %v680, 80
        %v1899 = vpop.permute.xlu0 %1898
        %v1901 = vsel %vm688, %v1897, 0
        %v1904 = vsel %vm688, %v1899, 0
        %1906 = vmatprep.subr.bf16.mxu0 0
        %1907 = vmatpush1.bf16.xpose.msra.mxu0 %v1904
        %1908 = vmatprep.subr.bf16.mxu0 0
        %1909 = vmatpush1.bf16.xpose.msra.mxu0 0
        %1910 = vmatprep.subr.bf16.mxu0 0
        %1911 = vmatpush1.bf16.xpose.msra.mxu0 0
        %1912 = vmatprep.subr.bf16.mxu0 0
        %1913 = vmatpush1.bf16.xpose.msra.mxu0 0
        %1914 = vmatprep.subr.bf16.mxu0 0
        %1915 = vmatpush1.bf16.xpose.msra.mxu0 0
        %1916 = vmatprep.subr.bf16.mxu0 0
        %1917 = vmatpush1.bf16.xpose.msra.mxu0 0
        %1918 = vmatprep.subr.bf16.mxu0 0
        %1919 = vmatpush1.bf16.xpose.msra.mxu0 0
        %1920 = vmatprep.subr.bf16.mxu0 0
        %1921 = vmatpush1.bf16.xpose.msra.mxu0 0
        %1922 = vmatprep.subr.bf16.mxu0 0
        %1923 = vmatpush1.bf16.xpose.msra.mxu0 0
        %1924 = vmatprep.subr.bf16.mxu0 0
        %1925 = vmatpush1.bf16.xpose.msra.mxu0 0
        %1926 = vmatprep.subr.bf16.mxu0 0
        %1927 = vmatpush1.bf16.xpose.msra.mxu0 0
        %1928 = vmatprep.subr.bf16.mxu0 0
        %1929 = vmatpush1.bf16.xpose.msra.mxu0 0
        %1930 = vmatprep.subr.bf16.mxu0 0
        %1931 = vmatpush1.bf16.xpose.msra.mxu0 0
        %1932 = vmatprep.subr.bf16.mxu0 0
        %1933 = vmatpush1.bf16.xpose.msra.mxu0 0
        %1934 = vmatprep.subr.bf16.mxu0 0
        %1935 = vmatpush1.bf16.xpose.msra.mxu0 0
        %1936 = vmatprep.subr.bf16.mxu0 0
        %1937 = vmatpush1.bf16.xpose.msra.mxu0 0
        %1938 = vmatprep.mubr.bf16.mxu0 0
        %1939 = vmatmul.mubr.bf16.gmra.mrb[0].mxu0 %v1901
        %v1940 = vpop.f32.mrb[0].mxu0
        %v1941 = vadd.f32 %v1843, %v1940
        %v1942 = vpop.f32.mrb[0].mxu0
        %v1943 = vpop.f32.mrb[0].mxu0
        %v1944 = vadd.f32 %v1844, %v1943
        %v1945 = vpop.f32.mrb[0].mxu0
        %1946 = vdwg.mxu0
        %1947 = vrot.lane.b32.xlu0 %v681, 112
        %v1948 = vpop.permute.xlu0 %1947
        %1949 = vrot.lane.b32.xlu0 %v681, 80
        %v1950 = vpop.permute.xlu0 %1949
        %v1952 = vsel %vm688, %v1948, 0
        %v1955 = vsel %vm688, %v1950, 0
        %1957 = vmatprep.subr.bf16.mxu0 0
        %1958 = vmatpush1.bf16.xpose.msra.mxu0 %v1955
        %1959 = vmatprep.subr.bf16.mxu0 0
        %1960 = vmatpush1.bf16.xpose.msra.mxu0 0
        %1961 = vmatprep.subr.bf16.mxu0 0
        %1962 = vmatpush1.bf16.xpose.msra.mxu0 0
        %1963 = vmatprep.subr.bf16.mxu0 0
        %1964 = vmatpush1.bf16.xpose.msra.mxu0 0
        %1965 = vmatprep.subr.bf16.mxu0 0
        %1966 = vmatpush1.bf16.xpose.msra.mxu0 0
        %1967 = vmatprep.subr.bf16.mxu0 0
        %1968 = vmatpush1.bf16.xpose.msra.mxu0 0
        %1969 = vmatprep.subr.bf16.mxu0 0
        %1970 = vmatpush1.bf16.xpose.msra.mxu0 0
        %1971 = vmatprep.subr.bf16.mxu0 0
        %1972 = vmatpush1.bf16.xpose.msra.mxu0 0
        %1973 = vmatprep.subr.bf16.mxu0 0
        %1974 = vmatpush1.bf16.xpose.msra.mxu0 0
        %1975 = vmatprep.subr.bf16.mxu0 0
        %1976 = vmatpush1.bf16.xpose.msra.mxu0 0
        %1977 = vmatprep.subr.bf16.mxu0 0
        %1978 = vmatpush1.bf16.xpose.msra.mxu0 0
        %1979 = vmatprep.subr.bf16.mxu0 0
        %1980 = vmatpush1.bf16.xpose.msra.mxu0 0
        %1981 = vmatprep.subr.bf16.mxu0 0
        %1982 = vmatpush1.bf16.xpose.msra.mxu0 0
        %1983 = vmatprep.subr.bf16.mxu0 0
        %1984 = vmatpush1.bf16.xpose.msra.mxu0 0
        %1985 = vmatprep.subr.bf16.mxu0 0
        %1986 = vmatpush1.bf16.xpose.msra.mxu0 0
        %1987 = vmatprep.subr.bf16.mxu0 0
        %1988 = vmatpush1.bf16.xpose.msra.mxu0 0
        %1989 = vmatprep.mubr.bf16.mxu0 0
        %1990 = vmatmul.mubr.bf16.gmra.mrb[0].mxu0 %v1952
        %v1991 = vpop.f32.mrb[0].mxu0
        %v1992 = vadd.f32 %v1843, %v1991
        %v1993 = vpop.f32.mrb[0].mxu0
        %v1994 = vpop.f32.mrb[0].mxu0
        %v1995 = vadd.f32 %v1844, %v1994
        %v1996 = vpop.f32.mrb[0].mxu0
        %1997 = vdwg.mxu0
        %1998 = vrot.lane.b32.xlu0 %v682, 112
        %v1999 = vpop.permute.xlu0 %1998
        %2000 = vrot.lane.b32.xlu0 %v682, 80
        %v2001 = vpop.permute.xlu0 %2000
        %v2003 = vsel %vm688, %v1999, 0
        %v2006 = vsel %vm688, %v2001, 0
        %2008 = vmatprep.subr.bf16.mxu0 0
        %2009 = vmatpush1.bf16.xpose.msra.mxu0 %v2006
        %2010 = vmatprep.subr.bf16.mxu0 0
        %2011 = vmatpush1.bf16.xpose.msra.mxu0 0
        %2012 = vmatprep.subr.bf16.mxu0 0
        %2013 = vmatpush1.bf16.xpose.msra.mxu0 0
        %2014 = vmatprep.subr.bf16.mxu0 0
        %2015 = vmatpush1.bf16.xpose.msra.mxu0 0
        %2016 = vmatprep.subr.bf16.mxu0 0
        %2017 = vmatpush1.bf16.xpose.msra.mxu0 0
        %2018 = vmatprep.subr.bf16.mxu0 0
        %2019 = vmatpush1.bf16.xpose.msra.mxu0 0
        %2020 = vmatprep.subr.bf16.mxu0 0
        %2021 = vmatpush1.bf16.xpose.msra.mxu0 0
        %2022 = vmatprep.subr.bf16.mxu0 0
        %2023 = vmatpush1.bf16.xpose.msra.mxu0 0
        %2024 = vmatprep.subr.bf16.mxu0 0
        %2025 = vmatpush1.bf16.xpose.msra.mxu0 0
        %2026 = vmatprep.subr.bf16.mxu0 0
        %2027 = vmatpush1.bf16.xpose.msra.mxu0 0
        %2028 = vmatprep.subr.bf16.mxu0 0
        %2029 = vmatpush1.bf16.xpose.msra.mxu0 0
        %2030 = vmatprep.subr.bf16.mxu0 0
        %2031 = vmatpush1.bf16.xpose.msra.mxu0 0
        %2032 = vmatprep.subr.bf16.mxu0 0
        %2033 = vmatpush1.bf16.xpose.msra.mxu0 0
        %2034 = vmatprep.subr.bf16.mxu0 0
        %2035 = vmatpush1.bf16.xpose.msra.mxu0 0
        %2036 = vmatprep.subr.bf16.mxu0 0
        %2037 = vmatpush1.bf16.xpose.msra.mxu0 0
        %2038 = vmatprep.subr.bf16.mxu0 0
        %2039 = vmatpush1.bf16.xpose.msra.mxu0 0
        %2040 = vmatprep.mubr.bf16.mxu0 0
        %2041 = vmatmul.mubr.bf16.gmra.mrb[0].mxu0 %v2003
        %v2042 = vpop.f32.mrb[0].mxu0
        %v2043 = vadd.f32 %v1843, %v2042
        %v2044 = vpop.f32.mrb[0].mxu0
        %v2045 = vpop.f32.mrb[0].mxu0
        %v2046 = vadd.f32 %v1844, %v2045
        %v2047 = vpop.f32.mrb[0].mxu0
        %2048 = vdwg.mxu0
        %v2049 = vadd.f32 %v1890, %v671
        %v2050 = vadd.f32 %v1893, %v672
        %v2051 = vadd.f32 %v1941, %v673
        %v2052 = vadd.f32 %v1944, %v674
        %v2053 = vadd.f32 %v1992, %v675
        %v2054 = vadd.f32 %v1995, %v676
        %v2055 = vadd.f32 %v2043, %v677
        %v2056 = vadd.f32 %v2046, %v678
        %v2057 = vsel %vm894, %v2049, -inf
        %2058 = vmax.xlane.f32.xlu0 %v2057
        %v2059 = vpop.xlane.xlu0 %2058
        %v2060 = vsel %vm894, %v2050, -inf
        %2061 = vmax.xlane.f32.xlu0 %v2060
        %v2062 = vpop.xlane.xlu0 %2061
        %v2063 = vsel %vm894, %v2051, -inf
        %2064 = vmax.xlane.f32.xlu0 %v2063
        %v2065 = vpop.xlane.xlu0 %2064
        %v2066 = vsel %vm894, %v2052, -inf
        %2067 = vmax.xlane.f32.xlu0 %v2066
        %v2068 = vpop.xlane.xlu0 %2067
        %v2069 = vsel %vm894, %v2053, -inf
        %2070 = vmax.xlane.f32.xlu0 %v2069
        %v2071 = vpop.xlane.xlu0 %2070
        %v2072 = vsel %vm894, %v2054, -inf
        %2073 = vmax.xlane.f32.xlu0 %v2072
        %v2074 = vpop.xlane.xlu0 %2073
        %v2075 = vsel %vm894, %v2055, -inf
        %2076 = vmax.xlane.f32.xlu0 %v2075
        %v2077 = vpop.xlane.xlu0 %2076
        %v2078 = vsel %vm894, %v2056, -inf
        %2079 = vmax.xlane.f32.xlu0 %v2078
        %v2080 = vpop.xlane.xlu0 %2079
        %v2081 = vsub.f32 %v2049, %v2059
        %v2082 = vsub.f32 %v2050, %v2062
        %v2083 = vsub.f32 %v2051, %v2065
        %v2084 = vsub.f32 %v2052, %v2068
        %v2085 = vsub.f32 %v2053, %v2071
        %v2086 = vsub.f32 %v2054, %v2074
        %v2087 = vsub.f32 %v2055, %v2077
        %v2088 = vsub.f32 %v2056, %v2080
        %v2089 = vmul.f32 %v2081, 1.442695
        %v2090 = vpow.pop %v2089
        %v2091 = vmul.f32 %v2082, 1.442695
        %v2092 = vpow.pop %v2091
        %v2093 = vmul.f32 %v2083, 1.442695
        %v2094 = vpow.pop %v2093
        %v2095 = vmul.f32 %v2084, 1.442695
        %v2096 = vpow.pop %v2095
        %v2097 = vmul.f32 %v2085, 1.442695
        %v2098 = vpow.pop %v2097
        %v2099 = vmul.f32 %v2086, 1.442695
        %v2100 = vpow.pop %v2099
        %v2101 = vmul.f32 %v2087, 1.442695
        %v2102 = vpow.pop %v2101
        %v2103 = vmul.f32 %v2088, 1.442695
        %v2104 = vpow.pop %v2103
        %v2105 = vsel %vm894, %v2090, 0.0
        %2106 = vadd.xlane.f32.xlu0 %v2105
        %v2107 = vpop.xlane.xlu0 %2106
        %v2108 = vsel %vm894, %v2092, 0.0
        %2109 = vadd.xlane.f32.xlu0 %v2108
        %v2110 = vpop.xlane.xlu0 %2109
        %v2111 = vsel %vm894, %v2094, 0.0
        %2112 = vadd.xlane.f32.xlu0 %v2111
        %v2113 = vpop.xlane.xlu0 %2112
        %v2114 = vsel %vm894, %v2096, 0.0
        %2115 = vadd.xlane.f32.xlu0 %v2114
        %v2116 = vpop.xlane.xlu0 %2115
        %v2117 = vsel %vm894, %v2098, 0.0
        %2118 = vadd.xlane.f32.xlu0 %v2117
        %v2119 = vpop.xlane.xlu0 %2118
        %v2120 = vsel %vm894, %v2100, 0.0
        %2121 = vadd.xlane.f32.xlu0 %v2120
        %v2122 = vpop.xlane.xlu0 %2121
        %v2123 = vsel %vm894, %v2102, 0.0
        %2124 = vadd.xlane.f32.xlu0 %v2123
        %v2125 = vpop.xlane.xlu0 %2124
        %v2126 = vsel %vm894, %v2104, 0.0
        %2127 = vadd.xlane.f32.xlu0 %v2126
        %v2128 = vpop.xlane.xlu0 %2127
        %v2129 = vrcp.pop %v2107
        %v2130 = vrcp.pop %v2110
        %v2131 = vrcp.pop %v2113
        %v2132 = vrcp.pop %v2116
        %v2133 = vrcp.pop %v2119
        %v2134 = vrcp.pop %v2122
        %v2135 = vrcp.pop %v2125
        %v2136 = vrcp.pop %v2128
        %v2137 = vmul.f32 %v2090, %v2129
        %v2138 = vmul.f32 %v2092, %v2130
        %v2139 = vmul.f32 %v2094, %v2131
        %v2140 = vmul.f32 %v2096, %v2132
        %v2141 = vmul.f32 %v2098, %v2133
        %v2142 = vmul.f32 %v2100, %v2134
        %v2143 = vmul.f32 %v2102, %v2135
        %v2144 = vmul.f32 %v2104, %v2136
        %v2145 = vpack.c.bf16 %v2138, %v2137
        %v2146 = vpack.c.bf16 %v2140, %v2139
        %v2147 = vpack.c.bf16 %v2142, %v2141
        %v2148 = vpack.c.bf16 %v2144, %v2143
        %2149 = vrot.lane.b32.xlu0 %v679, 48
        %v2150 = vpop.permute.xlu0 %2149
        %v2153 = vsel %vm894, %v2145, 0
        %2155 = vmatprep.subr.bf16.mxu0 0
        %2156 = vmatpush1.bf16.msra.mxu0 %v2150
        %2157 = vmatprep.subr.bf16.mxu0 0
        %2158 = vmatpush1.bf16.msra.mxu0 0
        %2159 = vmatprep.subr.bf16.mxu0 0
        %2160 = vmatpush1.bf16.msra.mxu0 0
        %2161 = vmatprep.subr.bf16.mxu0 0
        %2162 = vmatpush1.bf16.msra.mxu0 0
        %2163 = vmatprep.subr.bf16.mxu0 0
        %2164 = vmatpush1.bf16.msra.mxu0 0
        %2165 = vmatprep.subr.bf16.mxu0 0
        %2166 = vmatpush1.bf16.msra.mxu0 0
        %2167 = vmatprep.subr.bf16.mxu0 0
        %2168 = vmatpush1.bf16.msra.mxu0 0
        %2169 = vmatprep.subr.bf16.mxu0 0
        %2170 = vmatpush1.bf16.msra.mxu0 0
        %2171 = vmatprep.subr.bf16.mxu0 0
        %2172 = vmatpush1.bf16.msra.mxu0 0
        %2173 = vmatprep.subr.bf16.mxu0 0
        %2174 = vmatpush1.bf16.msra.mxu0 0
        %2175 = vmatprep.subr.bf16.mxu0 0
        %2176 = vmatpush1.bf16.msra.mxu0 0
        %2177 = vmatprep.subr.bf16.mxu0 0
        %2178 = vmatpush1.bf16.msra.mxu0 0
        %2179 = vmatprep.subr.bf16.mxu0 0
        %2180 = vmatpush1.bf16.msra.mxu0 0
        %2181 = vmatprep.subr.bf16.mxu0 0
        %2182 = vmatpush1.bf16.msra.mxu0 0
        %2183 = vmatprep.subr.bf16.mxu0 0
        %2184 = vmatpush1.bf16.msra.mxu0 0
        %2185 = vmatprep.subr.bf16.mxu0 0
        %2186 = vmatpush1.bf16.msra.mxu0 0
        %2187 = vmatprep.mubr.bf16.mxu0 0
        %2188 = vmatmul.mubr.bf16.gmra.mrb[0].mxu0 %v2153
        %v2189 = vpop.f32.mrb[0].mxu0
        %v2190 = vadd.f32 0.0, %v2189
        %v2191 = vpop.f32.mrb[0].mxu0
        %v2192 = vpop.f32.mrb[0].mxu0
        %v2193 = vadd.f32 0.0, %v2192
        %v2194 = vpop.f32.mrb[0].mxu0
        %2195 = vdwg.mxu0
        %2196 = vrot.lane.b32.xlu0 %v680, 48
        %v2197 = vpop.permute.xlu0 %2196
        %v2200 = vsel %vm894, %v2146, 0
        %2202 = vmatprep.subr.bf16.mxu0 0
        %2203 = vmatpush1.bf16.msra.mxu0 %v2197
        %2204 = vmatprep.subr.bf16.mxu0 0
        %2205 = vmatpush1.bf16.msra.mxu0 0
        %2206 = vmatprep.subr.bf16.mxu0 0
        %2207 = vmatpush1.bf16.msra.mxu0 0
        %2208 = vmatprep.subr.bf16.mxu0 0
        %2209 = vmatpush1.bf16.msra.mxu0 0
        %2210 = vmatprep.subr.bf16.mxu0 0
        %2211 = vmatpush1.bf16.msra.mxu0 0
        %2212 = vmatprep.subr.bf16.mxu0 0
        %2213 = vmatpush1.bf16.msra.mxu0 0
        %2214 = vmatprep.subr.bf16.mxu0 0
        %2215 = vmatpush1.bf16.msra.mxu0 0
        %2216 = vmatprep.subr.bf16.mxu0 0
        %2217 = vmatpush1.bf16.msra.mxu0 0
        %2218 = vmatprep.subr.bf16.mxu0 0
        %2219 = vmatpush1.bf16.msra.mxu0 0
        %2220 = vmatprep.subr.bf16.mxu0 0
        %2221 = vmatpush1.bf16.msra.mxu0 0
        %2222 = vmatprep.subr.bf16.mxu0 0
        %2223 = vmatpush1.bf16.msra.mxu0 0
        %2224 = vmatprep.subr.bf16.mxu0 0
        %2225 = vmatpush1.bf16.msra.mxu0 0
        %2226 = vmatprep.subr.bf16.mxu0 0
        %2227 = vmatpush1.bf16.msra.mxu0 0
        %2228 = vmatprep.subr.bf16.mxu0 0
        %2229 = vmatpush1.bf16.msra.mxu0 0
        %2230 = vmatprep.subr.bf16.mxu0 0
        %2231 = vmatpush1.bf16.msra.mxu0 0
        %2232 = vmatprep.subr.bf16.mxu0 0
        %2233 = vmatpush1.bf16.msra.mxu0 0
        %2234 = vmatprep.mubr.bf16.mxu0 0
        %2235 = vmatmul.mubr.bf16.gmra.mrb[0].mxu0 %v2200
        %v2236 = vpop.f32.mrb[0].mxu0
        %v2237 = vadd.f32 0.0, %v2236
        %v2238 = vpop.f32.mrb[0].mxu0
        %v2239 = vpop.f32.mrb[0].mxu0
        %v2240 = vadd.f32 0.0, %v2239
        %v2241 = vpop.f32.mrb[0].mxu0
        %2242 = vdwg.mxu0
        %2243 = vrot.lane.b32.xlu0 %v681, 48
        %v2244 = vpop.permute.xlu0 %2243
        %v2247 = vsel %vm894, %v2147, 0
        %2249 = vmatprep.subr.bf16.mxu0 0
        %2250 = vmatpush1.bf16.msra.mxu0 %v2244
        %2251 = vmatprep.subr.bf16.mxu0 0
        %2252 = vmatpush1.bf16.msra.mxu0 0
        %2253 = vmatprep.subr.bf16.mxu0 0
        %2254 = vmatpush1.bf16.msra.mxu0 0
        %2255 = vmatprep.subr.bf16.mxu0 0
        %2256 = vmatpush1.bf16.msra.mxu0 0
        %2257 = vmatprep.subr.bf16.mxu0 0
        %2258 = vmatpush1.bf16.msra.mxu0 0
        %2259 = vmatprep.subr.bf16.mxu0 0
        %2260 = vmatpush1.bf16.msra.mxu0 0
        %2261 = vmatprep.subr.bf16.mxu0 0
        %2262 = vmatpush1.bf16.msra.mxu0 0
        %2263 = vmatprep.subr.bf16.mxu0 0
        %2264 = vmatpush1.bf16.msra.mxu0 0
        %2265 = vmatprep.subr.bf16.mxu0 0
        %2266 = vmatpush1.bf16.msra.mxu0 0
        %2267 = vmatprep.subr.bf16.mxu0 0
        %2268 = vmatpush1.bf16.msra.mxu0 0
        %2269 = vmatprep.subr.bf16.mxu0 0
        %2270 = vmatpush1.bf16.msra.mxu0 0
        %2271 = vmatprep.subr.bf16.mxu0 0
        %2272 = vmatpush1.bf16.msra.mxu0 0
        %2273 = vmatprep.subr.bf16.mxu0 0
        %2274 = vmatpush1.bf16.msra.mxu0 0
        %2275 = vmatprep.subr.bf16.mxu0 0
        %2276 = vmatpush1.bf16.msra.mxu0 0
        %2277 = vmatprep.subr.bf16.mxu0 0
        %2278 = vmatpush1.bf16.msra.mxu0 0
        %2279 = vmatprep.subr.bf16.mxu0 0
        %2280 = vmatpush1.bf16.msra.mxu0 0
        %2281 = vmatprep.mubr.bf16.mxu0 0
        %2282 = vmatmul.mubr.bf16.gmra.mrb[0].mxu0 %v2247
        %v2283 = vpop.f32.mrb[0].mxu0
        %v2284 = vadd.f32 0.0, %v2283
        %v2285 = vpop.f32.mrb[0].mxu0
        %v2286 = vpop.f32.mrb[0].mxu0
        %v2287 = vadd.f32 0.0, %v2286
        %v2288 = vpop.f32.mrb[0].mxu0
        %2289 = vdwg.mxu0
        %2290 = vrot.lane.b32.xlu0 %v682, 48
        %v2291 = vpop.permute.xlu0 %2290
        %v2294 = vsel %vm894, %v2148, 0
        %2296 = vmatprep.subr.bf16.mxu0 0
        %2297 = vmatpush1.bf16.msra.mxu0 %v2291
        %2298 = vmatprep.subr.bf16.mxu0 0
        %2299 = vmatpush1.bf16.msra.mxu0 0
        %2300 = vmatprep.subr.bf16.mxu0 0
        %2301 = vmatpush1.bf16.msra.mxu0 0
        %2302 = vmatprep.subr.bf16.mxu0 0
        %2303 = vmatpush1.bf16.msra.mxu0 0
        %2304 = vmatprep.subr.bf16.mxu0 0
        %2305 = vmatpush1.bf16.msra.mxu0 0
        %2306 = vmatprep.subr.bf16.mxu0 0
        %2307 = vmatpush1.bf16.msra.mxu0 0
        %2308 = vmatprep.subr.bf16.mxu0 0
        %2309 = vmatpush1.bf16.msra.mxu0 0
        %2310 = vmatprep.subr.bf16.mxu0 0
        %2311 = vmatpush1.bf16.msra.mxu0 0
        %2312 = vmatprep.subr.bf16.mxu0 0
        %2313 = vmatpush1.bf16.msra.mxu0 0
        %2314 = vmatprep.subr.bf16.mxu0 0
        %2315 = vmatpush1.bf16.msra.mxu0 0
        %2316 = vmatprep.subr.bf16.mxu0 0
        %2317 = vmatpush1.bf16.msra.mxu0 0
        %2318 = vmatprep.subr.bf16.mxu0 0
        %2319 = vmatpush1.bf16.msra.mxu0 0
        %2320 = vmatprep.subr.bf16.mxu0 0
        %2321 = vmatpush1.bf16.msra.mxu0 0
        %2322 = vmatprep.subr.bf16.mxu0 0
        %2323 = vmatpush1.bf16.msra.mxu0 0
        %2324 = vmatprep.subr.bf16.mxu0 0
        %2325 = vmatpush1.bf16.msra.mxu0 0
        %2326 = vmatprep.subr.bf16.mxu0 0
        %2327 = vmatpush1.bf16.msra.mxu0 0
        %2328 = vmatprep.mubr.bf16.mxu0 0
        %2329 = vmatmul.mubr.bf16.gmra.mrb[0].mxu0 %v2294
        %v2330 = vpop.f32.mrb[0].mxu0
        %v2331 = vadd.f32 0.0, %v2330
        %v2332 = vpop.f32.mrb[0].mxu0
        %v2333 = vpop.f32.mrb[0].mxu0
        %v2334 = vadd.f32 0.0, %v2333
        %v2335 = vpop.f32.mrb[0].mxu0
        %2336 = vdwg.mxu0
        %v2337 = vpack.c.bf16 %v2193, %v2190
        %v2338 = vpack.c.bf16 %v2240, %v2237
        %v2339 = vpack.c.bf16 %v2287, %v2284
        %v2340 = vpack.c.bf16 %v2334, %v2331
        %s2341 = scalar_lea.vmem [#allocation7], 8
        %v2342 = vld [vmem:[%s2341] sm:$0xf]
        %v2344 = vsel %vm688, %v2337, 0
        %v2347 = vsel %vm688, %v2338, 0
        %v2350 = vsel %vm688, %v2339, 0
        %v2353 = vsel %vm688, %v2340, 0
        %v2356 = vsel %vm1693, %v2342, 0
        %2358 = vmatprep.subr.bf16.mxu0 0
        %2359 = vmatpush1.bf16.msra.mxu0 %v2356
        %2360 = vmatprep.subr.bf16.mxu0 0
        %2361 = vmatpush1.bf16.msra.mxu0 0
        %2362 = vmatprep.subr.bf16.mxu0 0
        %2363 = vmatpush1.bf16.msra.mxu0 0
        %2364 = vmatprep.subr.bf16.mxu0 0
        %2365 = vmatpush1.bf16.msra.mxu0 0
        %2366 = vmatprep.subr.bf16.mxu0 0
        %2367 = vmatpush1.bf16.msra.mxu0 0
        %2368 = vmatprep.subr.bf16.mxu0 0
        %2369 = vmatpush1.bf16.msra.mxu0 0
        %2370 = vmatprep.subr.bf16.mxu0 0
        %2371 = vmatpush1.bf16.msra.mxu0 0
        %2372 = vmatprep.subr.bf16.mxu0 0
        %2373 = vmatpush1.bf16.msra.mxu0 0
        %2374 = vmatprep.subr.bf16.mxu0 0
        %2375 = vmatpush1.bf16.msra.mxu0 0
        %2376 = vmatprep.subr.bf16.mxu0 0
        %2377 = vmatpush1.bf16.msra.mxu0 0
        %2378 = vmatprep.subr.bf16.mxu0 0
        %2379 = vmatpush1.bf16.msra.mxu0 0
        %2380 = vmatprep.subr.bf16.mxu0 0
        %2381 = vmatpush1.bf16.msra.mxu0 0
        %2382 = vmatprep.subr.bf16.mxu0 0
        %2383 = vmatpush1.bf16.msra.mxu0 0
        %2384 = vmatprep.subr.bf16.mxu0 0
        %2385 = vmatpush1.bf16.msra.mxu0 0
        %2386 = vmatprep.subr.bf16.mxu0 0
        %2387 = vmatpush1.bf16.msra.mxu0 0
        %2388 = vmatprep.subr.bf16.mxu0 0
        %2389 = vmatpush1.bf16.msra.mxu0 0
        %2390 = vmatprep.mubr.bf16.mxu0 0
        %2391 = vmatmul.mubr.bf16.gmra.mrb[0].mxu0 %v2344
        %v2392 = vpop.f32.mrb[0].mxu0
        %v2393 = vadd.f32 0.0, %v2392
        %v2394 = vpop.f32.mrb[0].mxu0
        %v2395 = vpop.f32.mrb[0].mxu0
        %v2396 = vadd.f32 0.0, %v2395
        %v2397 = vpop.f32.mrb[0].mxu0
        %2398 = vmatprep.mubr.bf16.mxu0 0
        %2399 = vmatmul.mubr.bf16.gmra.mrb[0].mxu0 %v2347
        %v2400 = vpop.f32.mrb[0].mxu0
        %v2401 = vadd.f32 0.0, %v2400
        %v2402 = vpop.f32.mrb[0].mxu0
        %v2403 = vpop.f32.mrb[0].mxu0
        %v2404 = vadd.f32 0.0, %v2403
        %v2405 = vpop.f32.mrb[0].mxu0
        %2406 = vmatprep.mubr.bf16.mxu0 0
        %2407 = vmatmul.mubr.bf16.gmra.mrb[0].mxu0 %v2350
        %v2408 = vpop.f32.mrb[0].mxu0
        %v2409 = vadd.f32 0.0, %v2408
        %v2410 = vpop.f32.mrb[0].mxu0
        %v2411 = vpop.f32.mrb[0].mxu0
        %v2412 = vadd.f32 0.0, %v2411
        %v2413 = vpop.f32.mrb[0].mxu0
        %2414 = vmatprep.mubr.bf16.mxu0 0
        %2415 = vmatmul.mubr.bf16.gmra.mrb[0].mxu0 %v2353
        %v2416 = vpop.f32.mrb[0].mxu0
        %v2417 = vadd.f32 0.0, %v2416
        %v2418 = vpop.f32.mrb[0].mxu0
        %v2419 = vpop.f32.mrb[0].mxu0
        %v2420 = vadd.f32 0.0, %v2419
        %v2421 = vpop.f32.mrb[0].mxu0
        %2422 = vdwg.mxu0
        %v2423 = vadd.f32 %v1812, %v2393
        %v2424 = vadd.f32 %v1815, %v2396
        %v2425 = vadd.f32 %v1820, %v2401
        %v2426 = vadd.f32 %v1823, %v2404
        %v2427 = vadd.f32 %v1828, %v2409
        %v2428 = vadd.f32 %v1831, %v2412
        %v2429 = vadd.f32 %v1836, %v2417
        %v2430 = vadd.f32 %v1839, %v2420
        %s2431 = scalar_lea.vmem [#allocation5], 48
        %v2432 = vld [vmem:[%s2431] sm:$0xff]
        %v2433 = vld [vmem:[%s2431 + $0x8] sm:$0xff]
        %2434 = vrot.lane.b32.xlu0 %v679, 104
        %v2435 = vpop.permute.xlu0 %2434
        %2436 = vrot.lane.b32.xlu0 %v679, 72
        %v2437 = vpop.permute.xlu0 %2436
        %v2439 = vsel %vm688, %v2435, 0
        %v2442 = vsel %vm688, %v2437, 0
        %2444 = vmatprep.subr.bf16.mxu0 0
        %2445 = vmatpush1.bf16.xpose.msra.mxu0 %v2442
        %2446 = vmatprep.subr.bf16.mxu0 0
        %2447 = vmatpush1.bf16.xpose.msra.mxu0 0
        %2448 = vmatprep.subr.bf16.mxu0 0
        %2449 = vmatpush1.bf16.xpose.msra.mxu0 0
        %2450 = vmatprep.subr.bf16.mxu0 0
        %2451 = vmatpush1.bf16.xpose.msra.mxu0 0
        %2452 = vmatprep.subr.bf16.mxu0 0
        %2453 = vmatpush1.bf16.xpose.msra.mxu0 0
        %2454 = vmatprep.subr.bf16.mxu0 0
        %2455 = vmatpush1.bf16.xpose.msra.mxu0 0
        %2456 = vmatprep.subr.bf16.mxu0 0
        %2457 = vmatpush1.bf16.xpose.msra.mxu0 0
        %2458 = vmatprep.subr.bf16.mxu0 0
        %2459 = vmatpush1.bf16.xpose.msra.mxu0 0
        %2460 = vmatprep.subr.bf16.mxu0 0
        %2461 = vmatpush1.bf16.xpose.msra.mxu0 0
        %2462 = vmatprep.subr.bf16.mxu0 0
        %2463 = vmatpush1.bf16.xpose.msra.mxu0 0
        %2464 = vmatprep.subr.bf16.mxu0 0
        %2465 = vmatpush1.bf16.xpose.msra.mxu0 0
        %2466 = vmatprep.subr.bf16.mxu0 0
        %2467 = vmatpush1.bf16.xpose.msra.mxu0 0
        %2468 = vmatprep.subr.bf16.mxu0 0
        %2469 = vmatpush1.bf16.xpose.msra.mxu0 0
        %2470 = vmatprep.subr.bf16.mxu0 0
        %2471 = vmatpush1.bf16.xpose.msra.mxu0 0
        %2472 = vmatprep.subr.bf16.mxu0 0
        %2473 = vmatpush1.bf16.xpose.msra.mxu0 0
        %2474 = vmatprep.subr.bf16.mxu0 0
        %2475 = vmatpush1.bf16.xpose.msra.mxu0 0
        %2476 = vmatprep.mubr.bf16.mxu0 0
        %2477 = vmatmul.mubr.bf16.gmra.mrb[0].mxu0 %v2439
        %v2478 = vpop.f32.mrb[0].mxu0
        %v2479 = vadd.f32 %v2432, %v2478
        %v2480 = vpop.f32.mrb[0].mxu0
        %v2481 = vpop.f32.mrb[0].mxu0
        %v2482 = vadd.f32 %v2433, %v2481
        %v2483 = vpop.f32.mrb[0].mxu0
        %2484 = vdwg.mxu0
        %2485 = vrot.lane.b32.xlu0 %v680, 104
        %v2486 = vpop.permute.xlu0 %2485
        %2487 = vrot.lane.b32.xlu0 %v680, 72
        %v2488 = vpop.permute.xlu0 %2487
        %v2490 = vsel %vm688, %v2486, 0
        %v2493 = vsel %vm688, %v2488, 0
        %2495 = vmatprep.subr.bf16.mxu0 0
        %2496 = vmatpush1.bf16.xpose.msra.mxu0 %v2493
        %2497 = vmatprep.subr.bf16.mxu0 0
        %2498 = vmatpush1.bf16.xpose.msra.mxu0 0
        %2499 = vmatprep.subr.bf16.mxu0 0
        %2500 = vmatpush1.bf16.xpose.msra.mxu0 0
        %2501 = vmatprep.subr.bf16.mxu0 0
        %2502 = vmatpush1.bf16.xpose.msra.mxu0 0
        %2503 = vmatprep.subr.bf16.mxu0 0
        %2504 = vmatpush1.bf16.xpose.msra.mxu0 0
        %2505 = vmatprep.subr.bf16.mxu0 0
        %2506 = vmatpush1.bf16.xpose.msra.mxu0 0
        %2507 = vmatprep.subr.bf16.mxu0 0
        %2508 = vmatpush1.bf16.xpose.msra.mxu0 0
        %2509 = vmatprep.subr.bf16.mxu0 0
        %2510 = vmatpush1.bf16.xpose.msra.mxu0 0
        %2511 = vmatprep.subr.bf16.mxu0 0
        %2512 = vmatpush1.bf16.xpose.msra.mxu0 0
        %2513 = vmatprep.subr.bf16.mxu0 0
        %2514 = vmatpush1.bf16.xpose.msra.mxu0 0
        %2515 = vmatprep.subr.bf16.mxu0 0
        %2516 = vmatpush1.bf16.xpose.msra.mxu0 0
        %2517 = vmatprep.subr.bf16.mxu0 0
        %2518 = vmatpush1.bf16.xpose.msra.mxu0 0
        %2519 = vmatprep.subr.bf16.mxu0 0
        %2520 = vmatpush1.bf16.xpose.msra.mxu0 0
        %2521 = vmatprep.subr.bf16.mxu0 0
        %2522 = vmatpush1.bf16.xpose.msra.mxu0 0
        %2523 = vmatprep.subr.bf16.mxu0 0
        %2524 = vmatpush1.bf16.xpose.msra.mxu0 0
        %2525 = vmatprep.subr.bf16.mxu0 0
        %2526 = vmatpush1.bf16.xpose.msra.mxu0 0
        %2527 = vmatprep.mubr.bf16.mxu0 0
        %2528 = vmatmul.mubr.bf16.gmra.mrb[0].mxu0 %v2490
        %v2529 = vpop.f32.mrb[0].mxu0
        %v2530 = vadd.f32 %v2432, %v2529
        %v2531 = vpop.f32.mrb[0].mxu0
        %v2532 = vpop.f32.mrb[0].mxu0
        %v2533 = vadd.f32 %v2433, %v2532
        %v2534 = vpop.f32.mrb[0].mxu0
        %2535 = vdwg.mxu0
        %2536 = vrot.lane.b32.xlu0 %v681, 104
        %v2537 = vpop.permute.xlu0 %2536
        %2538 = vrot.lane.b32.xlu0 %v681, 72
        %v2539 = vpop.permute.xlu0 %2538
        %v2541 = vsel %vm688, %v2537, 0
        %v2544 = vsel %vm688, %v2539, 0
        %2546 = vmatprep.subr.bf16.mxu0 0
        %2547 = vmatpush1.bf16.xpose.msra.mxu0 %v2544
        %2548 = vmatprep.subr.bf16.mxu0 0
        %2549 = vmatpush1.bf16.xpose.msra.mxu0 0
        %2550 = vmatprep.subr.bf16.mxu0 0
        %2551 = vmatpush1.bf16.xpose.msra.mxu0 0
        %2552 = vmatprep.subr.bf16.mxu0 0
        %2553 = vmatpush1.bf16.xpose.msra.mxu0 0
        %2554 = vmatprep.subr.bf16.mxu0 0
        %2555 = vmatpush1.bf16.xpose.msra.mxu0 0
        %2556 = vmatprep.subr.bf16.mxu0 0
        %2557 = vmatpush1.bf16.xpose.msra.mxu0 0
        %2558 = vmatprep.subr.bf16.mxu0 0
        %2559 = vmatpush1.bf16.xpose.msra.mxu0 0
        %2560 = vmatprep.subr.bf16.mxu0 0
        %2561 = vmatpush1.bf16.xpose.msra.mxu0 0
        %2562 = vmatprep.subr.bf16.mxu0 0
        %2563 = vmatpush1.bf16.xpose.msra.mxu0 0
        %2564 = vmatprep.subr.bf16.mxu0 0
        %2565 = vmatpush1.bf16.xpose.msra.mxu0 0
        %2566 = vmatprep.subr.bf16.mxu0 0
        %2567 = vmatpush1.bf16.xpose.msra.mxu0 0
        %2568 = vmatprep.subr.bf16.mxu0 0
        %2569 = vmatpush1.bf16.xpose.msra.mxu0 0
        %2570 = vmatprep.subr.bf16.mxu0 0
        %2571 = vmatpush1.bf16.xpose.msra.mxu0 0
        %2572 = vmatprep.subr.bf16.mxu0 0
        %2573 = vmatpush1.bf16.xpose.msra.mxu0 0
        %2574 = vmatprep.subr.bf16.mxu0 0
        %2575 = vmatpush1.bf16.xpose.msra.mxu0 0
        %2576 = vmatprep.subr.bf16.mxu0 0
        %2577 = vmatpush1.bf16.xpose.msra.mxu0 0
        %2578 = vmatprep.mubr.bf16.mxu0 0
        %2579 = vmatmul.mubr.bf16.gmra.mrb[0].mxu0 %v2541
        %v2580 = vpop.f32.mrb[0].mxu0
        %v2581 = vadd.f32 %v2432, %v2580
        %v2582 = vpop.f32.mrb[0].mxu0
        %v2583 = vpop.f32.mrb[0].mxu0
        %v2584 = vadd.f32 %v2433, %v2583
        %v2585 = vpop.f32.mrb[0].mxu0
        %2586 = vdwg.mxu0
        %2587 = vrot.lane.b32.xlu0 %v682, 104
        %v2588 = vpop.permute.xlu0 %2587
        %2589 = vrot.lane.b32.xlu0 %v682, 72
        %v2590 = vpop.permute.xlu0 %2589
        %v2592 = vsel %vm688, %v2588, 0
        %v2595 = vsel %vm688, %v2590, 0
        %2597 = vmatprep.subr.bf16.mxu0 0
        %2598 = vmatpush1.bf16.xpose.msra.mxu0 %v2595
        %2599 = vmatprep.subr.bf16.mxu0 0
        %2600 = vmatpush1.bf16.xpose.msra.mxu0 0
        %2601 = vmatprep.subr.bf16.mxu0 0
        %2602 = vmatpush1.bf16.xpose.msra.mxu0 0
        %2603 = vmatprep.subr.bf16.mxu0 0
        %2604 = vmatpush1.bf16.xpose.msra.mxu0 0
        %2605 = vmatprep.subr.bf16.mxu0 0
        %2606 = vmatpush1.bf16.xpose.msra.mxu0 0
        %2607 = vmatprep.subr.bf16.mxu0 0
        %2608 = vmatpush1.bf16.xpose.msra.mxu0 0
        %2609 = vmatprep.subr.bf16.mxu0 0
        %2610 = vmatpush1.bf16.xpose.msra.mxu0 0
        %2611 = vmatprep.subr.bf16.mxu0 0
        %2612 = vmatpush1.bf16.xpose.msra.mxu0 0
        %2613 = vmatprep.subr.bf16.mxu0 0
        %2614 = vmatpush1.bf16.xpose.msra.mxu0 0
        %2615 = vmatprep.subr.bf16.mxu0 0
        %2616 = vmatpush1.bf16.xpose.msra.mxu0 0
        %2617 = vmatprep.subr.bf16.mxu0 0
        %2618 = vmatpush1.bf16.xpose.msra.mxu0 0
        %2619 = vmatprep.subr.bf16.mxu0 0
        %2620 = vmatpush1.bf16.xpose.msra.mxu0 0
        %2621 = vmatprep.subr.bf16.mxu0 0
        %2622 = vmatpush1.bf16.xpose.msra.mxu0 0
        %2623 = vmatprep.subr.bf16.mxu0 0
        %2624 = vmatpush1.bf16.xpose.msra.mxu0 0
        %2625 = vmatprep.subr.bf16.mxu0 0
        %2626 = vmatpush1.bf16.xpose.msra.mxu0 0
        %2627 = vmatprep.subr.bf16.mxu0 0
        %2628 = vmatpush1.bf16.xpose.msra.mxu0 0
        %2629 = vmatprep.mubr.bf16.mxu0 0
        %2630 = vmatmul.mubr.bf16.gmra.mrb[0].mxu0 %v2592
        %v2631 = vpop.f32.mrb[0].mxu0
        %v2632 = vadd.f32 %v2432, %v2631
        %v2633 = vpop.f32.mrb[0].mxu0
        %v2634 = vpop.f32.mrb[0].mxu0
        %v2635 = vadd.f32 %v2433, %v2634
        %v2636 = vpop.f32.mrb[0].mxu0
        %2637 = vdwg.mxu0
        %v2638 = vadd.f32 %v2479, %v671
        %v2639 = vadd.f32 %v2482, %v672
        %v2640 = vadd.f32 %v2530, %v673
        %v2641 = vadd.f32 %v2533, %v674
        %v2642 = vadd.f32 %v2581, %v675
        %v2643 = vadd.f32 %v2584, %v676
        %v2644 = vadd.f32 %v2632, %v677
        %v2645 = vadd.f32 %v2635, %v678
        %v2646 = vsel %vm894, %v2638, -inf
        %2647 = vmax.xlane.f32.xlu0 %v2646
        %v2648 = vpop.xlane.xlu0 %2647
        %v2649 = vsel %vm894, %v2639, -inf
        %2650 = vmax.xlane.f32.xlu0 %v2649
        %v2651 = vpop.xlane.xlu0 %2650
        %v2652 = vsel %vm894, %v2640, -inf
        %2653 = vmax.xlane.f32.xlu0 %v2652
        %v2654 = vpop.xlane.xlu0 %2653
        %v2655 = vsel %vm894, %v2641, -inf
        %2656 = vmax.xlane.f32.xlu0 %v2655
        %v2657 = vpop.xlane.xlu0 %2656
        %v2658 = vsel %vm894, %v2642, -inf
        %2659 = vmax.xlane.f32.xlu0 %v2658
        %v2660 = vpop.xlane.xlu0 %2659
        %v2661 = vsel %vm894, %v2643, -inf
        %2662 = vmax.xlane.f32.xlu0 %v2661
        %v2663 = vpop.xlane.xlu0 %2662
        %v2664 = vsel %vm894, %v2644, -inf
        %2665 = vmax.xlane.f32.xlu0 %v2664
        %v2666 = vpop.xlane.xlu0 %2665
        %v2667 = vsel %vm894, %v2645, -inf
        %2668 = vmax.xlane.f32.xlu0 %v2667
        %v2669 = vpop.xlane.xlu0 %2668
        %v2670 = vsub.f32 %v2638, %v2648
        %v2671 = vsub.f32 %v2639, %v2651
        %v2672 = vsub.f32 %v2640, %v2654
        %v2673 = vsub.f32 %v2641, %v2657
        %v2674 = vsub.f32 %v2642, %v2660
        %v2675 = vsub.f32 %v2643, %v2663
        %v2676 = vsub.f32 %v2644, %v2666
        %v2677 = vsub.f32 %v2645, %v2669
        %v2678 = vmul.f32 %v2670, 1.442695
        %v2679 = vpow.pop %v2678
        %v2680 = vmul.f32 %v2671, 1.442695
        %v2681 = vpow.pop %v2680
        %v2682 = vmul.f32 %v2672, 1.442695
        %v2683 = vpow.pop %v2682
        %v2684 = vmul.f32 %v2673, 1.442695
        %v2685 = vpow.pop %v2684
        %v2686 = vmul.f32 %v2674, 1.442695
        %v2687 = vpow.pop %v2686
        %v2688 = vmul.f32 %v2675, 1.442695
        %v2689 = vpow.pop %v2688
        %v2690 = vmul.f32 %v2676, 1.442695
        %v2691 = vpow.pop %v2690
        %v2692 = vmul.f32 %v2677, 1.442695
        %v2693 = vpow.pop %v2692
        %v2694 = vsel %vm894, %v2679, 0.0
        %2695 = vadd.xlane.f32.xlu0 %v2694
        %v2696 = vpop.xlane.xlu0 %2695
        %v2697 = vsel %vm894, %v2681, 0.0
        %2698 = vadd.xlane.f32.xlu0 %v2697
        %v2699 = vpop.xlane.xlu0 %2698
        %v2700 = vsel %vm894, %v2683, 0.0
        %2701 = vadd.xlane.f32.xlu0 %v2700
        %v2702 = vpop.xlane.xlu0 %2701
        %v2703 = vsel %vm894, %v2685, 0.0
        %2704 = vadd.xlane.f32.xlu0 %v2703
        %v2705 = vpop.xlane.xlu0 %2704
        %v2706 = vsel %vm894, %v2687, 0.0
        %2707 = vadd.xlane.f32.xlu0 %v2706
        %v2708 = vpop.xlane.xlu0 %2707
        %v2709 = vsel %vm894, %v2689, 0.0
        %2710 = vadd.xlane.f32.xlu0 %v2709
        %v2711 = vpop.xlane.xlu0 %2710
        %v2712 = vsel %vm894, %v2691, 0.0
        %2713 = vadd.xlane.f32.xlu0 %v2712
        %v2714 = vpop.xlane.xlu0 %2713
        %v2715 = vsel %vm894, %v2693, 0.0
        %2716 = vadd.xlane.f32.xlu0 %v2715
        %v2717 = vpop.xlane.xlu0 %2716
        %v2718 = vrcp.pop %v2696
        %v2719 = vrcp.pop %v2699
        %v2720 = vrcp.pop %v2702
        %v2721 = vrcp.pop %v2705
        %v2722 = vrcp.pop %v2708
        %v2723 = vrcp.pop %v2711
        %v2724 = vrcp.pop %v2714
        %v2725 = vrcp.pop %v2717
        %v2726 = vmul.f32 %v2679, %v2718
        %v2727 = vmul.f32 %v2681, %v2719
        %v2728 = vmul.f32 %v2683, %v2720
        %v2729 = vmul.f32 %v2685, %v2721
        %v2730 = vmul.f32 %v2687, %v2722
        %v2731 = vmul.f32 %v2689, %v2723
        %v2732 = vmul.f32 %v2691, %v2724
        %v2733 = vmul.f32 %v2693, %v2725
        %v2734 = vpack.c.bf16 %v2727, %v2726
        %v2735 = vpack.c.bf16 %v2729, %v2728
        %v2736 = vpack.c.bf16 %v2731, %v2730
        %v2737 = vpack.c.bf16 %v2733, %v2732
        %2738 = vrot.lane.b32.xlu0 %v679, 40
        %v2739 = vpop.permute.xlu0 %2738
        %v2742 = vsel %vm894, %v2734, 0
        %2744 = vmatprep.subr.bf16.mxu0 0
        %2745 = vmatpush1.bf16.msra.mxu0 %v2739
        %2746 = vmatprep.subr.bf16.mxu0 0
        %2747 = vmatpush1.bf16.msra.mxu0 0
        %2748 = vmatprep.subr.bf16.mxu0 0
        %2749 = vmatpush1.bf16.msra.mxu0 0
        %2750 = vmatprep.subr.bf16.mxu0 0
        %2751 = vmatpush1.bf16.msra.mxu0 0
        %2752 = vmatprep.subr.bf16.mxu0 0
        %2753 = vmatpush1.bf16.msra.mxu0 0
        %2754 = vmatprep.subr.bf16.mxu0 0
        %2755 = vmatpush1.bf16.msra.mxu0 0
        %2756 = vmatprep.subr.bf16.mxu0 0
        %2757 = vmatpush1.bf16.msra.mxu0 0
        %2758 = vmatprep.subr.bf16.mxu0 0
        %2759 = vmatpush1.bf16.msra.mxu0 0
        %2760 = vmatprep.subr.bf16.mxu0 0
        %2761 = vmatpush1.bf16.msra.mxu0 0
        %2762 = vmatprep.subr.bf16.mxu0 0
        %2763 = vmatpush1.bf16.msra.mxu0 0
        %2764 = vmatprep.subr.bf16.mxu0 0
        %2765 = vmatpush1.bf16.msra.mxu0 0
        %2766 = vmatprep.subr.bf16.mxu0 0
        %2767 = vmatpush1.bf16.msra.mxu0 0
        %2768 = vmatprep.subr.bf16.mxu0 0
        %2769 = vmatpush1.bf16.msra.mxu0 0
        %2770 = vmatprep.subr.bf16.mxu0 0
        %2771 = vmatpush1.bf16.msra.mxu0 0
        %2772 = vmatprep.subr.bf16.mxu0 0
        %2773 = vmatpush1.bf16.msra.mxu0 0
        %2774 = vmatprep.subr.bf16.mxu0 0
        %2775 = vmatpush1.bf16.msra.mxu0 0
        %2776 = vmatprep.mubr.bf16.mxu0 0
        %2777 = vmatmul.mubr.bf16.gmra.mrb[0].mxu0 %v2742
        %v2778 = vpop.f32.mrb[0].mxu0
        %v2779 = vadd.f32 0.0, %v2778
        %v2780 = vpop.f32.mrb[0].mxu0
        %v2781 = vpop.f32.mrb[0].mxu0
        %v2782 = vadd.f32 0.0, %v2781
        %v2783 = vpop.f32.mrb[0].mxu0
        %2784 = vdwg.mxu0
        %2785 = vrot.lane.b32.xlu0 %v680, 40
        %v2786 = vpop.permute.xlu0 %2785
        %v2789 = vsel %vm894, %v2735, 0
        %2791 = vmatprep.subr.bf16.mxu0 0
        %2792 = vmatpush1.bf16.msra.mxu0 %v2786
        %2793 = vmatprep.subr.bf16.mxu0 0
        %2794 = vmatpush1.bf16.msra.mxu0 0
        %2795 = vmatprep.subr.bf16.mxu0 0
        %2796 = vmatpush1.bf16.msra.mxu0 0
        %2797 = vmatprep.subr.bf16.mxu0 0
        %2798 = vmatpush1.bf16.msra.mxu0 0
        %2799 = vmatprep.subr.bf16.mxu0 0
        %2800 = vmatpush1.bf16.msra.mxu0 0
        %2801 = vmatprep.subr.bf16.mxu0 0
        %2802 = vmatpush1.bf16.msra.mxu0 0
        %2803 = vmatprep.subr.bf16.mxu0 0
        %2804 = vmatpush1.bf16.msra.mxu0 0
        %2805 = vmatprep.subr.bf16.mxu0 0
        %2806 = vmatpush1.bf16.msra.mxu0 0
        %2807 = vmatprep.subr.bf16.mxu0 0
        %2808 = vmatpush1.bf16.msra.mxu0 0
        %2809 = vmatprep.subr.bf16.mxu0 0
        %2810 = vmatpush1.bf16.msra.mxu0 0
        %2811 = vmatprep.subr.bf16.mxu0 0
        %2812 = vmatpush1.bf16.msra.mxu0 0
        %2813 = vmatprep.subr.bf16.mxu0 0
        %2814 = vmatpush1.bf16.msra.mxu0 0
        %2815 = vmatprep.subr.bf16.mxu0 0
        %2816 = vmatpush1.bf16.msra.mxu0 0
        %2817 = vmatprep.subr.bf16.mxu0 0
        %2818 = vmatpush1.bf16.msra.mxu0 0
        %2819 = vmatprep.subr.bf16.mxu0 0
        %2820 = vmatpush1.bf16.msra.mxu0 0
        %2821 = vmatprep.subr.bf16.mxu0 0
        %2822 = vmatpush1.bf16.msra.mxu0 0
        %2823 = vmatprep.mubr.bf16.mxu0 0
        %2824 = vmatmul.mubr.bf16.gmra.mrb[0].mxu0 %v2789
        %v2825 = vpop.f32.mrb[0].mxu0
        %v2826 = vadd.f32 0.0, %v2825
        %v2827 = vpop.f32.mrb[0].mxu0
        %v2828 = vpop.f32.mrb[0].mxu0
        %v2829 = vadd.f32 0.0, %v2828
        %v2830 = vpop.f32.mrb[0].mxu0
        %2831 = vdwg.mxu0
        %2832 = vrot.lane.b32.xlu0 %v681, 40
        %v2833 = vpop.permute.xlu0 %2832
        %v2836 = vsel %vm894, %v2736, 0
        %2838 = vmatprep.subr.bf16.mxu0 0
        %2839 = vmatpush1.bf16.msra.mxu0 %v2833
        %2840 = vmatprep.subr.bf16.mxu0 0
        %2841 = vmatpush1.bf16.msra.mxu0 0
        %2842 = vmatprep.subr.bf16.mxu0 0
        %2843 = vmatpush1.bf16.msra.mxu0 0
        %2844 = vmatprep.subr.bf16.mxu0 0
        %2845 = vmatpush1.bf16.msra.mxu0 0
        %2846 = vmatprep.subr.bf16.mxu0 0
        %2847 = vmatpush1.bf16.msra.mxu0 0
        %2848 = vmatprep.subr.bf16.mxu0 0
        %2849 = vmatpush1.bf16.msra.mxu0 0
        %2850 = vmatprep.subr.bf16.mxu0 0
        %2851 = vmatpush1.bf16.msra.mxu0 0
        %2852 = vmatprep.subr.bf16.mxu0 0
        %2853 = vmatpush1.bf16.msra.mxu0 0
        %2854 = vmatprep.subr.bf16.mxu0 0
        %2855 = vmatpush1.bf16.msra.mxu0 0
        %2856 = vmatprep.subr.bf16.mxu0 0
        %2857 = vmatpush1.bf16.msra.mxu0 0
        %2858 = vmatprep.subr.bf16.mxu0 0
        %2859 = vmatpush1.bf16.msra.mxu0 0
        %2860 = vmatprep.subr.bf16.mxu0 0
        %2861 = vmatpush1.bf16.msra.mxu0 0
        %2862 = vmatprep.subr.bf16.mxu0 0
        %2863 = vmatpush1.bf16.msra.mxu0 0
        %2864 = vmatprep.subr.bf16.mxu0 0
        %2865 = vmatpush1.bf16.msra.mxu0 0
        %2866 = vmatprep.subr.bf16.mxu0 0
        %2867 = vmatpush1.bf16.msra.mxu0 0
        %2868 = vmatprep.subr.bf16.mxu0 0
        %2869 = vmatpush1.bf16.msra.mxu0 0
        %2870 = vmatprep.mubr.bf16.mxu0 0
        %2871 = vmatmul.mubr.bf16.gmra.mrb[0].mxu0 %v2836
        %v2872 = vpop.f32.mrb[0].mxu0
        %v2873 = vadd.f32 0.0, %v2872
        %v2874 = vpop.f32.mrb[0].mxu0
        %v2875 = vpop.f32.mrb[0].mxu0
        %v2876 = vadd.f32 0.0, %v2875
        %v2877 = vpop.f32.mrb[0].mxu0
        %2878 = vdwg.mxu0
        %2879 = vrot.lane.b32.xlu0 %v682, 40
        %v2880 = vpop.permute.xlu0 %2879
        %v2883 = vsel %vm894, %v2737, 0
        %2885 = vmatprep.subr.bf16.mxu0 0
        %2886 = vmatpush1.bf16.msra.mxu0 %v2880
        %2887 = vmatprep.subr.bf16.mxu0 0
        %2888 = vmatpush1.bf16.msra.mxu0 0
        %2889 = vmatprep.subr.bf16.mxu0 0
        %2890 = vmatpush1.bf16.msra.mxu0 0
        %2891 = vmatprep.subr.bf16.mxu0 0
        %2892 = vmatpush1.bf16.msra.mxu0 0
        %2893 = vmatprep.subr.bf16.mxu0 0
        %2894 = vmatpush1.bf16.msra.mxu0 0
        %2895 = vmatprep.subr.bf16.mxu0 0
        %2896 = vmatpush1.bf16.msra.mxu0 0
        %2897 = vmatprep.subr.bf16.mxu0 0
        %2898 = vmatpush1.bf16.msra.mxu0 0
        %2899 = vmatprep.subr.bf16.mxu0 0
        %2900 = vmatpush1.bf16.msra.mxu0 0
        %2901 = vmatprep.subr.bf16.mxu0 0
        %2902 = vmatpush1.bf16.msra.mxu0 0
        %2903 = vmatprep.subr.bf16.mxu0 0
        %2904 = vmatpush1.bf16.msra.mxu0 0
        %2905 = vmatprep.subr.bf16.mxu0 0
        %2906 = vmatpush1.bf16.msra.mxu0 0
        %2907 = vmatprep.subr.bf16.mxu0 0
        %2908 = vmatpush1.bf16.msra.mxu0 0
        %2909 = vmatprep.subr.bf16.mxu0 0
        %2910 = vmatpush1.bf16.msra.mxu0 0
        %2911 = vmatprep.subr.bf16.mxu0 0
        %2912 = vmatpush1.bf16.msra.mxu0 0
        %2913 = vmatprep.subr.bf16.mxu0 0
        %2914 = vmatpush1.bf16.msra.mxu0 0
        %2915 = vmatprep.subr.bf16.mxu0 0
        %2916 = vmatpush1.bf16.msra.mxu0 0
        %2917 = vmatprep.mubr.bf16.mxu0 0
        %2918 = vmatmul.mubr.bf16.gmra.mrb[0].mxu0 %v2883
        %v2919 = vpop.f32.mrb[0].mxu0
        %v2920 = vadd.f32 0.0, %v2919
        %v2921 = vpop.f32.mrb[0].mxu0
        %v2922 = vpop.f32.mrb[0].mxu0
        %v2923 = vadd.f32 0.0, %v2922
        %v2924 = vpop.f32.mrb[0].mxu0
        %2925 = vdwg.mxu0
        %v2926 = vpack.c.bf16 %v2782, %v2779
        %v2927 = vpack.c.bf16 %v2829, %v2826
        %v2928 = vpack.c.bf16 %v2876, %v2873
        %v2929 = vpack.c.bf16 %v2923, %v2920
        %s2930 = scalar_lea.vmem [#allocation7], 12
        %v2931 = vld [vmem:[%s2930] sm:$0xf]
        %v2933 = vsel %vm688, %v2926, 0
        %v2936 = vsel %vm688, %v2927, 0
        %v2939 = vsel %vm688, %v2928, 0
        %v2942 = vsel %vm688, %v2929, 0
        %v2945 = vsel %vm1693, %v2931, 0
        %2947 = vmatprep.subr.bf16.mxu0 0
        %2948 = vmatpush1.bf16.msra.mxu0 %v2945
        %2949 = vmatprep.subr.bf16.mxu0 0
        %2950 = vmatpush1.bf16.msra.mxu0 0
        %2951 = vmatprep.subr.bf16.mxu0 0
        %2952 = vmatpush1.bf16.msra.mxu0 0
        %2953 = vmatprep.subr.bf16.mxu0 0
        %2954 = vmatpush1.bf16.msra.mxu0 0
        %2955 = vmatprep.subr.bf16.mxu0 0
        %2956 = vmatpush1.bf16.msra.mxu0 0
        %2957 = vmatprep.subr.bf16.mxu0 0
        %2958 = vmatpush1.bf16.msra.mxu0 0
        %2959 = vmatprep.subr.bf16.mxu0 0
        %2960 = vmatpush1.bf16.msra.mxu0 0
        %2961 = vmatprep.subr.bf16.mxu0 0
        %2962 = vmatpush1.bf16.msra.mxu0 0
        %2963 = vmatprep.subr.bf16.mxu0 0
        %2964 = vmatpush1.bf16.msra.mxu0 0
        %2965 = vmatprep.subr.bf16.mxu0 0
        %2966 = vmatpush1.bf16.msra.mxu0 0
        %2967 = vmatprep.subr.bf16.mxu0 0
        %2968 = vmatpush1.bf16.msra.mxu0 0
        %2969 = vmatprep.subr.bf16.mxu0 0
        %2970 = vmatpush1.bf16.msra.mxu0 0
        %2971 = vmatprep.subr.bf16.mxu0 0
        %2972 = vmatpush1.bf16.msra.mxu0 0
        %2973 = vmatprep.subr.bf16.mxu0 0
        %2974 = vmatpush1.bf16.msra.mxu0 0
        %2975 = vmatprep.subr.bf16.mxu0 0
        %2976 = vmatpush1.bf16.msra.mxu0 0
        %2977 = vmatprep.subr.bf16.mxu0 0
        %2978 = vmatpush1.bf16.msra.mxu0 0
        %2979 = vmatprep.mubr.bf16.mxu0 0
        %2980 = vmatmul.mubr.bf16.gmra.mrb[0].mxu0 %v2933
        %v2981 = vpop.f32.mrb[0].mxu0
        %v2982 = vadd.f32 0.0, %v2981
        %v2983 = vpop.f32.mrb[0].mxu0
        %v2984 = vpop.f32.mrb[0].mxu0
        %v2985 = vadd.f32 0.0, %v2984
        %v2986 = vpop.f32.mrb[0].mxu0
        %2987 = vmatprep.mubr.bf16.mxu0 0
        %2988 = vmatmul.mubr.bf16.gmra.mrb[0].mxu0 %v2936
        %v2989 = vpop.f32.mrb[0].mxu0
        %v2990 = vadd.f32 0.0, %v2989
        %v2991 = vpop.f32.mrb[0].mxu0
        %v2992 = vpop.f32.mrb[0].mxu0
        %v2993 = vadd.f32 0.0, %v2992
        %v2994 = vpop.f32.mrb[0].mxu0
        %2995 = vmatprep.mubr.bf16.mxu0 0
        %2996 = vmatmul.mubr.bf16.gmra.mrb[0].mxu0 %v2939
        %v2997 = vpop.f32.mrb[0].mxu0
        %v2998 = vadd.f32 0.0, %v2997
        %v2999 = vpop.f32.mrb[0].mxu0
        %v3000 = vpop.f32.mrb[0].mxu0
        %v3001 = vadd.f32 0.0, %v3000
        %v3002 = vpop.f32.mrb[0].mxu0
        %3003 = vmatprep.mubr.bf16.mxu0 0
        %3004 = vmatmul.mubr.bf16.gmra.mrb[0].mxu0 %v2942
        %v3005 = vpop.f32.mrb[0].mxu0
        %v3006 = vadd.f32 0.0, %v3005
        %v3007 = vpop.f32.mrb[0].mxu0
        %v3008 = vpop.f32.mrb[0].mxu0
        %v3009 = vadd.f32 0.0, %v3008
        %v3010 = vpop.f32.mrb[0].mxu0
        %3011 = vdwg.mxu0
        %v3012 = vadd.f32 %v2423, %v2982
        %v3013 = vadd.f32 %v2424, %v2985
        %v3014 = vadd.f32 %v2425, %v2990
        %v3015 = vadd.f32 %v2426, %v2993
        %v3016 = vadd.f32 %v2427, %v2998
        %v3017 = vadd.f32 %v2428, %v3001
        %v3018 = vadd.f32 %v2429, %v3006
        %v3019 = vadd.f32 %v2430, %v3009
        %v3020 = vadd.f32 %v453, %v3012
        %v3021 = vadd.f32 %v454, %v3013
        %v3022 = vadd.f32 %v455, %v3014
        %v3023 = vadd.f32 %v456, %v3015
        %v3024 = vadd.f32 %v457, %v3016
        %v3025 = vadd.f32 %v458, %v3017
        %v3026 = vadd.f32 %v459, %v3018
        %v3027 = vadd.f32 %v460, %v3019
        %v3028 = vld [vmem:[%s6] sm:$0x1]
        %v3030 = vlaneseq
        %v3031 = vshrl.u32 %v3030, 7
        %v3032 = vsub.s32 0, %v3031
        %v3033 = vrot.slane %v3028, %v3032
        %v3035 = vadd.f32 %v3020, %v3033
        %v3036 = vadd.f32 %v3021, %v3033
        %v3037 = vadd.f32 %v3022, %v3033
        %v3038 = vadd.f32 %v3023, %v3033
        %v3039 = vadd.f32 %v3024, %v3033
        %v3040 = vadd.f32 %v3025, %v3033
        %v3041 = vadd.f32 %v3026, %v3033
        %v3042 = vadd.f32 %v3027, %v3033
        %v3043 = vsel %vm461, %v3035, 0.0
        %3044 = vadd.xlane.f32.xlu0 %v3043
        %v3045 = vpop.xlane.xlu0 %3044
        %v3046 = vsel %vm461, %v3036, 0.0
        %3047 = vadd.xlane.f32.xlu0 %v3046
        %v3048 = vpop.xlane.xlu0 %3047
        %v3049 = vsel %vm461, %v3037, 0.0
        %3050 = vadd.xlane.f32.xlu0 %v3049
        %v3051 = vpop.xlane.xlu0 %3050
        %v3052 = vsel %vm461, %v3038, 0.0
        %3053 = vadd.xlane.f32.xlu0 %v3052
        %v3054 = vpop.xlane.xlu0 %3053
        %v3055 = vsel %vm461, %v3039, 0.0
        %3056 = vadd.xlane.f32.xlu0 %v3055
        %v3057 = vpop.xlane.xlu0 %3056
        %v3058 = vsel %vm461, %v3040, 0.0
        %3059 = vadd.xlane.f32.xlu0 %v3058
        %v3060 = vpop.xlane.xlu0 %3059
        %v3061 = vsel %vm461, %v3041, 0.0
        %3062 = vadd.xlane.f32.xlu0 %v3061
        %v3063 = vpop.xlane.xlu0 %3062
        %v3064 = vsel %vm461, %v3042, 0.0
        %3065 = vadd.xlane.f32.xlu0 %v3064
        %v3066 = vpop.xlane.xlu0 %3065
        %v3067 = vmul.f32 %v3045, %v486
        %v3068 = vmul.f32 %v3048, %v486
        %v3069 = vmul.f32 %v3051, %v486
        %v3070 = vmul.f32 %v3054, %v486
        %v3071 = vmul.f32 %v3057, %v486
        %v3072 = vmul.f32 %v3060, %v486
        %v3073 = vmul.f32 %v3063, %v486
        %v3074 = vmul.f32 %v3066, %v486
        %v3075 = vsub.f32 %v3035, %v3067
        %v3076 = vsub.f32 %v3036, %v3068
        %v3077 = vsub.f32 %v3037, %v3069
        %v3078 = vsub.f32 %v3038, %v3070
        %v3079 = vsub.f32 %v3039, %v3071
        %v3080 = vsub.f32 %v3040, %v3072
        %v3081 = vsub.f32 %v3041, %v3073
        %v3082 = vsub.f32 %v3042, %v3074
        %v3083 = vmul.f32 %v3075, %v3075
        %v3084 = vmul.f32 %v3076, %v3076
        %v3085 = vmul.f32 %v3077, %v3077
        %v3086 = vmul.f32 %v3078, %v3078
        %v3087 = vmul.f32 %v3079, %v3079
        %v3088 = vmul.f32 %v3080, %v3080
        %v3089 = vmul.f32 %v3081, %v3081
        %v3090 = vmul.f32 %v3082, %v3082
        %v3091 = vsel %vm461, %v3083, 0.0
        %3092 = vadd.xlane.f32.xlu0 %v3091
        %v3093 = vpop.xlane.xlu0 %3092
        %v3094 = vsel %vm461, %v3084, 0.0
        %3095 = vadd.xlane.f32.xlu0 %v3094
        %v3096 = vpop.xlane.xlu0 %3095
        %v3097 = vsel %vm461, %v3085, 0.0
        %3098 = vadd.xlane.f32.xlu0 %v3097
        %v3099 = vpop.xlane.xlu0 %3098
        %v3100 = vsel %vm461, %v3086, 0.0
        %3101 = vadd.xlane.f32.xlu0 %v3100
        %v3102 = vpop.xlane.xlu0 %3101
        %v3103 = vsel %vm461, %v3087, 0.0
        %3104 = vadd.xlane.f32.xlu0 %v3103
        %v3105 = vpop.xlane.xlu0 %3104
        %v3106 = vsel %vm461, %v3088, 0.0
        %3107 = vadd.xlane.f32.xlu0 %v3106
        %v3108 = vpop.xlane.xlu0 %3107
        %v3109 = vsel %vm461, %v3089, 0.0
        %3110 = vadd.xlane.f32.xlu0 %v3109
        %v3111 = vpop.xlane.xlu0 %3110
        %v3112 = vsel %vm461, %v3090, 0.0
        %3113 = vadd.xlane.f32.xlu0 %v3112
        %v3114 = vpop.xlane.xlu0 %3113
        %v3115 = vmul.f32 %v3093, %v486
        %v3116 = vmul.f32 %v3096, %v486
        %v3117 = vmul.f32 %v3099, %v486
        %v3118 = vmul.f32 %v3102, %v486
        %v3119 = vmul.f32 %v3105, %v486
        %v3120 = vmul.f32 %v3108, %v486
        %v3121 = vmul.f32 %v3111, %v486
        %v3122 = vmul.f32 %v3114, %v486
        %v3123 = vadd.f32 %v3115, 1e-05
        %v3124 = vadd.f32 %v3116, 1e-05
        %v3125 = vadd.f32 %v3117, 1e-05
        %v3126 = vadd.f32 %v3118, 1e-05
        %v3127 = vadd.f32 %v3119, 1e-05
        %v3128 = vadd.f32 %v3120, 1e-05
        %v3129 = vadd.f32 %v3121, 1e-05
        %v3130 = vadd.f32 %v3122, 1e-05
        %v3131 = vrsqrt.pop %v3123
        %v3132 = vrsqrt.pop %v3124
        %v3133 = vrsqrt.pop %v3125
        %v3134 = vrsqrt.pop %v3126
        %v3135 = vrsqrt.pop %v3127
        %v3136 = vrsqrt.pop %v3128
        %v3137 = vrsqrt.pop %v3129
        %v3138 = vrsqrt.pop %v3130
        %v3139 = vmul.f32 %v3075, %v3131
        %v3140 = vmul.f32 %v3076, %v3132
        %v3141 = vmul.f32 %v3077, %v3133
        %v3142 = vmul.f32 %v3078, %v3134
        %v3143 = vmul.f32 %v3079, %v3135
        %v3144 = vmul.f32 %v3080, %v3136
        %v3145 = vmul.f32 %v3081, %v3137
        %v3146 = vmul.f32 %v3082, %v3138
        %v3147 = vpack.c.bf16 %v3140, %v3139
        %v3148 = vpack.c.bf16 %v3142, %v3141
        %v3149 = vpack.c.bf16 %v3144, %v3143
        %v3150 = vpack.c.bf16 %v3146, %v3145
        %v3151 = vld [vmem:[#allocation8] sm:$0xf]
        %v3152 = vld [vmem:[#allocation8 + $0x4] sm:$0xf]
        %v3153 = vld [vmem:[#allocation8 + $0x8] sm:$0xf]
        %v3154 = vld [vmem:[#allocation8 + $0xc] sm:$0xf]
        %v3155 = vld [vmem:[%s8] sm:$0x1]
        %v3157 = vlaneseq
        %v3158 = vshrl.u32 %v3157, 7
        %v3159 = vsub.s32 0, %v3158
        %v3160 = vrot.slane %v3155, %v3159
        %v3166 = vunpack.c.l.b16 %v3151
        %v3167 = vunpack.c.l.b16 %v3152
        %v3168 = vunpack.c.l.b16 %v3153
        %v3169 = vunpack.c.l.b16 %v3154
        %v3170 = vpack.c.b16 %v3167, %v3166
        %v3171 = vpack.c.b16 %v3169, %v3168
        %v3175 = vsel %vm461, %v3147, 0
        %v3178 = vsel %vm461, %v3148, 0
        %v3181 = vsel %vm461, %v3149, 0
        %v3184 = vsel %vm461, %v3150, 0
        %3186 = vmatprep.subr.bf16.mxu0 0
        %3187 = vmatpush1.bf16.msra.mxu0 %v3170
        %3188 = vmatprep.subr.bf16.mxu0 0
        %3189 = vmatpush1.bf16.msra.mxu0 %v3171
        %3190 = vmatprep.subr.bf16.mxu0 0
        %3191 = vmatpush1.bf16.msra.mxu0 0
        %3192 = vmatprep.subr.bf16.mxu0 0
        %3193 = vmatpush1.bf16.msra.mxu0 0
        %3194 = vmatprep.subr.bf16.mxu0 0
        %3195 = vmatpush1.bf16.msra.mxu0 0
        %3196 = vmatprep.subr.bf16.mxu0 0
        %3197 = vmatpush1.bf16.msra.mxu0 0
        %3198 = vmatprep.subr.bf16.mxu0 0
        %3199 = vmatpush1.bf16.msra.mxu0 0
        %3200 = vmatprep.subr.bf16.mxu0 0
        %3201 = vmatpush1.bf16.msra.mxu0 0
        %3202 = vmatprep.subr.bf16.mxu0 0
        %3203 = vmatpush1.bf16.msra.mxu0 0
        %3204 = vmatprep.subr.bf16.mxu0 0
        %3205 = vmatpush1.bf16.msra.mxu0 0
        %3206 = vmatprep.subr.bf16.mxu0 0
        %3207 = vmatpush1.bf16.msra.mxu0 0
        %3208 = vmatprep.subr.bf16.mxu0 0
        %3209 = vmatpush1.bf16.msra.mxu0 0
        %3210 = vmatprep.subr.bf16.mxu0 0
        %3211 = vmatpush1.bf16.msra.mxu0 0
        %3212 = vmatprep.subr.bf16.mxu0 0
        %3213 = vmatpush1.bf16.msra.mxu0 0
        %3214 = vmatprep.subr.bf16.mxu0 0
        %3215 = vmatpush1.bf16.msra.mxu0 0
        %3216 = vmatprep.subr.bf16.mxu0 0
        %3217 = vmatpush1.bf16.msra.mxu0 0
        %3218 = vmatprep.mubr.bf16.mxu0 0
        %3219 = vmatmul.mubr.bf16.gmra.mrb[0].mxu0 %v3175
        %v3220 = vpop.f32.mrb[0].mxu0
        %v3221 = vadd.f32 %v3160, %v3220
        %v3222 = vpop.f32.mrb[0].mxu0
        %v3223 = vpop.f32.mrb[0].mxu0
        %v3224 = vadd.f32 %v3160, %v3223
        %v3225 = vpop.f32.mrb[0].mxu0
        %3226 = vmatprep.mubr.bf16.mxu0 0
        %3227 = vmatmul.mubr.bf16.gmra.mrb[0].mxu0 %v3178
        %v3228 = vpop.f32.mrb[0].mxu0
        %v3229 = vadd.f32 %v3160, %v3228
        %v3230 = vpop.f32.mrb[0].mxu0
        %v3231 = vpop.f32.mrb[0].mxu0
        %v3232 = vadd.f32 %v3160, %v3231
        %v3233 = vpop.f32.mrb[0].mxu0
        %3234 = vmatprep.mubr.bf16.mxu0 0
        %3235 = vmatmul.mubr.bf16.gmra.mrb[0].mxu0 %v3181
        %v3236 = vpop.f32.mrb[0].mxu0
        %v3237 = vadd.f32 %v3160, %v3236
        %v3238 = vpop.f32.mrb[0].mxu0
        %v3239 = vpop.f32.mrb[0].mxu0
        %v3240 = vadd.f32 %v3160, %v3239
        %v3241 = vpop.f32.mrb[0].mxu0
        %3242 = vmatprep.mubr.bf16.mxu0 0
        %3243 = vmatmul.mubr.bf16.gmra.mrb[0].mxu0 %v3184
        %v3244 = vpop.f32.mrb[0].mxu0
        %v3245 = vadd.f32 %v3160, %v3244
        %v3246 = vpop.f32.mrb[0].mxu0
        %v3247 = vpop.f32.mrb[0].mxu0
        %v3248 = vadd.f32 %v3160, %v3247
        %v3249 = vpop.f32.mrb[0].mxu0
        %3250 = vdwg.mxu0
        %v3251 = vmul.f32 %v3221, %v3221
        %v3252 = vmul.f32 %v3224, %v3224
        %v3253 = vmul.f32 %v3229, %v3229
        %v3254 = vmul.f32 %v3232, %v3232
        %v3255 = vmul.f32 %v3237, %v3237
        %v3256 = vmul.f32 %v3240, %v3240
        %v3257 = vmul.f32 %v3245, %v3245
        %v3258 = vmul.f32 %v3248, %v3248
        %v3259 = vmul.f32 %v3221, %v3251
        %v3260 = vmul.f32 %v3224, %v3252
        %v3261 = vmul.f32 %v3229, %v3253
        %v3262 = vmul.f32 %v3232, %v3254
        %v3263 = vmul.f32 %v3237, %v3255
        %v3264 = vmul.f32 %v3240, %v3256
        %v3265 = vmul.f32 %v3245, %v3257
        %v3266 = vmul.f32 %v3248, %v3258
        %v3267 = vmul.f32 %v3259, 0.044715
        %v3268 = vmul.f32 %v3260, 0.044715
        %v3269 = vmul.f32 %v3261, 0.044715
        %v3270 = vmul.f32 %v3262, 0.044715
        %v3271 = vmul.f32 %v3263, 0.044715
        %v3272 = vmul.f32 %v3264, 0.044715
        %v3273 = vmul.f32 %v3265, 0.044715
        %v3274 = vmul.f32 %v3266, 0.044715
        %v3275 = vadd.f32 %v3221, %v3267
        %v3276 = vadd.f32 %v3224, %v3268
        %v3277 = vadd.f32 %v3229, %v3269
        %v3278 = vadd.f32 %v3232, %v3270
        %v3279 = vadd.f32 %v3237, %v3271
        %v3280 = vadd.f32 %v3240, %v3272
        %v3281 = vadd.f32 %v3245, %v3273
        %v3282 = vadd.f32 %v3248, %v3274
        %v3283 = vmul.f32 %v3275, 0.7978846
        %v3284 = vmul.f32 %v3276, 0.7978846
        %v3285 = vmul.f32 %v3277, 0.7978846
        %v3286 = vmul.f32 %v3278, 0.7978846
        %v3287 = vmul.f32 %v3279, 0.7978846
        %v3288 = vmul.f32 %v3280, 0.7978846
        %v3289 = vmul.f32 %v3281, 0.7978846
        %v3290 = vmul.f32 %v3282, 0.7978846
        %v3291 = vtanh.pop %v3283
        %v3292 = vtanh.pop %v3284
        %v3293 = vtanh.pop %v3285
        %v3294 = vtanh.pop %v3286
        %v3295 = vtanh.pop %v3287
        %v3296 = vtanh.pop %v3288
        %v3297 = vtanh.pop %v3289
        %v3298 = vtanh.pop %v3290
        %v3299 = vadd.f32 %v3291, 1.0
        %v3300 = vadd.f32 %v3292, 1.0
        %v3301 = vadd.f32 %v3293, 1.0
        %v3302 = vadd.f32 %v3294, 1.0
        %v3303 = vadd.f32 %v3295, 1.0
        %v3304 = vadd.f32 %v3296, 1.0
        %v3305 = vadd.f32 %v3297, 1.0
        %v3306 = vadd.f32 %v3298, 1.0
        %v3307 = vmul.f32 %v3299, 0.5
        %v3308 = vmul.f32 %v3300, 0.5
        %v3309 = vmul.f32 %v3301, 0.5
        %v3310 = vmul.f32 %v3302, 0.5
        %v3311 = vmul.f32 %v3303, 0.5
        %v3312 = vmul.f32 %v3304, 0.5
        %v3313 = vmul.f32 %v3305, 0.5
        %v3314 = vmul.f32 %v3306, 0.5
        %v3315 = vmul.f32 %v3221, %v3307
        %v3316 = vmul.f32 %v3224, %v3308
        %v3317 = vmul.f32 %v3229, %v3309
        %v3318 = vmul.f32 %v3232, %v3310
        %v3319 = vmul.f32 %v3237, %v3311
        %v3320 = vmul.f32 %v3240, %v3312
        %v3321 = vmul.f32 %v3245, %v3313
        %v3322 = vmul.f32 %v3248, %v3314
        %v3323 = vpack.c.bf16 %v3316, %v3315
        %v3324 = vpack.c.bf16 %v3318, %v3317
        %v3325 = vpack.c.bf16 %v3320, %v3319
        %v3326 = vpack.c.bf16 %v3322, %v3321
        %v3327 = vld [vmem:[%s9] sm:$0xf]
        %v3328 = vld [vmem:[%s9 + $0x4] sm:$0xf]
        %v3329 = vld [vmem:[%s9 + $0x8] sm:$0xf]
        %v3330 = vld [vmem:[%s9 + $0xc] sm:$0xf]
        %v3331 = vld [vmem:[%s9 + $0x10] sm:$0xf]
        %v3332 = vld [vmem:[%s9 + $0x14] sm:$0xf]
        %v3333 = vld [vmem:[%s9 + $0x18] sm:$0xf]
        %v3334 = vld [vmem:[%s9 + $0x1c] sm:$0xf]
        %v3335 = vld [vmem:[%s9 + $0x20] sm:$0xf]
        %v3336 = vld [vmem:[%s9 + $0x24] sm:$0xf]
        %v3337 = vld [vmem:[%s9 + $0x28] sm:$0xf]
        %v3338 = vld [vmem:[%s9 + $0x2c] sm:$0xf]
        %v3339 = vld [vmem:[%s9 + $0x30] sm:$0xf]
        %v3340 = vld [vmem:[%s9 + $0x34] sm:$0xf]
        %v3341 = vld [vmem:[%s9 + $0x38] sm:$0xf]
        %v3342 = vld [vmem:[%s9 + $0x3c] sm:$0xf]
        %v3343 = vld [vmem:[%s10] sm:$0x1]
        %v3345 = vlaneseq
        %v3346 = vshrl.u32 %v3345, 7
        %v3347 = vsub.s32 0, %v3346
        %v3348 = vrot.slane %v3343, %v3347
        %v3366 = vunpack.c.l.b16 %v3327
        %v3367 = vunpack.c.l.b16 %v3328
        %v3368 = vunpack.c.l.b16 %v3329
        %v3369 = vunpack.c.l.b16 %v3330
        %v3370 = vunpack.c.l.b16 %v3331
        %v3371 = vunpack.c.l.b16 %v3332
        %v3372 = vunpack.c.l.b16 %v3333
        %v3373 = vunpack.c.l.b16 %v3334
        %v3374 = vunpack.c.l.b16 %v3335
        %v3375 = vunpack.c.l.b16 %v3336
        %v3376 = vunpack.c.l.b16 %v3337
        %v3377 = vunpack.c.l.b16 %v3338
        %v3378 = vunpack.c.l.b16 %v3339
        %v3379 = vunpack.c.l.b16 %v3340
        %v3380 = vunpack.c.l.b16 %v3341
        %v3381 = vunpack.c.l.b16 %v3342
        %v3382 = vpack.c.b16 %v3367, %v3366
        %v3383 = vpack.c.b16 %v3369, %v3368
        %v3384 = vpack.c.b16 %v3371, %v3370
        %v3385 = vpack.c.b16 %v3373, %v3372
        %v3386 = vpack.c.b16 %v3375, %v3374
        %v3387 = vpack.c.b16 %v3377, %v3376
        %v3388 = vpack.c.b16 %v3379, %v3378
        %v3389 = vpack.c.b16 %v3381, %v3380
        %3398 = vmatprep.subr.bf16.mxu0 0
        %3399 = vmatpush1.bf16.msra.mxu0 %v3382
        %3400 = vmatprep.subr.bf16.mxu0 0
        %3401 = vmatpush1.bf16.msra.mxu0 %v3383
        %3402 = vmatprep.subr.bf16.mxu0 0
        %3403 = vmatpush1.bf16.msra.mxu0 %v3384
        %3404 = vmatprep.subr.bf16.mxu0 0
        %3405 = vmatpush1.bf16.msra.mxu0 %v3385
        %3406 = vmatprep.subr.bf16.mxu0 0
        %3407 = vmatpush1.bf16.msra.mxu0 %v3386
        %3408 = vmatprep.subr.bf16.mxu0 0
        %3409 = vmatpush1.bf16.msra.mxu0 %v3387
        %3410 = vmatprep.subr.bf16.mxu0 0
        %3411 = vmatpush1.bf16.msra.mxu0 %v3388
        %3412 = vmatprep.subr.bf16.mxu0 0
        %3413 = vmatpush1.bf16.msra.mxu0 %v3389
        %3414 = vmatprep.subr.bf16.mxu0 0
        %3415 = vmatpush1.bf16.msra.mxu0 0
        %3416 = vmatprep.subr.bf16.mxu0 0
        %3417 = vmatpush1.bf16.msra.mxu0 0
        %3418 = vmatprep.subr.bf16.mxu0 0
        %3419 = vmatpush1.bf16.msra.mxu0 0
        %3420 = vmatprep.subr.bf16.mxu0 0
        %3421 = vmatpush1.bf16.msra.mxu0 0
        %3422 = vmatprep.subr.bf16.mxu0 0
        %3423 = vmatpush1.bf16.msra.mxu0 0
        %3424 = vmatprep.subr.bf16.mxu0 0
        %3425 = vmatpush1.bf16.msra.mxu0 0
        %3426 = vmatprep.subr.bf16.mxu0 0
        %3427 = vmatpush1.bf16.msra.mxu0 0
        %3428 = vmatprep.subr.bf16.mxu0 0
        %3429 = vmatpush1.bf16.msra.mxu0 0
        %3430 = vmatprep.mubr.bf16.mxu0 0
        %3431 = vmatmul.mubr.bf16.gmra.mrb[0].mxu0 %v3323
        %v3432 = vpop.f32.mrb[0].mxu0
        %v3433 = vadd.f32 %v3348, %v3432
        %v3434 = vpop.f32.mrb[0].mxu0
        %v3435 = vpop.f32.mrb[0].mxu0
        %v3436 = vadd.f32 %v3348, %v3435
        %v3437 = vpop.f32.mrb[0].mxu0
        %3438 = vmatprep.mubr.bf16.mxu0 0
        %3439 = vmatmul.mubr.bf16.gmra.mrb[0].mxu0 %v3324
        %v3440 = vpop.f32.mrb[0].mxu0
        %v3441 = vadd.f32 %v3348, %v3440
        %v3442 = vpop.f32.mrb[0].mxu0
        %v3443 = vpop.f32.mrb[0].mxu0
        %v3444 = vadd.f32 %v3348, %v3443
        %v3445 = vpop.f32.mrb[0].mxu0
        %3446 = vmatprep.mubr.bf16.mxu0 0
        %3447 = vmatmul.mubr.bf16.gmra.mrb[0].mxu0 %v3325
        %v3448 = vpop.f32.mrb[0].mxu0
        %v3449 = vadd.f32 %v3348, %v3448
        %v3450 = vpop.f32.mrb[0].mxu0
        %v3451 = vpop.f32.mrb[0].mxu0
        %v3452 = vadd.f32 %v3348, %v3451
        %v3453 = vpop.f32.mrb[0].mxu0
        %3454 = vmatprep.mubr.bf16.mxu0 0
        %3455 = vmatmul.mubr.bf16.gmra.mrb[0].mxu0 %v3326
        %v3456 = vpop.f32.mrb[0].mxu0
        %v3457 = vadd.f32 %v3348, %v3456
        %v3458 = vpop.f32.mrb[0].mxu0
        %v3459 = vpop.f32.mrb[0].mxu0
        %v3460 = vadd.f32 %v3348, %v3459
        %v3461 = vpop.f32.mrb[0].mxu0
        %3462 = vdwg.mxu0
        %v3463 = vadd.f32 %v3035, %v3433
        %v3464 = vadd.f32 %v3036, %v3436
        %v3465 = vadd.f32 %v3037, %v3441
        %v3466 = vadd.f32 %v3038, %v3444
        %v3467 = vadd.f32 %v3039, %v3449
        %v3468 = vadd.f32 %v3040, %v3452
        %v3469 = vadd.f32 %v3041, %v3457
        %v3470 = vadd.f32 %v3042, %v3460
        %3471 = vst.msk [vmem:[%s449] sm:$0xff] %vm461, %v3463
        %3472 = vst.msk [vmem:[%s449 + $0x8] sm:$0xff] %vm461, %v3464
        %3473 = vst.msk [vmem:[%s449 + $0x10] sm:$0xff] %vm461, %v3465
        %3474 = vst.msk [vmem:[%s449 + $0x18] sm:$0xff] %vm461, %v3466
        %3475 = vst.msk [vmem:[%s449 + $0x20] sm:$0xff] %vm461, %v3467
        %3476 = vst.msk [vmem:[%s449 + $0x28] sm:$0xff] %vm461, %v3468
        %3477 = vst.msk [vmem:[%s449 + $0x30] sm:$0xff] %vm461, %v3469
        %3478 = vst.msk [vmem:[%s449 + $0x38] sm:$0xff] %vm461, %v3470
        %s3479 = sand.u32 %s274, 1
        %s3480 = scalar_lea.sflag [#allocation4], %s3479
        %s3481 = sand.u32 %s274, 1
        %s3482 = smul.addr %s3481, 64
        %s3483 = scalar_lea.vmem [#allocation10], %s3482
        // Predicated region
        $region81: #{tpu_custom_call.1} parent=63 // pred_check
          %p3484 = pneg %p284
        $region82: #{tpu_custom_call.1} parent=63 // pred_check_branch
          %3486 = sbr.rel (%p3484) target = $region84
        $region83: #{tpu_custom_call.1} parent=63 // pred_region
          %s3487 = smul.u32 4, %s30
          %s3489 = ssub.s32 1024, 1024
          %3490 = vsyncadd %s3480, %s3489
          %s3491 = smul.addr %s3487, 2
          %s3492 = smul.addr %s3491, 128
          %s3493 = scalar_lea.hbm %s11, %s3492
          %s3494 = sshll.u32 %s3483, 4
          %s3495 = int_to_ptr.vmem [resolvable:$true] %s3494
          %3500 = dma.vmem_to_hbm [thread:$0]  %s3495, 1024, %s3493, %s3480, 128, 128, 8
        $region84: #{tpu_custom_call.1} parent=63 // pred_fallthru
          _
      $region64: #{tpu_custom_call.1} parent=5 // pred_fallthru
        _
      %p3501 = scmp.le.s32.totalorder 2, %s25
      // Predicated region
      $region85: #{tpu_custom_call.1} parent=5 // pred_check
        %p3502 = pneg %p3501
      $region86: #{tpu_custom_call.1} parent=5 // pred_check_branch
        %3504 = sbr.rel (%p3502) target = $region88
      $region87: #{tpu_custom_call.1} parent=5 // pred_region
        %s3505 = ssub.s32 %s25, 2
        // Predicated region
        $region89: #{tpu_custom_call.1} parent=87 // pred_check
          %p3506 = pneg %p290
        $region90: #{tpu_custom_call.1} parent=87 // pred_check_branch
          %3508 = sbr.rel (%p3506) target = $region92
        $region91: #{tpu_custom_call.1} parent=87 // pred_region
          %s3509 = sand.u32 %s275, 1
          %s3510 = scalar_lea.sflag [#allocation4], %s3509
          %s3511 = sand.u32 %s275, 1
          %s3512 = smul.addr %s3511, 64
          %s3513 = scalar_lea.vmem [#allocation10], %s3512
          %3514 = dma.done %s3510, 1024
        $region92: #{tpu_custom_call.1} parent=87 // pred_fallthru
          _
      $region88: #{tpu_custom_call.1} parent=5 // pred_fallthru
        _
    $region6: #{tpu_custom_call.1} parent=1 // loop_footer
      %s29 = sadd.s32 1, %s25
    $region7: #{tpu_custom_call.1} parent=1 // loop_footer_branch
      %24 = sbr.rel target = $region3
    $region8: #{tpu_custom_call.1} parent=1 // loop_exit
      _
    %3515 = vsyncpa [#allocation3], 1
    %s3516 = scalar_lea.sflag [#allocation3], 1
    %3517 = vsyncpa %s3516, 1
    %3518 = vsyncpa [#allocation6], 1
    %3519 = vsyncpa [#allocation9], 1
    %3520 = vsyncpa [#allocation4], 1
    %s3521 = scalar_lea.sflag [#allocation4], 1
    %3522 = vsyncpa %s3521, 1

</llo_original>
